<compile_context>
chip_gen: v7x
topology: tpu7x:2x2x1
jax: 0.10.0
libtpu: 0.0.40
codegen_flags: <defaults>
</compile_context>

<pallas_src>
import functools

import numpy as np
import jax
import jax.numpy as jnp
from jax.experimental import pallas as pl
from jax.experimental.pallas import tpu as pltpu

IN_FEATURES = 5      # X (3 dims) + NdotL (1) + NdotH (1)
NUM_FREQS = 4
NUM_CLUSTERS = 8
D_ENC = IN_FEATURES * 2 * NUM_FREQS        # 40
X_POS = 3 * 2 * NUM_FREQS                  # 24
SUB = 8                                    # sublane padding of the input-dim axis


def _cdiv(a, b):
    return -(-a // b)


def posenc(x, num_freqs):
    """NeRF-style positional encoding, grouped per input dim (reference layout).

    x: (N, Din) -> (N, Din * 2 * num_freqs); per-dim block = [sin(f0 x), cos(f0 x),
    sin(f1 x), cos(f1 x), ...].  (Layout consistent with X_pos = 3*2*F etc.)
    """
    freqs = (2.0 ** jnp.arange(num_freqs)).astype(x.dtype)          # (F,)
    xb = x[:, :, None] * freqs[None, None, :]                       # (N, Din, F)
    enc = jnp.stack([jnp.sin(xb), jnp.cos(xb)], axis=-1)            # (N, Din, F, 2)
    return enc.reshape(x.shape[0], -1)


def prepare_fused_weight(linear_mappings, x2cluster, in_features, num_freqs):
    """Build the fused (4C, D_pad) kernel weight ONCE (at parameter-set time).

    Rows 0..3C-1  : rgb mapping, row index = channel*C + cluster.
    Rows 3C..4C-1 : cluster-selection weights (x2cluster), zero-padded past X_pos.
    Columns follow the kernel's encoding row order
        j = (t*F + f)*8 + d      (t: 0=sin,1=cos; f: freq; d: input dim, d>=Din zero)
    which corresponds to reference encoding column r = d*2F + 2f + t; pad columns
    (d >= in_features) are zero.
    """
    D = in_features * 2 * num_freqs
    C = x2cluster.shape[0]
    x_pos = 3 * 2 * num_freqs
    d_pad = 2 * num_freqs * SUB                                 # 64

    W = jnp.asarray(linear_mappings).reshape(-1, D)             # (3C, D), row = c*3 + ch
    # reorder rows to m = ch*C + c so the kernel uses vreg-aligned sublane slices
    W_reord = W.reshape(C, 3, D).transpose(1, 0, 2).reshape(3 * C, D)
    Wsel = jnp.zeros((C, D), dtype=W.dtype).at[:, :x_pos].set(jnp.asarray(x2cluster))
    w_ref_cols = jnp.concatenate([W_reord, Wsel], axis=0)       # (4C, D), ref col order

    perm = np.zeros(d_pad, dtype=np.int32)
    valid = np.zeros(d_pad, dtype=bool)
    for b in range(2 * num_freqs):
        t, f = b // num_freqs, b % num_freqs
        for d in range(SUB):
            j = b * SUB + d
            if d < in_features:
                perm[j] = d * 2 * num_freqs + 2 * f + t
                valid[j] = True
    w_fused = jnp.where(jnp.asarray(valid)[None, :],
                        w_ref_cols[:, jnp.asarray(perm)],
                        jnp.zeros((), dtype=jnp.float32))
    return jnp.asarray(w_fused, dtype=jnp.float32)              # (4C, d_pad)


def _reflectance_kernel(x_ref, w_ref, out_ref, *, num_freqs, num_clusters):
    """Fused posenc + one MXU matmul + cluster reduction; N is on the lane axis.

    x_ref  : (8, TN)       X^T, rows >= in_features are zero padding
    w_ref  : (4C, D_pad)   fused weight in kernel enc-row order (D_pad = 2*F*8)
    out_ref: (3, TN)       rgb, channel-major (lane-dense store)
    """
    x = x_ref[...].astype(jnp.float32)                           # (8, TN)

    # Positional encoding as 2*F sublane-aligned (8, TN) blocks -> (D_pad, TN).
    blocks = []
    for trig in (jnp.sin, jnp.cos):
        for f in range(num_freqs):
            blocks.append(trig(x * jnp.float32(2.0 ** f)))
    enc = jnp.concatenate(blocks, axis=0)                        # (D_pad, TN)

    # One fused matmul: rgb-per-cluster rows [0, 3C) + selection rows [3C, 4C).
    y = jnp.dot(w_ref[...], enc, preferred_element_type=jnp.float32)   # (4C, TN)

    C = num_clusters
    s = y[3 * C:4 * C, :]                                        # (C, TN) selection
    rows = [jnp.sum(y[ch * C:(ch + 1) * C, :] * s, axis=0, keepdims=True)
            for ch in range(3)]                                  # 3 x (1, TN)
    out_ref[...] = jnp.concatenate(rows, axis=0).astype(out_ref.dtype)


@functools.partial(jax.jit, static_argnames=("num_freqs", "num_clusters", "tile_n"))
def clusterized_reflectance_forward(X, w_fused, *, num_freqs, num_clusters,
                                    tile_n=2048):
    """Forward pass.  w_fused must come from prepare_fused_weight (hoisted setup)."""
    N, in_features = X.shape
    assert in_features <= SUB
    d_pad = w_fused.shape[-1]

    # Keep >= 4 grid steps so ("parallel",) can balance both TensorCores on v7x.
    cap = max(128, _cdiv(_cdiv(N, 4), 128) * 128)
    tile_n = min(tile_n, cap)
    n_tiles = _cdiv(N, tile_n)
    n_pad = n_tiles * tile_n

    # X^T, padded to 8 sublanes and n_pad lanes (pad values are zero; padded output
    # columns are sliced off below).
    xt = jnp.zeros((SUB, n_pad), dtype=X.dtype).at[:in_features, :N].set(X.T)

    out_t = pl.pallas_call(
        functools.partial(_reflectance_kernel,
                          num_freqs=num_freqs, num_clusters=num_clusters),
        out_shape=jax.ShapeDtypeStruct((3, n_pad), X.dtype),
        grid_spec=pltpu.PrefetchScalarGridSpec(
            num_scalar_prefetch=0,
            grid=(n_tiles,),
            in_specs=[
                pl.BlockSpec((SUB, tile_n), lambda i: (0, i)),
                pl.BlockSpec((4 * num_clusters, d_pad), lambda i: (0, 0)),
            ],
            out_specs=pl.BlockSpec((3, tile_n), lambda i: (0, i)),
        ),
        compiler_params=pltpu.CompilerParams(
            dimension_semantics=("parallel",)),
    )(xt, w_fused)

    return out_t[:, :N].T                                        # (N, 3)


def reference_forward(X, linear_mappings, x2cluster, num_freqs):
    """Pure-JAX reference matching the PyTorch forward exactly."""
    enc = posenc(X, num_freqs)
    x_pos = 3 * 2 * num_freqs
    sel = enc[:, :x_pos] @ x2cluster.T                 # (N, C)
    W = linear_mappings.reshape(-1, enc.shape[-1])     # (3C, D), row = c*3 + ch
    rgb_clusters = enc @ W.T                           # (N, 3C)
    C = x2cluster.shape[0]
    rgb_c = rgb_clusters.reshape(-1, C, 3).transpose(0, 2, 1)   # (N, 3, C)
    return jnp.einsum('nrc,nc->nr', rgb_c, sel)        # (N, 3)


if __name__ == "__main__":
    key = jax.random.PRNGKey(0)
    k_x, k_w, k_c = jax.random.split(key, 3)

    # N not a multiple of tile_n to exercise padding + a 4-step grid.
    N = 2000
    X = jax.random.uniform(k_x, (N, IN_FEATURES), dtype=jnp.float32,
                           minval=-1.0, maxval=1.0)
    # linear_mappings: (num_clusters, 3, D_ENC) -> reshaped to (3*C, D_ENC) inside.
    linear_mappings = 0.1 * jax.random.normal(
        k_w, (NUM_CLUSTERS, 3, D_ENC), dtype=jnp.float32)
    # x2cluster: (num_clusters, 3*2*num_freqs)
    x2cluster = 0.1 * jax.random.normal(
        k_c, (NUM_CLUSTERS, X_POS), dtype=jnp.float32)

    # Parameter-setup-time weight fusion (done once, NOT per forward call).
    w_fused = jax.block_until_ready(
        prepare_fused_weight(linear_mappings, x2cluster, IN_FEATURES, NUM_FREQS))

    out = clusterized_reflectance_forward(
        X, w_fused, num_freqs=NUM_FREQS, num_clusters=NUM_CLUSTERS)
    out = jax.block_until_ready(out)

    ref = jax.block_until_ready(
        reference_forward(X, linear_mappings, x2cluster, NUM_FREQS))

    assert out.shape == (N, 3), out.shape
    assert jnp.allclose(out, ref, rtol=1e-4, atol=1e-4), (
        float(jnp.max(jnp.abs(out - ref))))
    print("KERNEL_OK")
</pallas_src>

<mosaic_0001>
module attributes {stable_mosaic.version = 11 : i64} {
  func.func @_reflectance_kernel(%arg0: i32, %arg1: memref<8x512xf32, #tpu.memory_space<vmem>>, %arg2: memref<32x64xf32, #tpu.memory_space<vmem>>, %arg3: memref<3x512xf32, #tpu.memory_space<vmem>>) attributes {dimension_semantics = [#tpu.dimension_semantics<parallel>], iteration_bounds = array<i64: 4>, scalar_prefetch = 0 : i64, scratch_operands = 0 : i64, tpu.core_type = #tpu.core_type<tc>, window_params = [{transform_indices = @transform_0, window_bounds = array<i64: 8, 512>}, {pipeline_mode = #tpu.pipeline_mode<synchronous>, transform_indices = @transform_1, window_bounds = array<i64: 32, 64>}, {transform_indices = @transform_2, window_bounds = array<i64: 3, 512>}]} {
    %c0 = arith.constant 0 : index
    %c0_0 = arith.constant 0 : index
    %0 = vector.load %arg1[%c0, %c0_0] : memref<8x512xf32, #tpu.memory_space<vmem>>, vector<8x512xf32>
    %cst = arith.constant 1.000000e+00 : f32
    %1 = vector.broadcast %cst : f32 to vector<8x512xf32>
    %2 = arith.mulf %0, %1 : vector<8x512xf32>
    %3 = math.sin %2 : vector<8x512xf32>
    %cst_1 = arith.constant 2.000000e+00 : f32
    %4 = vector.broadcast %cst_1 : f32 to vector<8x512xf32>
    %5 = arith.mulf %0, %4 : vector<8x512xf32>
    %6 = math.sin %5 : vector<8x512xf32>
    %cst_2 = arith.constant 4.000000e+00 : f32
    %7 = vector.broadcast %cst_2 : f32 to vector<8x512xf32>
    %8 = arith.mulf %0, %7 : vector<8x512xf32>
    %9 = math.sin %8 : vector<8x512xf32>
    %cst_3 = arith.constant 8.000000e+00 : f32
    %10 = vector.broadcast %cst_3 : f32 to vector<8x512xf32>
    %11 = arith.mulf %0, %10 : vector<8x512xf32>
    %12 = math.sin %11 : vector<8x512xf32>
    %cst_4 = arith.constant 1.000000e+00 : f32
    %13 = vector.broadcast %cst_4 : f32 to vector<8x512xf32>
    %14 = arith.mulf %0, %13 : vector<8x512xf32>
    %15 = math.cos %14 : vector<8x512xf32>
    %cst_5 = arith.constant 2.000000e+00 : f32
    %16 = vector.broadcast %cst_5 : f32 to vector<8x512xf32>
    %17 = arith.mulf %0, %16 : vector<8x512xf32>
    %18 = math.cos %17 : vector<8x512xf32>
    %cst_6 = arith.constant 4.000000e+00 : f32
    %19 = vector.broadcast %cst_6 : f32 to vector<8x512xf32>
    %20 = arith.mulf %0, %19 : vector<8x512xf32>
    %21 = math.cos %20 : vector<8x512xf32>
    %cst_7 = arith.constant 8.000000e+00 : f32
    %22 = vector.broadcast %cst_7 : f32 to vector<8x512xf32>
    %23 = arith.mulf %0, %22 : vector<8x512xf32>
    %24 = math.cos %23 : vector<8x512xf32>
    %25 = tpu.concatenate %3, %6, %9, %12, %15, %18, %21, %24 in 0 : vector<8x512xf32>, vector<8x512xf32>, vector<8x512xf32>, vector<8x512xf32>, vector<8x512xf32>, vector<8x512xf32>, vector<8x512xf32>, vector<8x512xf32> -> vector<64x512xf32>
    %c0_8 = arith.constant 0 : index
    %c0_9 = arith.constant 0 : index
    %26 = vector.load %arg2[%c0_8, %c0_9] : memref<32x64xf32, #tpu.memory_space<vmem>>, vector<32x64xf32>
    %cst_10 = arith.constant dense<0.000000e+00> : vector<32x512xf32>
    %27 = tpu.matmul %26, %25, %cst_10 {dimension_numbers = #tpu.dot_dimension_numbers<[1], [0], [0], [1], [0, 0, 1, 1], [], []>} : vector<32x64xf32>, vector<64x512xf32>, vector<32x512xf32> -> vector<32x512xf32>
    %28 = vector.extract_strided_slice %27 {offsets = [24, 0], sizes = [8, 512], strides = [1, 1]} : vector<32x512xf32> to vector<8x512xf32>
    %29 = vector.extract_strided_slice %27 {offsets = [0, 0], sizes = [8, 512], strides = [1, 1]} : vector<32x512xf32> to vector<8x512xf32>
    %30 = arith.mulf %29, %28 : vector<8x512xf32>
    %cst_11 = arith.constant dense<0.000000e+00> : vector<512xf32>
    %31 = vector.multi_reduction <add>, %30, %cst_11 [0] : vector<8x512xf32> to vector<512xf32>
    %32 = vector.shape_cast %31 : vector<512xf32> to vector<1x512xf32>
    %33 = vector.extract_strided_slice %27 {offsets = [8, 0], sizes = [8, 512], strides = [1, 1]} : vector<32x512xf32> to vector<8x512xf32>
    %34 = arith.mulf %33, %28 : vector<8x512xf32>
    %cst_12 = arith.constant dense<0.000000e+00> : vector<512xf32>
    %35 = vector.multi_reduction <add>, %34, %cst_12 [0] : vector<8x512xf32> to vector<512xf32>
    %36 = vector.shape_cast %35 : vector<512xf32> to vector<1x512xf32>
    %37 = vector.extract_strided_slice %27 {offsets = [16, 0], sizes = [8, 512], strides = [1, 1]} : vector<32x512xf32> to vector<8x512xf32>
    %38 = arith.mulf %37, %28 : vector<8x512xf32>
    %cst_13 = arith.constant dense<0.000000e+00> : vector<512xf32>
    %39 = vector.multi_reduction <add>, %38, %cst_13 [0] : vector<8x512xf32> to vector<512xf32>
    %40 = vector.shape_cast %39 : vector<512xf32> to vector<1x512xf32>
    %41 = tpu.concatenate %32, %36, %40 in 0 : vector<1x512xf32>, vector<1x512xf32>, vector<1x512xf32> -> vector<3x512xf32>
    %c0_14 = arith.constant 0 : index
    %c0_15 = arith.constant 0 : index
    %42 = vector.load %arg3[%c0_14, %c0_15] : memref<3x512xf32, #tpu.memory_space<vmem>>, vector<3x512xf32>
    tpu.vector_store %arg3[%c0_14, %c0_15], %41 {strides = array<i32>} : memref<3x512xf32, #tpu.memory_space<vmem>>, vector<3x512xf32>,
    return
  }
  func.func @transform_0(%arg0: i32) -> (i32, i32) {
    %c0_i32 = arith.constant 0 : i32
    %c0_i32_0 = arith.constant 0 : i32
    return %c0_i32, %arg0 : i32, i32
  }
  func.func @transform_1(%arg0: i32) -> (i32, i32) {
    %c0_i32 = arith.constant 0 : i32
    %c0_i32_0 = arith.constant 0 : i32
    %c0_i32_1 = arith.constant 0 : i32
    return %c0_i32, %c0_i32_0 : i32, i32
  }
  func.func @transform_2(%arg0: i32) -> (i32, i32) {
    %c0_i32 = arith.constant 0 : i32
    %c0_i32_0 = arith.constant 0 : i32
    return %c0_i32, %arg0 : i32, i32
  }
}

</mosaic_0001>

<llo_original>
// kernel: clusterized_reflectance_forward.1
$region0: #{clusterized_reflectance_forward.1}
  #allocation0 [shape = 'u32[]', space=smem, size = 0x4, offset = 0x4, fixed_abs, tag = 'smem constant byte address 0x4 - core index']
  #allocation1 [shape = 'u32[144,128]{1,0:T(1,128)}', space=vmem, size = 0x12000, scoped, tag = 'internal scratch']
  %s0 = inlined_call_operand.vmem [shape: f32[8,2048], index: 0, kind: input, shape index: {}]
  %s1 = inlined_call_operand.vmem [shape: f32[32,64], index: 1, kind: input, shape index: {}]
  %s2 = inlined_call_operand.vmem [shape: f32[3,2048], index: 2, kind: output, shape index: {}]
  %s3 = sld [smem:[#allocation0]]
  $region41: #{clusterized_reflectance_forward.1} parent=0
    _
  %s5 = ssub.s32 1, %s3
  %s6 = scalar_select 0, %s5, %s3
  loop: start=0, step=1, limit=6
  $region2: #{clusterized_reflectance_forward.1} parent=0 // loop_pre_header
    _
  $region3: #{clusterized_reflectance_forward.1} parent=0 // loop_header
    %s8 = sphi 0, %s12
    %p9 = scmp.ge.s32.totalorder %s8, 6
    %s18 = sphi 0, %s20
    %s21 = sphi 0, %s18
    %s22 = sphi 0, %s21
    %s38 = sphi 0, %s22
    %s42 = sphi 0, %s42
    %s44 = sphi 0, %s42
    %s45 = sphi 0, %s44
    %s59 = sphi 0, %s45
    %s65 = sphi 0, %s67
    %s68 = sphi 0, %s65
    %s69 = sphi 0, %s68
    %s85 = sphi 0, %s69
  $region4: #{clusterized_reflectance_forward.1} parent=0 // loop_header_branch
    %11 = sbr.rel (%p9) target = $region8
  $region5: #{clusterized_reflectance_forward.1} parent=0 // loop_body
    %s13 = ssub.s32 %s8, 1
    %s14 = ssub.s32 %s8, 2
    %s15 = sadd.s32 %s8, 1
    %s16 = ssub.s32 %s8, %s15
    %p17 = scmp.eq.s32.totalorder %s16, 0
    %s19 = sadd.s32 %s18, 1
    %s20 = scalar_select %p17, %s18, %s19
    %p23 = pneg %p17
    %p24 = scmp.eq.s32.totalorder %s8, 3
    %p25 = por %p23, %p24
    %p26 = scmp.ne.s32.totalorder %s18, %s21
    %p27 = scmp.eq.s32.totalorder %s8, 0
    %p28 = por %p26, %p27
    %p29 = scmp.ne.s32.totalorder %s18, %s21
    %p30 = scmp.eq.s32.totalorder %s13, 3
    %p31 = por %p29, %p30
    %p32 = scmp.ne.s32.totalorder %s21, %s22
    %p33 = scmp.eq.s32.totalorder %s13, 0
    %p34 = por %p32, %p33
    %p35 = scmp.ne.s32.totalorder %s21, %s22
    %p36 = scmp.eq.s32.totalorder %s14, 3
    %p37 = por %p35, %p36
    %p39 = scmp.ne.s32.totalorder %s22, %s38
    %p40 = scmp.eq.s32.totalorder %s14, 0
    %p41 = por %p39, %p40
    %s43 = sadd.s32 %s42, 1
    %p46 = scmp.eq.s32.totalorder %s8, 3
    %p47 = scmp.ne.s32.totalorder %s42, %s44
    %p48 = scmp.eq.s32.totalorder %s8, 0
    %p49 = por %p47, %p48
    %p50 = scmp.ne.s32.totalorder %s42, %s44
    %p51 = scmp.eq.s32.totalorder %s13, 3
    %p52 = por %p50, %p51
    %p53 = scmp.ne.s32.totalorder %s44, %s45
    %p54 = scmp.eq.s32.totalorder %s13, 0
    %p55 = por %p53, %p54
    %p56 = scmp.ne.s32.totalorder %s44, %s45
    %p57 = scmp.eq.s32.totalorder %s14, 3
    %p58 = por %p56, %p57
    %p60 = scmp.ne.s32.totalorder %s45, %s59
    %p61 = scmp.eq.s32.totalorder %s14, 0
    %p62 = por %p60, %p61
    %s63 = ssub.s32 %s8, %s15
    %p64 = scmp.eq.s32.totalorder %s63, 0
    %s66 = sadd.s32 %s65, 1
    %s67 = scalar_select %p64, %s65, %s66
    %p70 = pneg %p64
    %p71 = scmp.eq.s32.totalorder %s8, 3
    %p72 = por %p70, %p71
    %p73 = scmp.ne.s32.totalorder %s65, %s68
    %p74 = scmp.eq.s32.totalorder %s8, 0
    %p75 = por %p73, %p74
    %p76 = scmp.ne.s32.totalorder %s65, %s68
    %p77 = scmp.eq.s32.totalorder %s13, 3
    %p78 = por %p76, %p77
    %p79 = scmp.ne.s32.totalorder %s68, %s69
    %p80 = scmp.eq.s32.totalorder %s13, 0
    %p81 = por %p79, %p80
    %p82 = scmp.ne.s32.totalorder %s68, %s69
    %p83 = scmp.eq.s32.totalorder %s14, 3
    %p84 = por %p82, %p83
    %p86 = scmp.ne.s32.totalorder %s69, %s85
    %p87 = scmp.eq.s32.totalorder %s14, 0
    %p88 = por %p86, %p87
    %p89 = scmp.le.s32.totalorder 1, %s8
    %p90 = scmp.lt.s32.totalorder %s8, 5
    %p91 = pnand %p89, %p90
    %p92 = pneg %p91
    // Predicated region
    $region9: #{clusterized_reflectance_forward.1} parent=5 // pred_check
      _
    $region10: #{clusterized_reflectance_forward.1} parent=5 // pred_check_branch
      %94 = sbr.rel (%p91) target = $region12
    $region11: #{clusterized_reflectance_forward.1} parent=5 // pred_region
      %s95 = ssub.s32 %s8, 1
      // Predicated region
      $region13: #{clusterized_reflectance_forward.1} parent=11 // pred_check
        %p96 = pneg %p55
      $region14: #{clusterized_reflectance_forward.1} parent=11 // pred_check_branch
        %98 = sbr.rel (%p96) target = $region16
      $region15: #{clusterized_reflectance_forward.1} parent=11 // pred_region
        _
      $region16: #{clusterized_reflectance_forward.1} parent=11 // pred_fallthru
        _
    $region12: #{clusterized_reflectance_forward.1} parent=5 // pred_fallthru
      _
    %p99 = scmp.lt.s32.totalorder %s8, 4
    // Predicated region
    $region17: #{clusterized_reflectance_forward.1} parent=5 // pred_check
      %p100 = pneg %p99
    $region18: #{clusterized_reflectance_forward.1} parent=5 // pred_check_branch
      %102 = sbr.rel (%p100) target = $region20
    $region19: #{clusterized_reflectance_forward.1} parent=5 // pred_region
      // Predicated region
      $region21: #{clusterized_reflectance_forward.1} parent=19 // pred_check
        %p103 = pneg %p28
      $region22: #{clusterized_reflectance_forward.1} parent=19 // pred_check_branch
        %105 = sbr.rel (%p103) target = $region24
      $region23: #{clusterized_reflectance_forward.1} parent=19 // pred_region
        %s106 = smul.u32 4, %s8
        %p107 = scmp.lt.s32.totalorder %s106, 15
        %s108 = scalar_select %p107, %s106, 15
        %s109 = smul.addr %s108, 8
        %s110 = scalar_lea.vmem %s0, %s109
        %s111 = smul.u32 4, %s8
      $region24: #{clusterized_reflectance_forward.1} parent=19 // pred_fallthru
        _
    $region20: #{clusterized_reflectance_forward.1} parent=5 // pred_fallthru
      _
    %p112 = scmp.le.s32.totalorder 1, %s8
    %p113 = scmp.lt.s32.totalorder %s8, 5
    %p114 = pnand %p112, %p113
    %p115 = pneg %p114
    // Predicated region
    $region25: #{clusterized_reflectance_forward.1} parent=5 // pred_check
      _
    $region26: #{clusterized_reflectance_forward.1} parent=5 // pred_check_branch
      %117 = sbr.rel (%p114) target = $region28
    $region27: #{clusterized_reflectance_forward.1} parent=5 // pred_region
      %s118 = ssub.s32 %s8, 1
      %s119 = smul.u32 4, %s13
      %p120 = scmp.lt.s32.totalorder %s119, 15
      %s121 = scalar_select %p120, %s119, 15
      %s122 = smul.addr %s121, 8
      %s123 = scalar_lea.vmem %s0, %s122
      %p124 = pneg %p34
      %p125 = pneg %p31
      %p126 = pneg %p55
      %p127 = pneg %p52
      %p128 = pneg %p81
      %p129 = pneg %p78
      %s130 = smul.u32 4, %s13
      %p131 = scmp.lt.s32.totalorder %s130, 15
      %s132 = scalar_select %p131, %s130, 15
      %s133 = smul.addr %s132, 4
      %s134 = scalar_lea.vmem %s2, %s133
      %s135 = smul.u32 4, %s13
      %p136 = scmp.lt.s32.totalorder %s135, 15
      %s137 = scalar_select %p136, %s135, 15
      %s138 = smul.addr %s137, 8
      %s139 = scalar_lea.vmem %s0, %s138
      %s140 = smul.u32 4, %s13
      %s141 = smul.u32 4, %s13
      %p142 = scmp.lt.s32.totalorder %s141, 15
      %s143 = scalar_select %p142, %s141, 15
      %s144 = smul.addr %s143, 4
      %s145 = scalar_lea.vmem %s2, %s144
      %s146 = smul.u32 4, %s13
      %v147 = vld [vmem:[%s139] sm:$0xff]
      %v148 = vld [vmem:[%s139 + $0x8] sm:$0xff]
      %v149 = vld [vmem:[%s139 + $0x10] sm:$0xff]
      %v150 = vld [vmem:[%s139 + $0x18] sm:$0xff]
      %v151 = vand.u32 2147483647, %v147
      %vm152 = vcmp.le.f32.partialorder %v151, 0.7853982
      %vm153 = vcmp.lt.s32.totalorder %v147, 0
      %v154 = vand.u32 %v147, 2139095040
      %v155 = vshrl.u32 %v154, 23
      %v156 = vsub.s32 %v155, 127
      %v157 = vand.u32 2147483647, %v147
      %v158 = vand.u32 %v157, 8388607
      %v159 = vor.u32 %v158, 8388608
      %v160 = vsub.s32 0, %v159
      %v161 = vadd.s32 %v156, 1
      %vm162 = vcmp.gt.s32.totalorder %v161, 0
      %v163 = vsel %vm162, %v161, 0
      %v164 = vshrl.u32 %v163, 5
      %v165 = vand.u32 %v163, 31
      %v166 = vsub.s32 32, %v165
      %v167 = vshrl.u32 683565275, %v166
      %v168 = vshll.u32 683565275, %v165
      %v169 = vshrl.u32 2475754826, %v166
      %v170 = vor.u32 %v168, %v169
      %v171 = vshll.u32 2475754826, %v165
      %v172 = vshrl.u32 2131351028, %v166
      %v173 = vor.u32 %v171, %v172
      %v174 = vshll.u32 2131351028, %v165
      %v175 = vshrl.u32 2102212464, %v166
      %v176 = vor.u32 %v174, %v175
      %v177 = vshll.u32 2102212464, %v165
      %v178 = vshrl.u32 920167782, %v166
      %v179 = vor.u32 %v177, %v178
      %v180 = vshll.u32 920167782, %v165
      %v181 = vshrl.u32 1326507024, %v166
      %v182 = vor.u32 %v180, %v181
      %vm183 = vcmp.lt.s32.totalorder %v164, 1
      %vm184 = vcmp.lt.s32.totalorder %v164, 2
      %vm185 = vcmp.lt.s32.totalorder %v164, 3
      %vm186 = vcmp.lt.s32.totalorder %v164, 4
      %v187 = vsel %vm183, %v167, %v170
      %v188 = vsel %vm186, %v176, 2102212464
      %v189 = vsel %vm185, %v173, %v188
      %v190 = vsel %vm184, %v187, %v189
      %v191 = vsel %vm183, %v170, %v173
      %v192 = vsel %vm186, %v179, 920167782
      %v193 = vsel %vm185, %v176, %v192
      %v194 = vsel %vm184, %v191, %v193
      %v195 = vsel %vm183, %v173, %v176
      %v196 = vsel %vm186, %v182, 1326507024
      %v197 = vsel %vm185, %v179, %v196
      %v198 = vsel %vm184, %v195, %v197
      %v199 = vshll.u32 %v159, 8
      %v200 = vmul.u32.u64.compose %v199, %v198
      %v201 = vextract.low.u32 %v200
      %v202 = vextract.high.u32 %v200
      %v203 = vmul.u32.u64.compose %v199, %v194
      %v204 = vextract.low.u32 %v203
      %v205 = vextract.high.u32 %v203
      %v206 = vmul.u32 %v199, %v190
      %v207 = vadd.s32 %v202, %v204
      %vm208 = vc.u32 %v202, %v204
      %v209 = vadd.s32 %v205, 1
      %v210 = vsel %vm208, %v209, %v205
      %v211 = vadd.s32 %v206, %v210
      %v212 = vadd.s32 %v211, 536870912
      %v213 = vshrl.u32 %v212, 30
      %v214 = vshll.u32 %v213, 30
      %v215 = vsub.s32 %v211, %v214
      %vm216 = vcmp.lt.s32.totalorder %v215, 0
      %v217 = vsub.s32 0, %v215
      %v218 = vsel %vm216, %v217, %v215
      %v219 = vclz %v218
      %v220 = vsub.s32 %v219, 2
      %vm221 = vcmp.gt.s32.totalorder 0, %v220
      %v222 = vsel %vm221, 0, %v220
      %v223 = vsub.s32 32, %v222
      %v224 = vshll.u32 %v215, %v222
      %v225 = vshrl.u32 %v207, %v223
      %v226 = vor.u32 %v224, %v225
      %v227 = vsub.s32 4294967266, %v222
      %v228 = vadd.s32 %v227, 127
      %v229 = vshll.u32 %v228, 23
      %v230 = vor.u32 4788187, %v229
      %v231 = vand.u32 2147483647, %v230
      %v233 = vcvt.s32.f32 %v226
      %v234 = vmul.f32 %v233, %v231
      %v235 = vxor.u32 %v234, 2147483648
      %v236 = vsel %vm153, %v235, %v234
      %v237 = vsub.s32 4, %v213
      %v238 = vsel %vm153, %v237, %v213
      %v239 = vsel %vm152, %v147, %v236
      %v240 = vsel %vm152, 0, %v238
      %v241 = vcosq.f32.pop %v239
      %v242 = vsinq.f32.pop %v239
      %vm243 = vweird.f32 %v147
      %v244 = vadd.s32 %v240, 3
      %v245 = vand.u32 %v244, 3
      %vm246 = vcmp.lt.s32.totalorder %v245, 2
      %vm247 = vcmp.eq.s32.totalorder %v245, 0
      %v248 = vxor.u32 %v242, 2147483648
      %v249 = vsel %vm247, %v241, %v248
      %vm250 = vcmp.eq.s32.totalorder %v245, 2
      %v251 = vxor.u32 %v241, 2147483648
      %v252 = vsel %vm250, %v251, %v242
      %v253 = vsel %vm246, %v249, %v252
      %v254 = vsel %vm243, nan, %v253
      %v255 = vand.u32 2147483647, %v148
      %vm256 = vcmp.le.f32.partialorder %v255, 0.7853982
      %vm257 = vcmp.lt.s32.totalorder %v148, 0
      %v258 = vand.u32 %v148, 2139095040
      %v259 = vshrl.u32 %v258, 23
      %v260 = vsub.s32 %v259, 127
      %v261 = vand.u32 2147483647, %v148
      %v262 = vand.u32 %v261, 8388607
      %v263 = vor.u32 %v262, 8388608
      %v264 = vsub.s32 0, %v263
      %v265 = vadd.s32 %v260, 1
      %vm266 = vcmp.gt.s32.totalorder %v265, 0
      %v267 = vsel %vm266, %v265, 0
      %v268 = vshrl.u32 %v267, 5
      %v269 = vand.u32 %v267, 31
      %v270 = vsub.s32 32, %v269
      %v271 = vshrl.u32 683565275, %v270
      %v272 = vshll.u32 683565275, %v269
      %v273 = vshrl.u32 2475754826, %v270
      %v274 = vor.u32 %v272, %v273
      %v275 = vshll.u32 2475754826, %v269
      %v276 = vshrl.u32 2131351028, %v270
      %v277 = vor.u32 %v275, %v276
      %v278 = vshll.u32 2131351028, %v269
      %v279 = vshrl.u32 2102212464, %v270
      %v280 = vor.u32 %v278, %v279
      %v281 = vshll.u32 2102212464, %v269
      %v282 = vshrl.u32 920167782, %v270
      %v283 = vor.u32 %v281, %v282
      %v284 = vshll.u32 920167782, %v269
      %v285 = vshrl.u32 1326507024, %v270
      %v286 = vor.u32 %v284, %v285
      %vm287 = vcmp.lt.s32.totalorder %v268, 1
      %vm288 = vcmp.lt.s32.totalorder %v268, 2
      %vm289 = vcmp.lt.s32.totalorder %v268, 3
      %vm290 = vcmp.lt.s32.totalorder %v268, 4
      %v291 = vsel %vm287, %v271, %v274
      %v292 = vsel %vm290, %v280, 2102212464
      %v293 = vsel %vm289, %v277, %v292
      %v294 = vsel %vm288, %v291, %v293
      %v295 = vsel %vm287, %v274, %v277
      %v296 = vsel %vm290, %v283, 920167782
      %v297 = vsel %vm289, %v280, %v296
      %v298 = vsel %vm288, %v295, %v297
      %v299 = vsel %vm287, %v277, %v280
      %v300 = vsel %vm290, %v286, 1326507024
      %v301 = vsel %vm289, %v283, %v300
      %v302 = vsel %vm288, %v299, %v301
      %v303 = vshll.u32 %v263, 8
      %v304 = vmul.u32.u64.compose %v303, %v302
      %v305 = vextract.low.u32 %v304
      %v306 = vextract.high.u32 %v304
      %v307 = vmul.u32.u64.compose %v303, %v298
      %v308 = vextract.low.u32 %v307
      %v309 = vextract.high.u32 %v307
      %v310 = vmul.u32 %v303, %v294
      %v311 = vadd.s32 %v306, %v308
      %vm312 = vc.u32 %v306, %v308
      %v313 = vadd.s32 %v309, 1
      %v314 = vsel %vm312, %v313, %v309
      %v315 = vadd.s32 %v310, %v314
      %v316 = vadd.s32 %v315, 536870912
      %v317 = vshrl.u32 %v316, 30
      %v318 = vshll.u32 %v317, 30
      %v319 = vsub.s32 %v315, %v318
      %vm320 = vcmp.lt.s32.totalorder %v319, 0
      %v321 = vsub.s32 0, %v319
      %v322 = vsel %vm320, %v321, %v319
      %v323 = vclz %v322
      %v324 = vsub.s32 %v323, 2
      %vm325 = vcmp.gt.s32.totalorder 0, %v324
      %v326 = vsel %vm325, 0, %v324
      %v327 = vsub.s32 32, %v326
      %v328 = vshll.u32 %v319, %v326
      %v329 = vshrl.u32 %v311, %v327
      %v330 = vor.u32 %v328, %v329
      %v331 = vsub.s32 4294967266, %v326
      %v332 = vadd.s32 %v331, 127
      %v333 = vshll.u32 %v332, 23
      %v334 = vor.u32 4788187, %v333
      %v335 = vand.u32 2147483647, %v334
      %v337 = vcvt.s32.f32 %v330
      %v338 = vmul.f32 %v337, %v335
      %v339 = vxor.u32 %v338, 2147483648
      %v340 = vsel %vm257, %v339, %v338
      %v341 = vsub.s32 4, %v317
      %v342 = vsel %vm257, %v341, %v317
      %v343 = vsel %vm256, %v148, %v340
      %v344 = vsel %vm256, 0, %v342
      %v345 = vcosq.f32.pop %v343
      %v346 = vsinq.f32.pop %v343
      %vm347 = vweird.f32 %v148
      %v348 = vadd.s32 %v344, 3
      %v349 = vand.u32 %v348, 3
      %vm350 = vcmp.lt.s32.totalorder %v349, 2
      %vm351 = vcmp.eq.s32.totalorder %v349, 0
      %v352 = vxor.u32 %v346, 2147483648
      %v353 = vsel %vm351, %v345, %v352
      %vm354 = vcmp.eq.s32.totalorder %v349, 2
      %v355 = vxor.u32 %v345, 2147483648
      %v356 = vsel %vm354, %v355, %v346
      %v357 = vsel %vm350, %v353, %v356
      %v358 = vsel %vm347, nan, %v357
      %v359 = vand.u32 2147483647, %v149
      %vm360 = vcmp.le.f32.partialorder %v359, 0.7853982
      %vm361 = vcmp.lt.s32.totalorder %v149, 0
      %v362 = vand.u32 %v149, 2139095040
      %v363 = vshrl.u32 %v362, 23
      %v364 = vsub.s32 %v363, 127
      %v365 = vand.u32 2147483647, %v149
      %v366 = vand.u32 %v365, 8388607
      %v367 = vor.u32 %v366, 8388608
      %v368 = vsub.s32 0, %v367
      %v369 = vadd.s32 %v364, 1
      %vm370 = vcmp.gt.s32.totalorder %v369, 0
      %v371 = vsel %vm370, %v369, 0
      %v372 = vshrl.u32 %v371, 5
      %v373 = vand.u32 %v371, 31
      %v374 = vsub.s32 32, %v373
      %v375 = vshrl.u32 683565275, %v374
      %v376 = vshll.u32 683565275, %v373
      %v377 = vshrl.u32 2475754826, %v374
      %v378 = vor.u32 %v376, %v377
      %v379 = vshll.u32 2475754826, %v373
      %v380 = vshrl.u32 2131351028, %v374
      %v381 = vor.u32 %v379, %v380
      %v382 = vshll.u32 2131351028, %v373
      %v383 = vshrl.u32 2102212464, %v374
      %v384 = vor.u32 %v382, %v383
      %v385 = vshll.u32 2102212464, %v373
      %v386 = vshrl.u32 920167782, %v374
      %v387 = vor.u32 %v385, %v386
      %v388 = vshll.u32 920167782, %v373
      %v389 = vshrl.u32 1326507024, %v374
      %v390 = vor.u32 %v388, %v389
      %vm391 = vcmp.lt.s32.totalorder %v372, 1
      %vm392 = vcmp.lt.s32.totalorder %v372, 2
      %vm393 = vcmp.lt.s32.totalorder %v372, 3
      %vm394 = vcmp.lt.s32.totalorder %v372, 4
      %v395 = vsel %vm391, %v375, %v378
      %v396 = vsel %vm394, %v384, 2102212464
      %v397 = vsel %vm393, %v381, %v396
      %v398 = vsel %vm392, %v395, %v397
      %v399 = vsel %vm391, %v378, %v381
      %v400 = vsel %vm394, %v387, 920167782
      %v401 = vsel %vm393, %v384, %v400
      %v402 = vsel %vm392, %v399, %v401
      %v403 = vsel %vm391, %v381, %v384
      %v404 = vsel %vm394, %v390, 1326507024
      %v405 = vsel %vm393, %v387, %v404
      %v406 = vsel %vm392, %v403, %v405
      %v407 = vshll.u32 %v367, 8
      %v408 = vmul.u32.u64.compose %v407, %v406
      %v409 = vextract.low.u32 %v408
      %v410 = vextract.high.u32 %v408
      %v411 = vmul.u32.u64.compose %v407, %v402
      %v412 = vextract.low.u32 %v411
      %v413 = vextract.high.u32 %v411
      %v414 = vmul.u32 %v407, %v398
      %v415 = vadd.s32 %v410, %v412
      %vm416 = vc.u32 %v410, %v412
      %v417 = vadd.s32 %v413, 1
      %v418 = vsel %vm416, %v417, %v413
      %v419 = vadd.s32 %v414, %v418
      %v420 = vadd.s32 %v419, 536870912
      %v421 = vshrl.u32 %v420, 30
      %v422 = vshll.u32 %v421, 30
      %v423 = vsub.s32 %v419, %v422
      %vm424 = vcmp.lt.s32.totalorder %v423, 0
      %v425 = vsub.s32 0, %v423
      %v426 = vsel %vm424, %v425, %v423
      %v427 = vclz %v426
      %v428 = vsub.s32 %v427, 2
      %vm429 = vcmp.gt.s32.totalorder 0, %v428
      %v430 = vsel %vm429, 0, %v428
      %v431 = vsub.s32 32, %v430
      %v432 = vshll.u32 %v423, %v430
      %v433 = vshrl.u32 %v415, %v431
      %v434 = vor.u32 %v432, %v433
      %v435 = vsub.s32 4294967266, %v430
      %v436 = vadd.s32 %v435, 127
      %v437 = vshll.u32 %v436, 23
      %v438 = vor.u32 4788187, %v437
      %v439 = vand.u32 2147483647, %v438
      %v441 = vcvt.s32.f32 %v434
      %v442 = vmul.f32 %v441, %v439
      %v443 = vxor.u32 %v442, 2147483648
      %v444 = vsel %vm361, %v443, %v442
      %v445 = vsub.s32 4, %v421
      %v446 = vsel %vm361, %v445, %v421
      %v447 = vsel %vm360, %v149, %v444
      %v448 = vsel %vm360, 0, %v446
      %v449 = vcosq.f32.pop %v447
      %v450 = vsinq.f32.pop %v447
      %vm451 = vweird.f32 %v149
      %v452 = vadd.s32 %v448, 3
      %v453 = vand.u32 %v452, 3
      %vm454 = vcmp.lt.s32.totalorder %v453, 2
      %vm455 = vcmp.eq.s32.totalorder %v453, 0
      %v456 = vxor.u32 %v450, 2147483648
      %v457 = vsel %vm455, %v449, %v456
      %vm458 = vcmp.eq.s32.totalorder %v453, 2
      %v459 = vxor.u32 %v449, 2147483648
      %v460 = vsel %vm458, %v459, %v450
      %v461 = vsel %vm454, %v457, %v460
      %v462 = vsel %vm451, nan, %v461
      %v463 = vand.u32 2147483647, %v150
      %vm464 = vcmp.le.f32.partialorder %v463, 0.7853982
      %vm465 = vcmp.lt.s32.totalorder %v150, 0
      %v466 = vand.u32 %v150, 2139095040
      %v467 = vshrl.u32 %v466, 23
      %v468 = vsub.s32 %v467, 127
      %v469 = vand.u32 2147483647, %v150
      %v470 = vand.u32 %v469, 8388607
      %v471 = vor.u32 %v470, 8388608
      %v472 = vsub.s32 0, %v471
      %v473 = vadd.s32 %v468, 1
      %vm474 = vcmp.gt.s32.totalorder %v473, 0
      %v475 = vsel %vm474, %v473, 0
      %v476 = vshrl.u32 %v475, 5
      %v477 = vand.u32 %v475, 31
      %v478 = vsub.s32 32, %v477
      %v479 = vshrl.u32 683565275, %v478
      %v480 = vshll.u32 683565275, %v477
      %v481 = vshrl.u32 2475754826, %v478
      %v482 = vor.u32 %v480, %v481
      %v483 = vshll.u32 2475754826, %v477
      %v484 = vshrl.u32 2131351028, %v478
      %v485 = vor.u32 %v483, %v484
      %v486 = vshll.u32 2131351028, %v477
      %v487 = vshrl.u32 2102212464, %v478
      %v488 = vor.u32 %v486, %v487
      %v489 = vshll.u32 2102212464, %v477
      %v490 = vshrl.u32 920167782, %v478
      %v491 = vor.u32 %v489, %v490
      %v492 = vshll.u32 920167782, %v477
      %v493 = vshrl.u32 1326507024, %v478
      %v494 = vor.u32 %v492, %v493
      %vm495 = vcmp.lt.s32.totalorder %v476, 1
      %vm496 = vcmp.lt.s32.totalorder %v476, 2
      %vm497 = vcmp.lt.s32.totalorder %v476, 3
      %vm498 = vcmp.lt.s32.totalorder %v476, 4
      %v499 = vsel %vm495, %v479, %v482
      %v500 = vsel %vm498, %v488, 2102212464
      %v501 = vsel %vm497, %v485, %v500
      %v502 = vsel %vm496, %v499, %v501
      %v503 = vsel %vm495, %v482, %v485
      %v504 = vsel %vm498, %v491, 920167782
      %v505 = vsel %vm497, %v488, %v504
      %v506 = vsel %vm496, %v503, %v505
      %v507 = vsel %vm495, %v485, %v488
      %v508 = vsel %vm498, %v494, 1326507024
      %v509 = vsel %vm497, %v491, %v508
      %v510 = vsel %vm496, %v507, %v509
      %v511 = vshll.u32 %v471, 8
      %v512 = vmul.u32.u64.compose %v511, %v510
      %v513 = vextract.low.u32 %v512
      %v514 = vextract.high.u32 %v512
      %v515 = vmul.u32.u64.compose %v511, %v506
      %v516 = vextract.low.u32 %v515
      %v517 = vextract.high.u32 %v515
      %v518 = vmul.u32 %v511, %v502
      %v519 = vadd.s32 %v514, %v516
      %vm520 = vc.u32 %v514, %v516
      %v521 = vadd.s32 %v517, 1
      %v522 = vsel %vm520, %v521, %v517
      %v523 = vadd.s32 %v518, %v522
      %v524 = vadd.s32 %v523, 536870912
      %v525 = vshrl.u32 %v524, 30
      %v526 = vshll.u32 %v525, 30
      %v527 = vsub.s32 %v523, %v526
      %vm528 = vcmp.lt.s32.totalorder %v527, 0
      %v529 = vsub.s32 0, %v527
      %v530 = vsel %vm528, %v529, %v527
      %v531 = vclz %v530
      %v532 = vsub.s32 %v531, 2
      %vm533 = vcmp.gt.s32.totalorder 0, %v532
      %v534 = vsel %vm533, 0, %v532
      %v535 = vsub.s32 32, %v534
      %v536 = vshll.u32 %v527, %v534
      %v537 = vshrl.u32 %v519, %v535
      %v538 = vor.u32 %v536, %v537
      %v539 = vsub.s32 4294967266, %v534
      %v540 = vadd.s32 %v539, 127
      %v541 = vshll.u32 %v540, 23
      %v542 = vor.u32 4788187, %v541
      %v543 = vand.u32 2147483647, %v542
      %v545 = vcvt.s32.f32 %v538
      %v546 = vmul.f32 %v545, %v543
      %v547 = vxor.u32 %v546, 2147483648
      %v548 = vsel %vm465, %v547, %v546
      %v549 = vsub.s32 4, %v525
      %v550 = vsel %vm465, %v549, %v525
      %v551 = vsel %vm464, %v150, %v548
      %v552 = vsel %vm464, 0, %v550
      %v553 = vcosq.f32.pop %v551
      %v554 = vsinq.f32.pop %v551
      %vm555 = vweird.f32 %v150
      %v556 = vadd.s32 %v552, 3
      %v557 = vand.u32 %v556, 3
      %vm558 = vcmp.lt.s32.totalorder %v557, 2
      %vm559 = vcmp.eq.s32.totalorder %v557, 0
      %v560 = vxor.u32 %v554, 2147483648
      %v561 = vsel %vm559, %v553, %v560
      %vm562 = vcmp.eq.s32.totalorder %v557, 2
      %v563 = vxor.u32 %v553, 2147483648
      %v564 = vsel %vm562, %v563, %v554
      %v565 = vsel %vm558, %v561, %v564
      %v566 = vsel %vm555, nan, %v565
      %v567 = vmul.f32 %v147, 2.0
      %v568 = vmul.f32 %v148, 2.0
      %v569 = vmul.f32 %v149, 2.0
      %v570 = vmul.f32 %v150, 2.0
      %v571 = vand.u32 2147483647, %v567
      %vm572 = vcmp.le.f32.partialorder %v571, 0.7853982
      %vm573 = vcmp.lt.s32.totalorder %v567, 0
      %v574 = vand.u32 %v567, 2139095040
      %v575 = vshrl.u32 %v574, 23
      %v576 = vsub.s32 %v575, 127
      %v577 = vand.u32 2147483647, %v567
      %v578 = vand.u32 %v577, 8388607
      %v579 = vor.u32 %v578, 8388608
      %v580 = vsub.s32 0, %v579
      %v581 = vadd.s32 %v576, 1
      %vm582 = vcmp.gt.s32.totalorder %v581, 0
      %v583 = vsel %vm582, %v581, 0
      %v584 = vshrl.u32 %v583, 5
      %v585 = vand.u32 %v583, 31
      %v586 = vsub.s32 32, %v585
      %v587 = vshrl.u32 683565275, %v586
      %v588 = vshll.u32 683565275, %v585
      %v589 = vshrl.u32 2475754826, %v586
      %v590 = vor.u32 %v588, %v589
      %v591 = vshll.u32 2475754826, %v585
      %v592 = vshrl.u32 2131351028, %v586
      %v593 = vor.u32 %v591, %v592
      %v594 = vshll.u32 2131351028, %v585
      %v595 = vshrl.u32 2102212464, %v586
      %v596 = vor.u32 %v594, %v595
      %v597 = vshll.u32 2102212464, %v585
      %v598 = vshrl.u32 920167782, %v586
      %v599 = vor.u32 %v597, %v598
      %v600 = vshll.u32 920167782, %v585
      %v601 = vshrl.u32 1326507024, %v586
      %v602 = vor.u32 %v600, %v601
      %vm603 = vcmp.lt.s32.totalorder %v584, 1
      %vm604 = vcmp.lt.s32.totalorder %v584, 2
      %vm605 = vcmp.lt.s32.totalorder %v584, 3
      %vm606 = vcmp.lt.s32.totalorder %v584, 4
      %v607 = vsel %vm603, %v587, %v590
      %v608 = vsel %vm606, %v596, 2102212464
      %v609 = vsel %vm605, %v593, %v608
      %v610 = vsel %vm604, %v607, %v609
      %v611 = vsel %vm603, %v590, %v593
      %v612 = vsel %vm606, %v599, 920167782
      %v613 = vsel %vm605, %v596, %v612
      %v614 = vsel %vm604, %v611, %v613
      %v615 = vsel %vm603, %v593, %v596
      %v616 = vsel %vm606, %v602, 1326507024
      %v617 = vsel %vm605, %v599, %v616
      %v618 = vsel %vm604, %v615, %v617
      %v619 = vshll.u32 %v579, 8
      %v620 = vmul.u32.u64.compose %v619, %v618
      %v621 = vextract.low.u32 %v620
      %v622 = vextract.high.u32 %v620
      %v623 = vmul.u32.u64.compose %v619, %v614
      %v624 = vextract.low.u32 %v623
      %v625 = vextract.high.u32 %v623
      %v626 = vmul.u32 %v619, %v610
      %v627 = vadd.s32 %v622, %v624
      %vm628 = vc.u32 %v622, %v624
      %v629 = vadd.s32 %v625, 1
      %v630 = vsel %vm628, %v629, %v625
      %v631 = vadd.s32 %v626, %v630
      %v632 = vadd.s32 %v631, 536870912
      %v633 = vshrl.u32 %v632, 30
      %v634 = vshll.u32 %v633, 30
      %v635 = vsub.s32 %v631, %v634
      %vm636 = vcmp.lt.s32.totalorder %v635, 0
      %v637 = vsub.s32 0, %v635
      %v638 = vsel %vm636, %v637, %v635
      %v639 = vclz %v638
      %v640 = vsub.s32 %v639, 2
      %vm641 = vcmp.gt.s32.totalorder 0, %v640
      %v642 = vsel %vm641, 0, %v640
      %v643 = vsub.s32 32, %v642
      %v644 = vshll.u32 %v635, %v642
      %v645 = vshrl.u32 %v627, %v643
      %v646 = vor.u32 %v644, %v645
      %v647 = vsub.s32 4294967266, %v642
      %v648 = vadd.s32 %v647, 127
      %v649 = vshll.u32 %v648, 23
      %v650 = vor.u32 4788187, %v649
      %v651 = vand.u32 2147483647, %v650
      %v653 = vcvt.s32.f32 %v646
      %v654 = vmul.f32 %v653, %v651
      %v655 = vxor.u32 %v654, 2147483648
      %v656 = vsel %vm573, %v655, %v654
      %v657 = vsub.s32 4, %v633
      %v658 = vsel %vm573, %v657, %v633
      %v659 = vsel %vm572, %v567, %v656
      %v660 = vsel %vm572, 0, %v658
      %v661 = vcosq.f32.pop %v659
      %v662 = vsinq.f32.pop %v659
      %vm663 = vweird.f32 %v567
      %v664 = vadd.s32 %v660, 3
      %v665 = vand.u32 %v664, 3
      %vm666 = vcmp.lt.s32.totalorder %v665, 2
      %vm667 = vcmp.eq.s32.totalorder %v665, 0
      %v668 = vxor.u32 %v662, 2147483648
      %v669 = vsel %vm667, %v661, %v668
      %vm670 = vcmp.eq.s32.totalorder %v665, 2
      %v671 = vxor.u32 %v661, 2147483648
      %v672 = vsel %vm670, %v671, %v662
      %v673 = vsel %vm666, %v669, %v672
      %v674 = vsel %vm663, nan, %v673
      %v675 = vand.u32 2147483647, %v568
      %vm676 = vcmp.le.f32.partialorder %v675, 0.7853982
      %vm677 = vcmp.lt.s32.totalorder %v568, 0
      %v678 = vand.u32 %v568, 2139095040
      %v679 = vshrl.u32 %v678, 23
      %v680 = vsub.s32 %v679, 127
      %v681 = vand.u32 2147483647, %v568
      %v682 = vand.u32 %v681, 8388607
      %v683 = vor.u32 %v682, 8388608
      %v684 = vsub.s32 0, %v683
      %v685 = vadd.s32 %v680, 1
      %vm686 = vcmp.gt.s32.totalorder %v685, 0
      %v687 = vsel %vm686, %v685, 0
      %v688 = vshrl.u32 %v687, 5
      %v689 = vand.u32 %v687, 31
      %v690 = vsub.s32 32, %v689
      %v691 = vshrl.u32 683565275, %v690
      %v692 = vshll.u32 683565275, %v689
      %v693 = vshrl.u32 2475754826, %v690
      %v694 = vor.u32 %v692, %v693
      %v695 = vshll.u32 2475754826, %v689
      %v696 = vshrl.u32 2131351028, %v690
      %v697 = vor.u32 %v695, %v696
      %v698 = vshll.u32 2131351028, %v689
      %v699 = vshrl.u32 2102212464, %v690
      %v700 = vor.u32 %v698, %v699
      %v701 = vshll.u32 2102212464, %v689
      %v702 = vshrl.u32 920167782, %v690
      %v703 = vor.u32 %v701, %v702
      %v704 = vshll.u32 920167782, %v689
      %v705 = vshrl.u32 1326507024, %v690
      %v706 = vor.u32 %v704, %v705
      %vm707 = vcmp.lt.s32.totalorder %v688, 1
      %vm708 = vcmp.lt.s32.totalorder %v688, 2
      %vm709 = vcmp.lt.s32.totalorder %v688, 3
      %vm710 = vcmp.lt.s32.totalorder %v688, 4
      %v711 = vsel %vm707, %v691, %v694
      %v712 = vsel %vm710, %v700, 2102212464
      %v713 = vsel %vm709, %v697, %v712
      %v714 = vsel %vm708, %v711, %v713
      %v715 = vsel %vm707, %v694, %v697
      %v716 = vsel %vm710, %v703, 920167782
      %v717 = vsel %vm709, %v700, %v716
      %v718 = vsel %vm708, %v715, %v717
      %v719 = vsel %vm707, %v697, %v700
      %v720 = vsel %vm710, %v706, 1326507024
      %v721 = vsel %vm709, %v703, %v720
      %v722 = vsel %vm708, %v719, %v721
      %v723 = vshll.u32 %v683, 8
      %v724 = vmul.u32.u64.compose %v723, %v722
      %v725 = vextract.low.u32 %v724
      %v726 = vextract.high.u32 %v724
      %v727 = vmul.u32.u64.compose %v723, %v718
      %v728 = vextract.low.u32 %v727
      %v729 = vextract.high.u32 %v727
      %v730 = vmul.u32 %v723, %v714
      %v731 = vadd.s32 %v726, %v728
      %vm732 = vc.u32 %v726, %v728
      %v733 = vadd.s32 %v729, 1
      %v734 = vsel %vm732, %v733, %v729
      %v735 = vadd.s32 %v730, %v734
      %v736 = vadd.s32 %v735, 536870912
      %v737 = vshrl.u32 %v736, 30
      %v738 = vshll.u32 %v737, 30
      %v739 = vsub.s32 %v735, %v738
      %vm740 = vcmp.lt.s32.totalorder %v739, 0
      %v741 = vsub.s32 0, %v739
      %v742 = vsel %vm740, %v741, %v739
      %v743 = vclz %v742
      %v744 = vsub.s32 %v743, 2
      %vm745 = vcmp.gt.s32.totalorder 0, %v744
      %v746 = vsel %vm745, 0, %v744
      %v747 = vsub.s32 32, %v746
      %v748 = vshll.u32 %v739, %v746
      %v749 = vshrl.u32 %v731, %v747
      %v750 = vor.u32 %v748, %v749
      %v751 = vsub.s32 4294967266, %v746
      %v752 = vadd.s32 %v751, 127
      %v753 = vshll.u32 %v752, 23
      %v754 = vor.u32 4788187, %v753
      %v755 = vand.u32 2147483647, %v754
      %v757 = vcvt.s32.f32 %v750
      %v758 = vmul.f32 %v757, %v755
      %v759 = vxor.u32 %v758, 2147483648
      %v760 = vsel %vm677, %v759, %v758
      %v761 = vsub.s32 4, %v737
      %v762 = vsel %vm677, %v761, %v737
      %v763 = vsel %vm676, %v568, %v760
      %v764 = vsel %vm676, 0, %v762
      %v765 = vcosq.f32.pop %v763
      %v766 = vsinq.f32.pop %v763
      %vm767 = vweird.f32 %v568
      %v768 = vadd.s32 %v764, 3
      %v769 = vand.u32 %v768, 3
      %vm770 = vcmp.lt.s32.totalorder %v769, 2
      %vm771 = vcmp.eq.s32.totalorder %v769, 0
      %v772 = vxor.u32 %v766, 2147483648
      %v773 = vsel %vm771, %v765, %v772
      %vm774 = vcmp.eq.s32.totalorder %v769, 2
      %v775 = vxor.u32 %v765, 2147483648
      %v776 = vsel %vm774, %v775, %v766
      %v777 = vsel %vm770, %v773, %v776
      %v778 = vsel %vm767, nan, %v777
      %v779 = vand.u32 2147483647, %v569
      %vm780 = vcmp.le.f32.partialorder %v779, 0.7853982
      %vm781 = vcmp.lt.s32.totalorder %v569, 0
      %v782 = vand.u32 %v569, 2139095040
      %v783 = vshrl.u32 %v782, 23
      %v784 = vsub.s32 %v783, 127
      %v785 = vand.u32 2147483647, %v569
      %v786 = vand.u32 %v785, 8388607
      %v787 = vor.u32 %v786, 8388608
      %v788 = vsub.s32 0, %v787
      %v789 = vadd.s32 %v784, 1
      %vm790 = vcmp.gt.s32.totalorder %v789, 0
      %v791 = vsel %vm790, %v789, 0
      %v792 = vshrl.u32 %v791, 5
      %v793 = vand.u32 %v791, 31
      %v794 = vsub.s32 32, %v793
      %v795 = vshrl.u32 683565275, %v794
      %v796 = vshll.u32 683565275, %v793
      %v797 = vshrl.u32 2475754826, %v794
      %v798 = vor.u32 %v796, %v797
      %v799 = vshll.u32 2475754826, %v793
      %v800 = vshrl.u32 2131351028, %v794
      %v801 = vor.u32 %v799, %v800
      %v802 = vshll.u32 2131351028, %v793
      %v803 = vshrl.u32 2102212464, %v794
      %v804 = vor.u32 %v802, %v803
      %v805 = vshll.u32 2102212464, %v793
      %v806 = vshrl.u32 920167782, %v794
      %v807 = vor.u32 %v805, %v806
      %v808 = vshll.u32 920167782, %v793
      %v809 = vshrl.u32 1326507024, %v794
      %v810 = vor.u32 %v808, %v809
      %vm811 = vcmp.lt.s32.totalorder %v792, 1
      %vm812 = vcmp.lt.s32.totalorder %v792, 2
      %vm813 = vcmp.lt.s32.totalorder %v792, 3
      %vm814 = vcmp.lt.s32.totalorder %v792, 4
      %v815 = vsel %vm811, %v795, %v798
      %v816 = vsel %vm814, %v804, 2102212464
      %v817 = vsel %vm813, %v801, %v816
      %v818 = vsel %vm812, %v815, %v817
      %v819 = vsel %vm811, %v798, %v801
      %v820 = vsel %vm814, %v807, 920167782
      %v821 = vsel %vm813, %v804, %v820
      %v822 = vsel %vm812, %v819, %v821
      %v823 = vsel %vm811, %v801, %v804
      %v824 = vsel %vm814, %v810, 1326507024
      %v825 = vsel %vm813, %v807, %v824
      %v826 = vsel %vm812, %v823, %v825
      %v827 = vshll.u32 %v787, 8
      %v828 = vmul.u32.u64.compose %v827, %v826
      %v829 = vextract.low.u32 %v828
      %v830 = vextract.high.u32 %v828
      %v831 = vmul.u32.u64.compose %v827, %v822
      %v832 = vextract.low.u32 %v831
      %v833 = vextract.high.u32 %v831
      %v834 = vmul.u32 %v827, %v818
      %v835 = vadd.s32 %v830, %v832
      %vm836 = vc.u32 %v830, %v832
      %v837 = vadd.s32 %v833, 1
      %v838 = vsel %vm836, %v837, %v833
      %v839 = vadd.s32 %v834, %v838
      %v840 = vadd.s32 %v839, 536870912
      %v841 = vshrl.u32 %v840, 30
      %v842 = vshll.u32 %v841, 30
      %v843 = vsub.s32 %v839, %v842
      %vm844 = vcmp.lt.s32.totalorder %v843, 0
      %v845 = vsub.s32 0, %v843
      %v846 = vsel %vm844, %v845, %v843
      %v847 = vclz %v846
      %v848 = vsub.s32 %v847, 2
      %vm849 = vcmp.gt.s32.totalorder 0, %v848
      %v850 = vsel %vm849, 0, %v848
      %v851 = vsub.s32 32, %v850
      %v852 = vshll.u32 %v843, %v850
      %v853 = vshrl.u32 %v835, %v851
      %v854 = vor.u32 %v852, %v853
      %v855 = vsub.s32 4294967266, %v850
      %v856 = vadd.s32 %v855, 127
      %v857 = vshll.u32 %v856, 23
      %v858 = vor.u32 4788187, %v857
      %v859 = vand.u32 2147483647, %v858
      %v861 = vcvt.s32.f32 %v854
      %v862 = vmul.f32 %v861, %v859
      %v863 = vxor.u32 %v862, 2147483648
      %v864 = vsel %vm781, %v863, %v862
      %v865 = vsub.s32 4, %v841
      %v866 = vsel %vm781, %v865, %v841
      %v867 = vsel %vm780, %v569, %v864
      %v868 = vsel %vm780, 0, %v866
      %v869 = vcosq.f32.pop %v867
      %v870 = vsinq.f32.pop %v867
      %vm871 = vweird.f32 %v569
      %v872 = vadd.s32 %v868, 3
      %v873 = vand.u32 %v872, 3
      %vm874 = vcmp.lt.s32.totalorder %v873, 2
      %vm875 = vcmp.eq.s32.totalorder %v873, 0
      %v876 = vxor.u32 %v870, 2147483648
      %v877 = vsel %vm875, %v869, %v876
      %vm878 = vcmp.eq.s32.totalorder %v873, 2
      %v879 = vxor.u32 %v869, 2147483648
      %v880 = vsel %vm878, %v879, %v870
      %v881 = vsel %vm874, %v877, %v880
      %v882 = vsel %vm871, nan, %v881
      %v883 = vand.u32 2147483647, %v570
      %vm884 = vcmp.le.f32.partialorder %v883, 0.7853982
      %vm885 = vcmp.lt.s32.totalorder %v570, 0
      %v886 = vand.u32 %v570, 2139095040
      %v887 = vshrl.u32 %v886, 23
      %v888 = vsub.s32 %v887, 127
      %v889 = vand.u32 2147483647, %v570
      %v890 = vand.u32 %v889, 8388607
      %v891 = vor.u32 %v890, 8388608
      %v892 = vsub.s32 0, %v891
      %v893 = vadd.s32 %v888, 1
      %vm894 = vcmp.gt.s32.totalorder %v893, 0
      %v895 = vsel %vm894, %v893, 0
      %v896 = vshrl.u32 %v895, 5
      %v897 = vand.u32 %v895, 31
      %v898 = vsub.s32 32, %v897
      %v899 = vshrl.u32 683565275, %v898
      %v900 = vshll.u32 683565275, %v897
      %v901 = vshrl.u32 2475754826, %v898
      %v902 = vor.u32 %v900, %v901
      %v903 = vshll.u32 2475754826, %v897
      %v904 = vshrl.u32 2131351028, %v898
      %v905 = vor.u32 %v903, %v904
      %v906 = vshll.u32 2131351028, %v897
      %v907 = vshrl.u32 2102212464, %v898
      %v908 = vor.u32 %v906, %v907
      %v909 = vshll.u32 2102212464, %v897
      %v910 = vshrl.u32 920167782, %v898
      %v911 = vor.u32 %v909, %v910
      %v912 = vshll.u32 920167782, %v897
      %v913 = vshrl.u32 1326507024, %v898
      %v914 = vor.u32 %v912, %v913
      %vm915 = vcmp.lt.s32.totalorder %v896, 1
      %vm916 = vcmp.lt.s32.totalorder %v896, 2
      %vm917 = vcmp.lt.s32.totalorder %v896, 3
      %vm918 = vcmp.lt.s32.totalorder %v896, 4
      %v919 = vsel %vm915, %v899, %v902
      %v920 = vsel %vm918, %v908, 2102212464
      %v921 = vsel %vm917, %v905, %v920
      %v922 = vsel %vm916, %v919, %v921
      %v923 = vsel %vm915, %v902, %v905
      %v924 = vsel %vm918, %v911, 920167782
      %v925 = vsel %vm917, %v908, %v924
      %v926 = vsel %vm916, %v923, %v925
      %v927 = vsel %vm915, %v905, %v908
      %v928 = vsel %vm918, %v914, 1326507024
      %v929 = vsel %vm917, %v911, %v928
      %v930 = vsel %vm916, %v927, %v929
      %v931 = vshll.u32 %v891, 8
      %v932 = vmul.u32.u64.compose %v931, %v930
      %v933 = vextract.low.u32 %v932
      %v934 = vextract.high.u32 %v932
      %v935 = vmul.u32.u64.compose %v931, %v926
      %v936 = vextract.low.u32 %v935
      %v937 = vextract.high.u32 %v935
      %v938 = vmul.u32 %v931, %v922
      %v939 = vadd.s32 %v934, %v936
      %vm940 = vc.u32 %v934, %v936
      %v941 = vadd.s32 %v937, 1
      %v942 = vsel %vm940, %v941, %v937
      %v943 = vadd.s32 %v938, %v942
      %v944 = vadd.s32 %v943, 536870912
      %v945 = vshrl.u32 %v944, 30
      %v946 = vshll.u32 %v945, 30
      %v947 = vsub.s32 %v943, %v946
      %vm948 = vcmp.lt.s32.totalorder %v947, 0
      %v949 = vsub.s32 0, %v947
      %v950 = vsel %vm948, %v949, %v947
      %v951 = vclz %v950
      %v952 = vsub.s32 %v951, 2
      %vm953 = vcmp.gt.s32.totalorder 0, %v952
      %v954 = vsel %vm953, 0, %v952
      %v955 = vsub.s32 32, %v954
      %v956 = vshll.u32 %v947, %v954
      %v957 = vshrl.u32 %v939, %v955
      %v958 = vor.u32 %v956, %v957
      %v959 = vsub.s32 4294967266, %v954
      %v960 = vadd.s32 %v959, 127
      %v961 = vshll.u32 %v960, 23
      %v962 = vor.u32 4788187, %v961
      %v963 = vand.u32 2147483647, %v962
      %v965 = vcvt.s32.f32 %v958
      %v966 = vmul.f32 %v965, %v963
      %v967 = vxor.u32 %v966, 2147483648
      %v968 = vsel %vm885, %v967, %v966
      %v969 = vsub.s32 4, %v945
      %v970 = vsel %vm885, %v969, %v945
      %v971 = vsel %vm884, %v570, %v968
      %v972 = vsel %vm884, 0, %v970
      %v973 = vcosq.f32.pop %v971
      %v974 = vsinq.f32.pop %v971
      %vm975 = vweird.f32 %v570
      %v976 = vadd.s32 %v972, 3
      %v977 = vand.u32 %v976, 3
      %vm978 = vcmp.lt.s32.totalorder %v977, 2
      %vm979 = vcmp.eq.s32.totalorder %v977, 0
      %v980 = vxor.u32 %v974, 2147483648
      %v981 = vsel %vm979, %v973, %v980
      %vm982 = vcmp.eq.s32.totalorder %v977, 2
      %v983 = vxor.u32 %v973, 2147483648
      %v984 = vsel %vm982, %v983, %v974
      %v985 = vsel %vm978, %v981, %v984
      %v986 = vsel %vm975, nan, %v985
      %v987 = vmul.f32 %v147, 4.0
      %v988 = vmul.f32 %v148, 4.0
      %v989 = vmul.f32 %v149, 4.0
      %v990 = vmul.f32 %v150, 4.0
      %v991 = vand.u32 2147483647, %v987
      %vm992 = vcmp.le.f32.partialorder %v991, 0.7853982
      %vm993 = vcmp.lt.s32.totalorder %v987, 0
      %v994 = vand.u32 %v987, 2139095040
      %v995 = vshrl.u32 %v994, 23
      %v996 = vsub.s32 %v995, 127
      %v997 = vand.u32 2147483647, %v987
      %v998 = vand.u32 %v997, 8388607
      %v999 = vor.u32 %v998, 8388608
      %v1000 = vsub.s32 0, %v999
      %v1001 = vadd.s32 %v996, 1
      %vm1002 = vcmp.gt.s32.totalorder %v1001, 0
      %v1003 = vsel %vm1002, %v1001, 0
      %v1004 = vshrl.u32 %v1003, 5
      %v1005 = vand.u32 %v1003, 31
      %v1006 = vsub.s32 32, %v1005
      %v1007 = vshrl.u32 683565275, %v1006
      %v1008 = vshll.u32 683565275, %v1005
      %v1009 = vshrl.u32 2475754826, %v1006
      %v1010 = vor.u32 %v1008, %v1009
      %v1011 = vshll.u32 2475754826, %v1005
      %v1012 = vshrl.u32 2131351028, %v1006
      %v1013 = vor.u32 %v1011, %v1012
      %v1014 = vshll.u32 2131351028, %v1005
      %v1015 = vshrl.u32 2102212464, %v1006
      %v1016 = vor.u32 %v1014, %v1015
      %v1017 = vshll.u32 2102212464, %v1005
      %v1018 = vshrl.u32 920167782, %v1006
      %v1019 = vor.u32 %v1017, %v1018
      %v1020 = vshll.u32 920167782, %v1005
      %v1021 = vshrl.u32 1326507024, %v1006
      %v1022 = vor.u32 %v1020, %v1021
      %vm1023 = vcmp.lt.s32.totalorder %v1004, 1
      %vm1024 = vcmp.lt.s32.totalorder %v1004, 2
      %vm1025 = vcmp.lt.s32.totalorder %v1004, 3
      %vm1026 = vcmp.lt.s32.totalorder %v1004, 4
      %v1027 = vsel %vm1023, %v1007, %v1010
      %v1028 = vsel %vm1026, %v1016, 2102212464
      %v1029 = vsel %vm1025, %v1013, %v1028
      %v1030 = vsel %vm1024, %v1027, %v1029
      %v1031 = vsel %vm1023, %v1010, %v1013
      %v1032 = vsel %vm1026, %v1019, 920167782
      %v1033 = vsel %vm1025, %v1016, %v1032
      %v1034 = vsel %vm1024, %v1031, %v1033
      %v1035 = vsel %vm1023, %v1013, %v1016
      %v1036 = vsel %vm1026, %v1022, 1326507024
      %v1037 = vsel %vm1025, %v1019, %v1036
      %v1038 = vsel %vm1024, %v1035, %v1037
      %v1039 = vshll.u32 %v999, 8
      %v1040 = vmul.u32.u64.compose %v1039, %v1038
      %v1041 = vextract.low.u32 %v1040
      %v1042 = vextract.high.u32 %v1040
      %v1043 = vmul.u32.u64.compose %v1039, %v1034
      %v1044 = vextract.low.u32 %v1043
      %v1045 = vextract.high.u32 %v1043
      %v1046 = vmul.u32 %v1039, %v1030
      %v1047 = vadd.s32 %v1042, %v1044
      %vm1048 = vc.u32 %v1042, %v1044
      %v1049 = vadd.s32 %v1045, 1
      %v1050 = vsel %vm1048, %v1049, %v1045
      %v1051 = vadd.s32 %v1046, %v1050
      %v1052 = vadd.s32 %v1051, 536870912
      %v1053 = vshrl.u32 %v1052, 30
      %v1054 = vshll.u32 %v1053, 30
      %v1055 = vsub.s32 %v1051, %v1054
      %vm1056 = vcmp.lt.s32.totalorder %v1055, 0
      %v1057 = vsub.s32 0, %v1055
      %v1058 = vsel %vm1056, %v1057, %v1055
      %v1059 = vclz %v1058
      %v1060 = vsub.s32 %v1059, 2
      %vm1061 = vcmp.gt.s32.totalorder 0, %v1060
      %v1062 = vsel %vm1061, 0, %v1060
      %v1063 = vsub.s32 32, %v1062
      %v1064 = vshll.u32 %v1055, %v1062
      %v1065 = vshrl.u32 %v1047, %v1063
      %v1066 = vor.u32 %v1064, %v1065
      %v1067 = vsub.s32 4294967266, %v1062
      %v1068 = vadd.s32 %v1067, 127
      %v1069 = vshll.u32 %v1068, 23
      %v1070 = vor.u32 4788187, %v1069
      %v1071 = vand.u32 2147483647, %v1070
      %v1073 = vcvt.s32.f32 %v1066
      %v1074 = vmul.f32 %v1073, %v1071
      %v1075 = vxor.u32 %v1074, 2147483648
      %v1076 = vsel %vm993, %v1075, %v1074
      %v1077 = vsub.s32 4, %v1053
      %v1078 = vsel %vm993, %v1077, %v1053
      %v1079 = vsel %vm992, %v987, %v1076
      %v1080 = vsel %vm992, 0, %v1078
      %v1081 = vcosq.f32.pop %v1079
      %v1082 = vsinq.f32.pop %v1079
      %vm1083 = vweird.f32 %v987
      %v1084 = vadd.s32 %v1080, 3
      %v1085 = vand.u32 %v1084, 3
      %vm1086 = vcmp.lt.s32.totalorder %v1085, 2
      %vm1087 = vcmp.eq.s32.totalorder %v1085, 0
      %v1088 = vxor.u32 %v1082, 2147483648
      %v1089 = vsel %vm1087, %v1081, %v1088
      %vm1090 = vcmp.eq.s32.totalorder %v1085, 2
      %v1091 = vxor.u32 %v1081, 2147483648
      %v1092 = vsel %vm1090, %v1091, %v1082
      %v1093 = vsel %vm1086, %v1089, %v1092
      %v1094 = vsel %vm1083, nan, %v1093
      %v1095 = vand.u32 2147483647, %v988
      %vm1096 = vcmp.le.f32.partialorder %v1095, 0.7853982
      %vm1097 = vcmp.lt.s32.totalorder %v988, 0
      %v1098 = vand.u32 %v988, 2139095040
      %v1099 = vshrl.u32 %v1098, 23
      %v1100 = vsub.s32 %v1099, 127
      %v1101 = vand.u32 2147483647, %v988
      %v1102 = vand.u32 %v1101, 8388607
      %v1103 = vor.u32 %v1102, 8388608
      %v1104 = vsub.s32 0, %v1103
      %v1105 = vadd.s32 %v1100, 1
      %vm1106 = vcmp.gt.s32.totalorder %v1105, 0
      %v1107 = vsel %vm1106, %v1105, 0
      %v1108 = vshrl.u32 %v1107, 5
      %v1109 = vand.u32 %v1107, 31
      %v1110 = vsub.s32 32, %v1109
      %v1111 = vshrl.u32 683565275, %v1110
      %v1112 = vshll.u32 683565275, %v1109
      %v1113 = vshrl.u32 2475754826, %v1110
      %v1114 = vor.u32 %v1112, %v1113
      %v1115 = vshll.u32 2475754826, %v1109
      %v1116 = vshrl.u32 2131351028, %v1110
      %v1117 = vor.u32 %v1115, %v1116
      %v1118 = vshll.u32 2131351028, %v1109
      %v1119 = vshrl.u32 2102212464, %v1110
      %v1120 = vor.u32 %v1118, %v1119
      %v1121 = vshll.u32 2102212464, %v1109
      %v1122 = vshrl.u32 920167782, %v1110
      %v1123 = vor.u32 %v1121, %v1122
      %v1124 = vshll.u32 920167782, %v1109
      %v1125 = vshrl.u32 1326507024, %v1110
      %v1126 = vor.u32 %v1124, %v1125
      %vm1127 = vcmp.lt.s32.totalorder %v1108, 1
      %vm1128 = vcmp.lt.s32.totalorder %v1108, 2
      %vm1129 = vcmp.lt.s32.totalorder %v1108, 3
      %vm1130 = vcmp.lt.s32.totalorder %v1108, 4
      %v1131 = vsel %vm1127, %v1111, %v1114
      %v1132 = vsel %vm1130, %v1120, 2102212464
      %v1133 = vsel %vm1129, %v1117, %v1132
      %v1134 = vsel %vm1128, %v1131, %v1133
      %v1135 = vsel %vm1127, %v1114, %v1117
      %v1136 = vsel %vm1130, %v1123, 920167782
      %v1137 = vsel %vm1129, %v1120, %v1136
      %v1138 = vsel %vm1128, %v1135, %v1137
      %v1139 = vsel %vm1127, %v1117, %v1120
      %v1140 = vsel %vm1130, %v1126, 1326507024
      %v1141 = vsel %vm1129, %v1123, %v1140
      %v1142 = vsel %vm1128, %v1139, %v1141
      %v1143 = vshll.u32 %v1103, 8
      %v1144 = vmul.u32.u64.compose %v1143, %v1142
      %v1145 = vextract.low.u32 %v1144
      %v1146 = vextract.high.u32 %v1144
      %v1147 = vmul.u32.u64.compose %v1143, %v1138
      %v1148 = vextract.low.u32 %v1147
      %v1149 = vextract.high.u32 %v1147
      %v1150 = vmul.u32 %v1143, %v1134
      %v1151 = vadd.s32 %v1146, %v1148
      %vm1152 = vc.u32 %v1146, %v1148
      %v1153 = vadd.s32 %v1149, 1
      %v1154 = vsel %vm1152, %v1153, %v1149
      %v1155 = vadd.s32 %v1150, %v1154
      %v1156 = vadd.s32 %v1155, 536870912
      %v1157 = vshrl.u32 %v1156, 30
      %v1158 = vshll.u32 %v1157, 30
      %v1159 = vsub.s32 %v1155, %v1158
      %vm1160 = vcmp.lt.s32.totalorder %v1159, 0
      %v1161 = vsub.s32 0, %v1159
      %v1162 = vsel %vm1160, %v1161, %v1159
      %v1163 = vclz %v1162
      %v1164 = vsub.s32 %v1163, 2
      %vm1165 = vcmp.gt.s32.totalorder 0, %v1164
      %v1166 = vsel %vm1165, 0, %v1164
      %v1167 = vsub.s32 32, %v1166
      %v1168 = vshll.u32 %v1159, %v1166
      %v1169 = vshrl.u32 %v1151, %v1167
      %v1170 = vor.u32 %v1168, %v1169
      %v1171 = vsub.s32 4294967266, %v1166
      %v1172 = vadd.s32 %v1171, 127
      %v1173 = vshll.u32 %v1172, 23
      %v1174 = vor.u32 4788187, %v1173
      %v1175 = vand.u32 2147483647, %v1174
      %v1177 = vcvt.s32.f32 %v1170
      %v1178 = vmul.f32 %v1177, %v1175
      %v1179 = vxor.u32 %v1178, 2147483648
      %v1180 = vsel %vm1097, %v1179, %v1178
      %v1181 = vsub.s32 4, %v1157
      %v1182 = vsel %vm1097, %v1181, %v1157
      %v1183 = vsel %vm1096, %v988, %v1180
      %v1184 = vsel %vm1096, 0, %v1182
      %v1185 = vcosq.f32.pop %v1183
      %v1186 = vsinq.f32.pop %v1183
      %vm1187 = vweird.f32 %v988
      %v1188 = vadd.s32 %v1184, 3
      %v1189 = vand.u32 %v1188, 3
      %vm1190 = vcmp.lt.s32.totalorder %v1189, 2
      %vm1191 = vcmp.eq.s32.totalorder %v1189, 0
      %v1192 = vxor.u32 %v1186, 2147483648
      %v1193 = vsel %vm1191, %v1185, %v1192
      %vm1194 = vcmp.eq.s32.totalorder %v1189, 2
      %v1195 = vxor.u32 %v1185, 2147483648
      %v1196 = vsel %vm1194, %v1195, %v1186
      %v1197 = vsel %vm1190, %v1193, %v1196
      %v1198 = vsel %vm1187, nan, %v1197
      %v1199 = vand.u32 2147483647, %v989
      %vm1200 = vcmp.le.f32.partialorder %v1199, 0.7853982
      %vm1201 = vcmp.lt.s32.totalorder %v989, 0
      %v1202 = vand.u32 %v989, 2139095040
      %v1203 = vshrl.u32 %v1202, 23
      %v1204 = vsub.s32 %v1203, 127
      %v1205 = vand.u32 2147483647, %v989
      %v1206 = vand.u32 %v1205, 8388607
      %v1207 = vor.u32 %v1206, 8388608
      %v1208 = vsub.s32 0, %v1207
      %v1209 = vadd.s32 %v1204, 1
      %vm1210 = vcmp.gt.s32.totalorder %v1209, 0
      %v1211 = vsel %vm1210, %v1209, 0
      %v1212 = vshrl.u32 %v1211, 5
      %v1213 = vand.u32 %v1211, 31
      %v1214 = vsub.s32 32, %v1213
      %v1215 = vshrl.u32 683565275, %v1214
      %v1216 = vshll.u32 683565275, %v1213
      %v1217 = vshrl.u32 2475754826, %v1214
      %v1218 = vor.u32 %v1216, %v1217
      %v1219 = vshll.u32 2475754826, %v1213
      %v1220 = vshrl.u32 2131351028, %v1214
      %v1221 = vor.u32 %v1219, %v1220
      %v1222 = vshll.u32 2131351028, %v1213
      %v1223 = vshrl.u32 2102212464, %v1214
      %v1224 = vor.u32 %v1222, %v1223
      %v1225 = vshll.u32 2102212464, %v1213
      %v1226 = vshrl.u32 920167782, %v1214
      %v1227 = vor.u32 %v1225, %v1226
      %v1228 = vshll.u32 920167782, %v1213
      %v1229 = vshrl.u32 1326507024, %v1214
      %v1230 = vor.u32 %v1228, %v1229
      %vm1231 = vcmp.lt.s32.totalorder %v1212, 1
      %vm1232 = vcmp.lt.s32.totalorder %v1212, 2
      %vm1233 = vcmp.lt.s32.totalorder %v1212, 3
      %vm1234 = vcmp.lt.s32.totalorder %v1212, 4
      %v1235 = vsel %vm1231, %v1215, %v1218
      %v1236 = vsel %vm1234, %v1224, 2102212464
      %v1237 = vsel %vm1233, %v1221, %v1236
      %v1238 = vsel %vm1232, %v1235, %v1237
      %v1239 = vsel %vm1231, %v1218, %v1221
      %v1240 = vsel %vm1234, %v1227, 920167782
      %v1241 = vsel %vm1233, %v1224, %v1240
      %v1242 = vsel %vm1232, %v1239, %v1241
      %v1243 = vsel %vm1231, %v1221, %v1224
      %v1244 = vsel %vm1234, %v1230, 1326507024
      %v1245 = vsel %vm1233, %v1227, %v1244
      %v1246 = vsel %vm1232, %v1243, %v1245
      %v1247 = vshll.u32 %v1207, 8
      %v1248 = vmul.u32.u64.compose %v1247, %v1246
      %v1249 = vextract.low.u32 %v1248
      %v1250 = vextract.high.u32 %v1248
      %v1251 = vmul.u32.u64.compose %v1247, %v1242
      %v1252 = vextract.low.u32 %v1251
      %v1253 = vextract.high.u32 %v1251
      %v1254 = vmul.u32 %v1247, %v1238
      %v1255 = vadd.s32 %v1250, %v1252
      %vm1256 = vc.u32 %v1250, %v1252
      %v1257 = vadd.s32 %v1253, 1
      %v1258 = vsel %vm1256, %v1257, %v1253
      %v1259 = vadd.s32 %v1254, %v1258
      %v1260 = vadd.s32 %v1259, 536870912
      %v1261 = vshrl.u32 %v1260, 30
      %v1262 = vshll.u32 %v1261, 30
      %v1263 = vsub.s32 %v1259, %v1262
      %vm1264 = vcmp.lt.s32.totalorder %v1263, 0
      %v1265 = vsub.s32 0, %v1263
      %v1266 = vsel %vm1264, %v1265, %v1263
      %v1267 = vclz %v1266
      %v1268 = vsub.s32 %v1267, 2
      %vm1269 = vcmp.gt.s32.totalorder 0, %v1268
      %v1270 = vsel %vm1269, 0, %v1268
      %v1271 = vsub.s32 32, %v1270
      %v1272 = vshll.u32 %v1263, %v1270
      %v1273 = vshrl.u32 %v1255, %v1271
      %v1274 = vor.u32 %v1272, %v1273
      %v1275 = vsub.s32 4294967266, %v1270
      %v1276 = vadd.s32 %v1275, 127
      %v1277 = vshll.u32 %v1276, 23
      %v1278 = vor.u32 4788187, %v1277
      %v1279 = vand.u32 2147483647, %v1278
      %v1281 = vcvt.s32.f32 %v1274
      %v1282 = vmul.f32 %v1281, %v1279
      %v1283 = vxor.u32 %v1282, 2147483648
      %v1284 = vsel %vm1201, %v1283, %v1282
      %v1285 = vsub.s32 4, %v1261
      %v1286 = vsel %vm1201, %v1285, %v1261
      %v1287 = vsel %vm1200, %v989, %v1284
      %v1288 = vsel %vm1200, 0, %v1286
      %v1289 = vcosq.f32.pop %v1287
      %v1290 = vsinq.f32.pop %v1287
      %vm1291 = vweird.f32 %v989
      %v1292 = vadd.s32 %v1288, 3
      %v1293 = vand.u32 %v1292, 3
      %vm1294 = vcmp.lt.s32.totalorder %v1293, 2
      %vm1295 = vcmp.eq.s32.totalorder %v1293, 0
      %v1296 = vxor.u32 %v1290, 2147483648
      %v1297 = vsel %vm1295, %v1289, %v1296
      %vm1298 = vcmp.eq.s32.totalorder %v1293, 2
      %v1299 = vxor.u32 %v1289, 2147483648
      %v1300 = vsel %vm1298, %v1299, %v1290
      %v1301 = vsel %vm1294, %v1297, %v1300
      %v1302 = vsel %vm1291, nan, %v1301
      %v1303 = vand.u32 2147483647, %v990
      %vm1304 = vcmp.le.f32.partialorder %v1303, 0.7853982
      %vm1305 = vcmp.lt.s32.totalorder %v990, 0
      %v1306 = vand.u32 %v990, 2139095040
      %v1307 = vshrl.u32 %v1306, 23
      %v1308 = vsub.s32 %v1307, 127
      %v1309 = vand.u32 2147483647, %v990
      %v1310 = vand.u32 %v1309, 8388607
      %v1311 = vor.u32 %v1310, 8388608
      %v1312 = vsub.s32 0, %v1311
      %v1313 = vadd.s32 %v1308, 1
      %vm1314 = vcmp.gt.s32.totalorder %v1313, 0
      %v1315 = vsel %vm1314, %v1313, 0
      %v1316 = vshrl.u32 %v1315, 5
      %v1317 = vand.u32 %v1315, 31
      %v1318 = vsub.s32 32, %v1317
      %v1319 = vshrl.u32 683565275, %v1318
      %v1320 = vshll.u32 683565275, %v1317
      %v1321 = vshrl.u32 2475754826, %v1318
      %v1322 = vor.u32 %v1320, %v1321
      %v1323 = vshll.u32 2475754826, %v1317
      %v1324 = vshrl.u32 2131351028, %v1318
      %v1325 = vor.u32 %v1323, %v1324
      %v1326 = vshll.u32 2131351028, %v1317
      %v1327 = vshrl.u32 2102212464, %v1318
      %v1328 = vor.u32 %v1326, %v1327
      %v1329 = vshll.u32 2102212464, %v1317
      %v1330 = vshrl.u32 920167782, %v1318
      %v1331 = vor.u32 %v1329, %v1330
      %v1332 = vshll.u32 920167782, %v1317
      %v1333 = vshrl.u32 1326507024, %v1318
      %v1334 = vor.u32 %v1332, %v1333
      %vm1335 = vcmp.lt.s32.totalorder %v1316, 1
      %vm1336 = vcmp.lt.s32.totalorder %v1316, 2
      %vm1337 = vcmp.lt.s32.totalorder %v1316, 3
      %vm1338 = vcmp.lt.s32.totalorder %v1316, 4
      %v1339 = vsel %vm1335, %v1319, %v1322
      %v1340 = vsel %vm1338, %v1328, 2102212464
      %v1341 = vsel %vm1337, %v1325, %v1340
      %v1342 = vsel %vm1336, %v1339, %v1341
      %v1343 = vsel %vm1335, %v1322, %v1325
      %v1344 = vsel %vm1338, %v1331, 920167782
      %v1345 = vsel %vm1337, %v1328, %v1344
      %v1346 = vsel %vm1336, %v1343, %v1345
      %v1347 = vsel %vm1335, %v1325, %v1328
      %v1348 = vsel %vm1338, %v1334, 1326507024
      %v1349 = vsel %vm1337, %v1331, %v1348
      %v1350 = vsel %vm1336, %v1347, %v1349
      %v1351 = vshll.u32 %v1311, 8
      %v1352 = vmul.u32.u64.compose %v1351, %v1350
      %v1353 = vextract.low.u32 %v1352
      %v1354 = vextract.high.u32 %v1352
      %v1355 = vmul.u32.u64.compose %v1351, %v1346
      %v1356 = vextract.low.u32 %v1355
      %v1357 = vextract.high.u32 %v1355
      %v1358 = vmul.u32 %v1351, %v1342
      %v1359 = vadd.s32 %v1354, %v1356
      %vm1360 = vc.u32 %v1354, %v1356
      %v1361 = vadd.s32 %v1357, 1
      %v1362 = vsel %vm1360, %v1361, %v1357
      %v1363 = vadd.s32 %v1358, %v1362
      %v1364 = vadd.s32 %v1363, 536870912
      %v1365 = vshrl.u32 %v1364, 30
      %v1366 = vshll.u32 %v1365, 30
      %v1367 = vsub.s32 %v1363, %v1366
      %vm1368 = vcmp.lt.s32.totalorder %v1367, 0
      %v1369 = vsub.s32 0, %v1367
      %v1370 = vsel %vm1368, %v1369, %v1367
      %v1371 = vclz %v1370
      %v1372 = vsub.s32 %v1371, 2
      %vm1373 = vcmp.gt.s32.totalorder 0, %v1372
      %v1374 = vsel %vm1373, 0, %v1372
      %v1375 = vsub.s32 32, %v1374
      %v1376 = vshll.u32 %v1367, %v1374
      %v1377 = vshrl.u32 %v1359, %v1375
      %v1378 = vor.u32 %v1376, %v1377
      %v1379 = vsub.s32 4294967266, %v1374
      %v1380 = vadd.s32 %v1379, 127
      %v1381 = vshll.u32 %v1380, 23
      %v1382 = vor.u32 4788187, %v1381
      %v1383 = vand.u32 2147483647, %v1382
      %v1385 = vcvt.s32.f32 %v1378
      %v1386 = vmul.f32 %v1385, %v1383
      %v1387 = vxor.u32 %v1386, 2147483648
      %v1388 = vsel %vm1305, %v1387, %v1386
      %v1389 = vsub.s32 4, %v1365
      %v1390 = vsel %vm1305, %v1389, %v1365
      %v1391 = vsel %vm1304, %v990, %v1388
      %v1392 = vsel %vm1304, 0, %v1390
      %v1393 = vcosq.f32.pop %v1391
      %v1394 = vsinq.f32.pop %v1391
      %vm1395 = vweird.f32 %v990
      %v1396 = vadd.s32 %v1392, 3
      %v1397 = vand.u32 %v1396, 3
      %vm1398 = vcmp.lt.s32.totalorder %v1397, 2
      %vm1399 = vcmp.eq.s32.totalorder %v1397, 0
      %v1400 = vxor.u32 %v1394, 2147483648
      %v1401 = vsel %vm1399, %v1393, %v1400
      %vm1402 = vcmp.eq.s32.totalorder %v1397, 2
      %v1403 = vxor.u32 %v1393, 2147483648
      %v1404 = vsel %vm1402, %v1403, %v1394
      %v1405 = vsel %vm1398, %v1401, %v1404
      %v1406 = vsel %vm1395, nan, %v1405
      %v1407 = vmul.f32 %v147, 8.0
      %v1408 = vmul.f32 %v148, 8.0
      %v1409 = vmul.f32 %v149, 8.0
      %v1410 = vmul.f32 %v150, 8.0
      %v1411 = vand.u32 2147483647, %v1407
      %vm1412 = vcmp.le.f32.partialorder %v1411, 0.7853982
      %vm1413 = vcmp.lt.s32.totalorder %v1407, 0
      %v1414 = vand.u32 %v1407, 2139095040
      %v1415 = vshrl.u32 %v1414, 23
      %v1416 = vsub.s32 %v1415, 127
      %v1417 = vand.u32 2147483647, %v1407
      %v1418 = vand.u32 %v1417, 8388607
      %v1419 = vor.u32 %v1418, 8388608
      %v1420 = vsub.s32 0, %v1419
      %v1421 = vadd.s32 %v1416, 1
      %vm1422 = vcmp.gt.s32.totalorder %v1421, 0
      %v1423 = vsel %vm1422, %v1421, 0
      %v1424 = vshrl.u32 %v1423, 5
      %v1425 = vand.u32 %v1423, 31
      %v1426 = vsub.s32 32, %v1425
      %v1427 = vshrl.u32 683565275, %v1426
      %v1428 = vshll.u32 683565275, %v1425
      %v1429 = vshrl.u32 2475754826, %v1426
      %v1430 = vor.u32 %v1428, %v1429
      %v1431 = vshll.u32 2475754826, %v1425
      %v1432 = vshrl.u32 2131351028, %v1426
      %v1433 = vor.u32 %v1431, %v1432
      %v1434 = vshll.u32 2131351028, %v1425
      %v1435 = vshrl.u32 2102212464, %v1426
      %v1436 = vor.u32 %v1434, %v1435
      %v1437 = vshll.u32 2102212464, %v1425
      %v1438 = vshrl.u32 920167782, %v1426
      %v1439 = vor.u32 %v1437, %v1438
      %v1440 = vshll.u32 920167782, %v1425
      %v1441 = vshrl.u32 1326507024, %v1426
      %v1442 = vor.u32 %v1440, %v1441
      %vm1443 = vcmp.lt.s32.totalorder %v1424, 1
      %vm1444 = vcmp.lt.s32.totalorder %v1424, 2
      %vm1445 = vcmp.lt.s32.totalorder %v1424, 3
      %vm1446 = vcmp.lt.s32.totalorder %v1424, 4
      %v1447 = vsel %vm1443, %v1427, %v1430
      %v1448 = vsel %vm1446, %v1436, 2102212464
      %v1449 = vsel %vm1445, %v1433, %v1448
      %v1450 = vsel %vm1444, %v1447, %v1449
      %v1451 = vsel %vm1443, %v1430, %v1433
      %v1452 = vsel %vm1446, %v1439, 920167782
      %v1453 = vsel %vm1445, %v1436, %v1452
      %v1454 = vsel %vm1444, %v1451, %v1453
      %v1455 = vsel %vm1443, %v1433, %v1436
      %v1456 = vsel %vm1446, %v1442, 1326507024
      %v1457 = vsel %vm1445, %v1439, %v1456
      %v1458 = vsel %vm1444, %v1455, %v1457
      %v1459 = vshll.u32 %v1419, 8
      %v1460 = vmul.u32.u64.compose %v1459, %v1458
      %v1461 = vextract.low.u32 %v1460
      %v1462 = vextract.high.u32 %v1460
      %v1463 = vmul.u32.u64.compose %v1459, %v1454
      %v1464 = vextract.low.u32 %v1463
      %v1465 = vextract.high.u32 %v1463
      %v1466 = vmul.u32 %v1459, %v1450
      %v1467 = vadd.s32 %v1462, %v1464
      %vm1468 = vc.u32 %v1462, %v1464
      %v1469 = vadd.s32 %v1465, 1
      %v1470 = vsel %vm1468, %v1469, %v1465
      %v1471 = vadd.s32 %v1466, %v1470
      %v1472 = vadd.s32 %v1471, 536870912
      %v1473 = vshrl.u32 %v1472, 30
      %v1474 = vshll.u32 %v1473, 30
      %v1475 = vsub.s32 %v1471, %v1474
      %vm1476 = vcmp.lt.s32.totalorder %v1475, 0
      %v1477 = vsub.s32 0, %v1475
      %v1478 = vsel %vm1476, %v1477, %v1475
      %v1479 = vclz %v1478
      %v1480 = vsub.s32 %v1479, 2
      %vm1481 = vcmp.gt.s32.totalorder 0, %v1480
      %v1482 = vsel %vm1481, 0, %v1480
      %v1483 = vsub.s32 32, %v1482
      %v1484 = vshll.u32 %v1475, %v1482
      %v1485 = vshrl.u32 %v1467, %v1483
      %v1486 = vor.u32 %v1484, %v1485
      %v1487 = vsub.s32 4294967266, %v1482
      %v1488 = vadd.s32 %v1487, 127
      %v1489 = vshll.u32 %v1488, 23
      %v1490 = vor.u32 4788187, %v1489
      %v1491 = vand.u32 2147483647, %v1490
      %v1493 = vcvt.s32.f32 %v1486
      %v1494 = vmul.f32 %v1493, %v1491
      %v1495 = vxor.u32 %v1494, 2147483648
      %v1496 = vsel %vm1413, %v1495, %v1494
      %v1497 = vsub.s32 4, %v1473
      %v1498 = vsel %vm1413, %v1497, %v1473
      %v1499 = vsel %vm1412, %v1407, %v1496
      %v1500 = vsel %vm1412, 0, %v1498
      %v1501 = vcosq.f32.pop %v1499
      %v1502 = vsinq.f32.pop %v1499
      %vm1503 = vweird.f32 %v1407
      %v1504 = vadd.s32 %v1500, 3
      %v1505 = vand.u32 %v1504, 3
      %vm1506 = vcmp.lt.s32.totalorder %v1505, 2
      %vm1507 = vcmp.eq.s32.totalorder %v1505, 0
      %v1508 = vxor.u32 %v1502, 2147483648
      %v1509 = vsel %vm1507, %v1501, %v1508
      %vm1510 = vcmp.eq.s32.totalorder %v1505, 2
      %v1511 = vxor.u32 %v1501, 2147483648
      %v1512 = vsel %vm1510, %v1511, %v1502
      %v1513 = vsel %vm1506, %v1509, %v1512
      %v1514 = vsel %vm1503, nan, %v1513
      %v1515 = vand.u32 2147483647, %v1408
      %vm1516 = vcmp.le.f32.partialorder %v1515, 0.7853982
      %vm1517 = vcmp.lt.s32.totalorder %v1408, 0
      %v1518 = vand.u32 %v1408, 2139095040
      %v1519 = vshrl.u32 %v1518, 23
      %v1520 = vsub.s32 %v1519, 127
      %v1521 = vand.u32 2147483647, %v1408
      %v1522 = vand.u32 %v1521, 8388607
      %v1523 = vor.u32 %v1522, 8388608
      %v1524 = vsub.s32 0, %v1523
      %v1525 = vadd.s32 %v1520, 1
      %vm1526 = vcmp.gt.s32.totalorder %v1525, 0
      %v1527 = vsel %vm1526, %v1525, 0
      %v1528 = vshrl.u32 %v1527, 5
      %v1529 = vand.u32 %v1527, 31
      %v1530 = vsub.s32 32, %v1529
      %v1531 = vshrl.u32 683565275, %v1530
      %v1532 = vshll.u32 683565275, %v1529
      %v1533 = vshrl.u32 2475754826, %v1530
      %v1534 = vor.u32 %v1532, %v1533
      %v1535 = vshll.u32 2475754826, %v1529
      %v1536 = vshrl.u32 2131351028, %v1530
      %v1537 = vor.u32 %v1535, %v1536
      %v1538 = vshll.u32 2131351028, %v1529
      %v1539 = vshrl.u32 2102212464, %v1530
      %v1540 = vor.u32 %v1538, %v1539
      %v1541 = vshll.u32 2102212464, %v1529
      %v1542 = vshrl.u32 920167782, %v1530
      %v1543 = vor.u32 %v1541, %v1542
      %v1544 = vshll.u32 920167782, %v1529
      %v1545 = vshrl.u32 1326507024, %v1530
      %v1546 = vor.u32 %v1544, %v1545
      %vm1547 = vcmp.lt.s32.totalorder %v1528, 1
      %vm1548 = vcmp.lt.s32.totalorder %v1528, 2
      %vm1549 = vcmp.lt.s32.totalorder %v1528, 3
      %vm1550 = vcmp.lt.s32.totalorder %v1528, 4
      %v1551 = vsel %vm1547, %v1531, %v1534
      %v1552 = vsel %vm1550, %v1540, 2102212464
      %v1553 = vsel %vm1549, %v1537, %v1552
      %v1554 = vsel %vm1548, %v1551, %v1553
      %v1555 = vsel %vm1547, %v1534, %v1537
      %v1556 = vsel %vm1550, %v1543, 920167782
      %v1557 = vsel %vm1549, %v1540, %v1556
      %v1558 = vsel %vm1548, %v1555, %v1557
      %v1559 = vsel %vm1547, %v1537, %v1540
      %v1560 = vsel %vm1550, %v1546, 1326507024
      %v1561 = vsel %vm1549, %v1543, %v1560
      %v1562 = vsel %vm1548, %v1559, %v1561
      %v1563 = vshll.u32 %v1523, 8
      %v1564 = vmul.u32.u64.compose %v1563, %v1562
      %v1565 = vextract.low.u32 %v1564
      %v1566 = vextract.high.u32 %v1564
      %v1567 = vmul.u32.u64.compose %v1563, %v1558
      %v1568 = vextract.low.u32 %v1567
      %v1569 = vextract.high.u32 %v1567
      %v1570 = vmul.u32 %v1563, %v1554
      %v1571 = vadd.s32 %v1566, %v1568
      %vm1572 = vc.u32 %v1566, %v1568
      %v1573 = vadd.s32 %v1569, 1
      %v1574 = vsel %vm1572, %v1573, %v1569
      %v1575 = vadd.s32 %v1570, %v1574
      %v1576 = vadd.s32 %v1575, 536870912
      %v1577 = vshrl.u32 %v1576, 30
      %v1578 = vshll.u32 %v1577, 30
      %v1579 = vsub.s32 %v1575, %v1578
      %vm1580 = vcmp.lt.s32.totalorder %v1579, 0
      %v1581 = vsub.s32 0, %v1579
      %v1582 = vsel %vm1580, %v1581, %v1579
      %v1583 = vclz %v1582
      %v1584 = vsub.s32 %v1583, 2
      %vm1585 = vcmp.gt.s32.totalorder 0, %v1584
      %v1586 = vsel %vm1585, 0, %v1584
      %v1587 = vsub.s32 32, %v1586
      %v1588 = vshll.u32 %v1579, %v1586
      %v1589 = vshrl.u32 %v1571, %v1587
      %v1590 = vor.u32 %v1588, %v1589
      %v1591 = vsub.s32 4294967266, %v1586
      %v1592 = vadd.s32 %v1591, 127
      %v1593 = vshll.u32 %v1592, 23
      %v1594 = vor.u32 4788187, %v1593
      %v1595 = vand.u32 2147483647, %v1594
      %v1597 = vcvt.s32.f32 %v1590
      %v1598 = vmul.f32 %v1597, %v1595
      %v1599 = vxor.u32 %v1598, 2147483648
      %v1600 = vsel %vm1517, %v1599, %v1598
      %v1601 = vsub.s32 4, %v1577
      %v1602 = vsel %vm1517, %v1601, %v1577
      %v1603 = vsel %vm1516, %v1408, %v1600
      %v1604 = vsel %vm1516, 0, %v1602
      %v1605 = vcosq.f32.pop %v1603
      %v1606 = vsinq.f32.pop %v1603
      %vm1607 = vweird.f32 %v1408
      %v1608 = vadd.s32 %v1604, 3
      %v1609 = vand.u32 %v1608, 3
      %vm1610 = vcmp.lt.s32.totalorder %v1609, 2
      %vm1611 = vcmp.eq.s32.totalorder %v1609, 0
      %v1612 = vxor.u32 %v1606, 2147483648
      %v1613 = vsel %vm1611, %v1605, %v1612
      %vm1614 = vcmp.eq.s32.totalorder %v1609, 2
      %v1615 = vxor.u32 %v1605, 2147483648
      %v1616 = vsel %vm1614, %v1615, %v1606
      %v1617 = vsel %vm1610, %v1613, %v1616
      %v1618 = vsel %vm1607, nan, %v1617
      %v1619 = vand.u32 2147483647, %v1409
      %vm1620 = vcmp.le.f32.partialorder %v1619, 0.7853982
      %vm1621 = vcmp.lt.s32.totalorder %v1409, 0
      %v1622 = vand.u32 %v1409, 2139095040
      %v1623 = vshrl.u32 %v1622, 23
      %v1624 = vsub.s32 %v1623, 127
      %v1625 = vand.u32 2147483647, %v1409
      %v1626 = vand.u32 %v1625, 8388607
      %v1627 = vor.u32 %v1626, 8388608
      %v1628 = vsub.s32 0, %v1627
      %v1629 = vadd.s32 %v1624, 1
      %vm1630 = vcmp.gt.s32.totalorder %v1629, 0
      %v1631 = vsel %vm1630, %v1629, 0
      %v1632 = vshrl.u32 %v1631, 5
      %v1633 = vand.u32 %v1631, 31
      %v1634 = vsub.s32 32, %v1633
      %v1635 = vshrl.u32 683565275, %v1634
      %v1636 = vshll.u32 683565275, %v1633
      %v1637 = vshrl.u32 2475754826, %v1634
      %v1638 = vor.u32 %v1636, %v1637
      %v1639 = vshll.u32 2475754826, %v1633
      %v1640 = vshrl.u32 2131351028, %v1634
      %v1641 = vor.u32 %v1639, %v1640
      %v1642 = vshll.u32 2131351028, %v1633
      %v1643 = vshrl.u32 2102212464, %v1634
      %v1644 = vor.u32 %v1642, %v1643
      %v1645 = vshll.u32 2102212464, %v1633
      %v1646 = vshrl.u32 920167782, %v1634
      %v1647 = vor.u32 %v1645, %v1646
      %v1648 = vshll.u32 920167782, %v1633
      %v1649 = vshrl.u32 1326507024, %v1634
      %v1650 = vor.u32 %v1648, %v1649
      %vm1651 = vcmp.lt.s32.totalorder %v1632, 1
      %vm1652 = vcmp.lt.s32.totalorder %v1632, 2
      %vm1653 = vcmp.lt.s32.totalorder %v1632, 3
      %vm1654 = vcmp.lt.s32.totalorder %v1632, 4
      %v1655 = vsel %vm1651, %v1635, %v1638
      %v1656 = vsel %vm1654, %v1644, 2102212464
      %v1657 = vsel %vm1653, %v1641, %v1656
      %v1658 = vsel %vm1652, %v1655, %v1657
      %v1659 = vsel %vm1651, %v1638, %v1641
      %v1660 = vsel %vm1654, %v1647, 920167782
      %v1661 = vsel %vm1653, %v1644, %v1660
      %v1662 = vsel %vm1652, %v1659, %v1661
      %v1663 = vsel %vm1651, %v1641, %v1644
      %v1664 = vsel %vm1654, %v1650, 1326507024
      %v1665 = vsel %vm1653, %v1647, %v1664
      %v1666 = vsel %vm1652, %v1663, %v1665
      %v1667 = vshll.u32 %v1627, 8
      %v1668 = vmul.u32.u64.compose %v1667, %v1666
      %v1669 = vextract.low.u32 %v1668
      %v1670 = vextract.high.u32 %v1668
      %v1671 = vmul.u32.u64.compose %v1667, %v1662
      %v1672 = vextract.low.u32 %v1671
      %v1673 = vextract.high.u32 %v1671
      %v1674 = vmul.u32 %v1667, %v1658
      %v1675 = vadd.s32 %v1670, %v1672
      %vm1676 = vc.u32 %v1670, %v1672
      %v1677 = vadd.s32 %v1673, 1
      %v1678 = vsel %vm1676, %v1677, %v1673
      %v1679 = vadd.s32 %v1674, %v1678
      %v1680 = vadd.s32 %v1679, 536870912
      %v1681 = vshrl.u32 %v1680, 30
      %v1682 = vshll.u32 %v1681, 30
      %v1683 = vsub.s32 %v1679, %v1682
      %vm1684 = vcmp.lt.s32.totalorder %v1683, 0
      %v1685 = vsub.s32 0, %v1683
      %v1686 = vsel %vm1684, %v1685, %v1683
      %v1687 = vclz %v1686
      %v1688 = vsub.s32 %v1687, 2
      %vm1689 = vcmp.gt.s32.totalorder 0, %v1688
      %v1690 = vsel %vm1689, 0, %v1688
      %v1691 = vsub.s32 32, %v1690
      %v1692 = vshll.u32 %v1683, %v1690
      %v1693 = vshrl.u32 %v1675, %v1691
      %v1694 = vor.u32 %v1692, %v1693
      %v1695 = vsub.s32 4294967266, %v1690
      %v1696 = vadd.s32 %v1695, 127
      %v1697 = vshll.u32 %v1696, 23
      %v1698 = vor.u32 4788187, %v1697
      %v1699 = vand.u32 2147483647, %v1698
      %v1701 = vcvt.s32.f32 %v1694
      %v1702 = vmul.f32 %v1701, %v1699
      %v1703 = vxor.u32 %v1702, 2147483648
      %v1704 = vsel %vm1621, %v1703, %v1702
      %v1705 = vsub.s32 4, %v1681
      %v1706 = vsel %vm1621, %v1705, %v1681
      %v1707 = vsel %vm1620, %v1409, %v1704
      %v1708 = vsel %vm1620, 0, %v1706
      %v1709 = vcosq.f32.pop %v1707
      %v1710 = vsinq.f32.pop %v1707
      %vm1711 = vweird.f32 %v1409
      %v1712 = vadd.s32 %v1708, 3
      %v1713 = vand.u32 %v1712, 3
      %vm1714 = vcmp.lt.s32.totalorder %v1713, 2
      %vm1715 = vcmp.eq.s32.totalorder %v1713, 0
      %v1716 = vxor.u32 %v1710, 2147483648
      %v1717 = vsel %vm1715, %v1709, %v1716
      %vm1718 = vcmp.eq.s32.totalorder %v1713, 2
      %v1719 = vxor.u32 %v1709, 2147483648
      %v1720 = vsel %vm1718, %v1719, %v1710
      %v1721 = vsel %vm1714, %v1717, %v1720
      %v1722 = vsel %vm1711, nan, %v1721
      %v1723 = vand.u32 2147483647, %v1410
      %vm1724 = vcmp.le.f32.partialorder %v1723, 0.7853982
      %vm1725 = vcmp.lt.s32.totalorder %v1410, 0
      %v1726 = vand.u32 %v1410, 2139095040
      %v1727 = vshrl.u32 %v1726, 23
      %v1728 = vsub.s32 %v1727, 127
      %v1729 = vand.u32 2147483647, %v1410
      %v1730 = vand.u32 %v1729, 8388607
      %v1731 = vor.u32 %v1730, 8388608
      %v1732 = vsub.s32 0, %v1731
      %v1733 = vadd.s32 %v1728, 1
      %vm1734 = vcmp.gt.s32.totalorder %v1733, 0
      %v1735 = vsel %vm1734, %v1733, 0
      %v1736 = vshrl.u32 %v1735, 5
      %v1737 = vand.u32 %v1735, 31
      %v1738 = vsub.s32 32, %v1737
      %v1739 = vshrl.u32 683565275, %v1738
      %v1740 = vshll.u32 683565275, %v1737
      %v1741 = vshrl.u32 2475754826, %v1738
      %v1742 = vor.u32 %v1740, %v1741
      %v1743 = vshll.u32 2475754826, %v1737
      %v1744 = vshrl.u32 2131351028, %v1738
      %v1745 = vor.u32 %v1743, %v1744
      %v1746 = vshll.u32 2131351028, %v1737
      %v1747 = vshrl.u32 2102212464, %v1738
      %v1748 = vor.u32 %v1746, %v1747
      %v1749 = vshll.u32 2102212464, %v1737
      %v1750 = vshrl.u32 920167782, %v1738
      %v1751 = vor.u32 %v1749, %v1750
      %v1752 = vshll.u32 920167782, %v1737
      %v1753 = vshrl.u32 1326507024, %v1738
      %v1754 = vor.u32 %v1752, %v1753
      %vm1755 = vcmp.lt.s32.totalorder %v1736, 1
      %vm1756 = vcmp.lt.s32.totalorder %v1736, 2
      %vm1757 = vcmp.lt.s32.totalorder %v1736, 3
      %vm1758 = vcmp.lt.s32.totalorder %v1736, 4
      %v1759 = vsel %vm1755, %v1739, %v1742
      %v1760 = vsel %vm1758, %v1748, 2102212464
      %v1761 = vsel %vm1757, %v1745, %v1760
      %v1762 = vsel %vm1756, %v1759, %v1761
      %v1763 = vsel %vm1755, %v1742, %v1745
      %v1764 = vsel %vm1758, %v1751, 920167782
      %v1765 = vsel %vm1757, %v1748, %v1764
      %v1766 = vsel %vm1756, %v1763, %v1765
      %v1767 = vsel %vm1755, %v1745, %v1748
      %v1768 = vsel %vm1758, %v1754, 1326507024
      %v1769 = vsel %vm1757, %v1751, %v1768
      %v1770 = vsel %vm1756, %v1767, %v1769
      %v1771 = vshll.u32 %v1731, 8
      %v1772 = vmul.u32.u64.compose %v1771, %v1770
      %v1773 = vextract.low.u32 %v1772
      %v1774 = vextract.high.u32 %v1772
      %v1775 = vmul.u32.u64.compose %v1771, %v1766
      %v1776 = vextract.low.u32 %v1775
      %v1777 = vextract.high.u32 %v1775
      %v1778 = vmul.u32 %v1771, %v1762
      %v1779 = vadd.s32 %v1774, %v1776
      %vm1780 = vc.u32 %v1774, %v1776
      %v1781 = vadd.s32 %v1777, 1
      %v1782 = vsel %vm1780, %v1781, %v1777
      %v1783 = vadd.s32 %v1778, %v1782
      %v1784 = vadd.s32 %v1783, 536870912
      %v1785 = vshrl.u32 %v1784, 30
      %v1786 = vshll.u32 %v1785, 30
      %v1787 = vsub.s32 %v1783, %v1786
      %vm1788 = vcmp.lt.s32.totalorder %v1787, 0
      %v1789 = vsub.s32 0, %v1787
      %v1790 = vsel %vm1788, %v1789, %v1787
      %v1791 = vclz %v1790
      %v1792 = vsub.s32 %v1791, 2
      %vm1793 = vcmp.gt.s32.totalorder 0, %v1792
      %v1794 = vsel %vm1793, 0, %v1792
      %v1795 = vsub.s32 32, %v1794
      %v1796 = vshll.u32 %v1787, %v1794
      %v1797 = vshrl.u32 %v1779, %v1795
      %v1798 = vor.u32 %v1796, %v1797
      %v1799 = vsub.s32 4294967266, %v1794
      %v1800 = vadd.s32 %v1799, 127
      %v1801 = vshll.u32 %v1800, 23
      %v1802 = vor.u32 4788187, %v1801
      %v1803 = vand.u32 2147483647, %v1802
      %v1805 = vcvt.s32.f32 %v1798
      %v1806 = vmul.f32 %v1805, %v1803
      %v1807 = vxor.u32 %v1806, 2147483648
      %v1808 = vsel %vm1725, %v1807, %v1806
      %v1809 = vsub.s32 4, %v1785
      %v1810 = vsel %vm1725, %v1809, %v1785
      %v1811 = vsel %vm1724, %v1410, %v1808
      %v1812 = vsel %vm1724, 0, %v1810
      %v1813 = vcosq.f32.pop %v1811
      %v1814 = vsinq.f32.pop %v1811
      %vm1815 = vweird.f32 %v1410
      %v1816 = vadd.s32 %v1812, 3
      %v1817 = vand.u32 %v1816, 3
      %vm1818 = vcmp.lt.s32.totalorder %v1817, 2
      %vm1819 = vcmp.eq.s32.totalorder %v1817, 0
      %v1820 = vxor.u32 %v1814, 2147483648
      %v1821 = vsel %vm1819, %v1813, %v1820
      %vm1822 = vcmp.eq.s32.totalorder %v1817, 2
      %v1823 = vxor.u32 %v1813, 2147483648
      %v1824 = vsel %vm1822, %v1823, %v1814
      %v1825 = vsel %vm1818, %v1821, %v1824
      %v1826 = vsel %vm1815, nan, %v1825
      %v1827 = vand.u32 2147483647, %v147
      %vm1828 = vcmp.le.f32.partialorder %v1827, 0.7853982
      %vm1829 = vcmp.lt.s32.totalorder %v147, 0
      %v1830 = vand.u32 %v147, 2139095040
      %v1831 = vshrl.u32 %v1830, 23
      %v1832 = vsub.s32 %v1831, 127
      %v1833 = vand.u32 2147483647, %v147
      %v1834 = vand.u32 %v1833, 8388607
      %v1835 = vor.u32 %v1834, 8388608
      %v1836 = vsub.s32 0, %v1835
      %v1837 = vadd.s32 %v1832, 1
      %vm1838 = vcmp.gt.s32.totalorder %v1837, 0
      %v1839 = vsel %vm1838, %v1837, 0
      %v1840 = vshrl.u32 %v1839, 5
      %v1841 = vand.u32 %v1839, 31
      %v1842 = vsub.s32 32, %v1841
      %v1843 = vshrl.u32 683565275, %v1842
      %v1844 = vshll.u32 683565275, %v1841
      %v1845 = vshrl.u32 2475754826, %v1842
      %v1846 = vor.u32 %v1844, %v1845
      %v1847 = vshll.u32 2475754826, %v1841
      %v1848 = vshrl.u32 2131351028, %v1842
      %v1849 = vor.u32 %v1847, %v1848
      %v1850 = vshll.u32 2131351028, %v1841
      %v1851 = vshrl.u32 2102212464, %v1842
      %v1852 = vor.u32 %v1850, %v1851
      %v1853 = vshll.u32 2102212464, %v1841
      %v1854 = vshrl.u32 920167782, %v1842
      %v1855 = vor.u32 %v1853, %v1854
      %v1856 = vshll.u32 920167782, %v1841
      %v1857 = vshrl.u32 1326507024, %v1842
      %v1858 = vor.u32 %v1856, %v1857
      %vm1859 = vcmp.lt.s32.totalorder %v1840, 1
      %vm1860 = vcmp.lt.s32.totalorder %v1840, 2
      %vm1861 = vcmp.lt.s32.totalorder %v1840, 3
      %vm1862 = vcmp.lt.s32.totalorder %v1840, 4
      %v1863 = vsel %vm1859, %v1843, %v1846
      %v1864 = vsel %vm1862, %v1852, 2102212464
      %v1865 = vsel %vm1861, %v1849, %v1864
      %v1866 = vsel %vm1860, %v1863, %v1865
      %v1867 = vsel %vm1859, %v1846, %v1849
      %v1868 = vsel %vm1862, %v1855, 920167782
      %v1869 = vsel %vm1861, %v1852, %v1868
      %v1870 = vsel %vm1860, %v1867, %v1869
      %v1871 = vsel %vm1859, %v1849, %v1852
      %v1872 = vsel %vm1862, %v1858, 1326507024
      %v1873 = vsel %vm1861, %v1855, %v1872
      %v1874 = vsel %vm1860, %v1871, %v1873
      %v1875 = vshll.u32 %v1835, 8
      %v1876 = vmul.u32.u64.compose %v1875, %v1874
      %v1877 = vextract.low.u32 %v1876
      %v1878 = vextract.high.u32 %v1876
      %v1879 = vmul.u32.u64.compose %v1875, %v1870
      %v1880 = vextract.low.u32 %v1879
      %v1881 = vextract.high.u32 %v1879
      %v1882 = vmul.u32 %v1875, %v1866
      %v1883 = vadd.s32 %v1878, %v1880
      %vm1884 = vc.u32 %v1878, %v1880
      %v1885 = vadd.s32 %v1881, 1
      %v1886 = vsel %vm1884, %v1885, %v1881
      %v1887 = vadd.s32 %v1882, %v1886
      %v1888 = vadd.s32 %v1887, 536870912
      %v1889 = vshrl.u32 %v1888, 30
      %v1890 = vshll.u32 %v1889, 30
      %v1891 = vsub.s32 %v1887, %v1890
      %vm1892 = vcmp.lt.s32.totalorder %v1891, 0
      %v1893 = vsub.s32 0, %v1891
      %v1894 = vsel %vm1892, %v1893, %v1891
      %v1895 = vclz %v1894
      %v1896 = vsub.s32 %v1895, 2
      %vm1897 = vcmp.gt.s32.totalorder 0, %v1896
      %v1898 = vsel %vm1897, 0, %v1896
      %v1899 = vsub.s32 32, %v1898
      %v1900 = vshll.u32 %v1891, %v1898
      %v1901 = vshrl.u32 %v1883, %v1899
      %v1902 = vor.u32 %v1900, %v1901
      %v1903 = vsub.s32 4294967266, %v1898
      %v1904 = vadd.s32 %v1903, 127
      %v1905 = vshll.u32 %v1904, 23
      %v1906 = vor.u32 4788187, %v1905
      %v1907 = vand.u32 2147483647, %v1906
      %v1909 = vcvt.s32.f32 %v1902
      %v1910 = vmul.f32 %v1909, %v1907
      %v1911 = vxor.u32 %v1910, 2147483648
      %v1912 = vsel %vm1829, %v1911, %v1910
      %v1913 = vsub.s32 4, %v1889
      %v1914 = vsel %vm1829, %v1913, %v1889
      %v1915 = vsel %vm1828, %v147, %v1912
      %v1916 = vsel %vm1828, 0, %v1914
      %v1917 = vcosq.f32.pop %v1915
      %v1918 = vsinq.f32.pop %v1915
      %vm1919 = vweird.f32 %v147
      %v1920 = vand.u32 %v1916, 3
      %vm1921 = vcmp.lt.s32.totalorder %v1920, 2
      %vm1922 = vcmp.eq.s32.totalorder %v1920, 0
      %v1923 = vxor.u32 %v1918, 2147483648
      %v1924 = vsel %vm1922, %v1917, %v1923
      %vm1925 = vcmp.eq.s32.totalorder %v1920, 2
      %v1926 = vxor.u32 %v1917, 2147483648
      %v1927 = vsel %vm1925, %v1926, %v1918
      %v1928 = vsel %vm1921, %v1924, %v1927
      %v1929 = vsel %vm1919, nan, %v1928
      %v1930 = vand.u32 2147483647, %v148
      %vm1931 = vcmp.le.f32.partialorder %v1930, 0.7853982
      %vm1932 = vcmp.lt.s32.totalorder %v148, 0
      %v1933 = vand.u32 %v148, 2139095040
      %v1934 = vshrl.u32 %v1933, 23
      %v1935 = vsub.s32 %v1934, 127
      %v1936 = vand.u32 2147483647, %v148
      %v1937 = vand.u32 %v1936, 8388607
      %v1938 = vor.u32 %v1937, 8388608
      %v1939 = vsub.s32 0, %v1938
      %v1940 = vadd.s32 %v1935, 1
      %vm1941 = vcmp.gt.s32.totalorder %v1940, 0
      %v1942 = vsel %vm1941, %v1940, 0
      %v1943 = vshrl.u32 %v1942, 5
      %v1944 = vand.u32 %v1942, 31
      %v1945 = vsub.s32 32, %v1944
      %v1946 = vshrl.u32 683565275, %v1945
      %v1947 = vshll.u32 683565275, %v1944
      %v1948 = vshrl.u32 2475754826, %v1945
      %v1949 = vor.u32 %v1947, %v1948
      %v1950 = vshll.u32 2475754826, %v1944
      %v1951 = vshrl.u32 2131351028, %v1945
      %v1952 = vor.u32 %v1950, %v1951
      %v1953 = vshll.u32 2131351028, %v1944
      %v1954 = vshrl.u32 2102212464, %v1945
      %v1955 = vor.u32 %v1953, %v1954
      %v1956 = vshll.u32 2102212464, %v1944
      %v1957 = vshrl.u32 920167782, %v1945
      %v1958 = vor.u32 %v1956, %v1957
      %v1959 = vshll.u32 920167782, %v1944
      %v1960 = vshrl.u32 1326507024, %v1945
      %v1961 = vor.u32 %v1959, %v1960
      %vm1962 = vcmp.lt.s32.totalorder %v1943, 1
      %vm1963 = vcmp.lt.s32.totalorder %v1943, 2
      %vm1964 = vcmp.lt.s32.totalorder %v1943, 3
      %vm1965 = vcmp.lt.s32.totalorder %v1943, 4
      %v1966 = vsel %vm1962, %v1946, %v1949
      %v1967 = vsel %vm1965, %v1955, 2102212464
      %v1968 = vsel %vm1964, %v1952, %v1967
      %v1969 = vsel %vm1963, %v1966, %v1968
      %v1970 = vsel %vm1962, %v1949, %v1952
      %v1971 = vsel %vm1965, %v1958, 920167782
      %v1972 = vsel %vm1964, %v1955, %v1971
      %v1973 = vsel %vm1963, %v1970, %v1972
      %v1974 = vsel %vm1962, %v1952, %v1955
      %v1975 = vsel %vm1965, %v1961, 1326507024
      %v1976 = vsel %vm1964, %v1958, %v1975
      %v1977 = vsel %vm1963, %v1974, %v1976
      %v1978 = vshll.u32 %v1938, 8
      %v1979 = vmul.u32.u64.compose %v1978, %v1977
      %v1980 = vextract.low.u32 %v1979
      %v1981 = vextract.high.u32 %v1979
      %v1982 = vmul.u32.u64.compose %v1978, %v1973
      %v1983 = vextract.low.u32 %v1982
      %v1984 = vextract.high.u32 %v1982
      %v1985 = vmul.u32 %v1978, %v1969
      %v1986 = vadd.s32 %v1981, %v1983
      %vm1987 = vc.u32 %v1981, %v1983
      %v1988 = vadd.s32 %v1984, 1
      %v1989 = vsel %vm1987, %v1988, %v1984
      %v1990 = vadd.s32 %v1985, %v1989
      %v1991 = vadd.s32 %v1990, 536870912
      %v1992 = vshrl.u32 %v1991, 30
      %v1993 = vshll.u32 %v1992, 30
      %v1994 = vsub.s32 %v1990, %v1993
      %vm1995 = vcmp.lt.s32.totalorder %v1994, 0
      %v1996 = vsub.s32 0, %v1994
      %v1997 = vsel %vm1995, %v1996, %v1994
      %v1998 = vclz %v1997
      %v1999 = vsub.s32 %v1998, 2
      %vm2000 = vcmp.gt.s32.totalorder 0, %v1999
      %v2001 = vsel %vm2000, 0, %v1999
      %v2002 = vsub.s32 32, %v2001
      %v2003 = vshll.u32 %v1994, %v2001
      %v2004 = vshrl.u32 %v1986, %v2002
      %v2005 = vor.u32 %v2003, %v2004
      %v2006 = vsub.s32 4294967266, %v2001
      %v2007 = vadd.s32 %v2006, 127
      %v2008 = vshll.u32 %v2007, 23
      %v2009 = vor.u32 4788187, %v2008
      %v2010 = vand.u32 2147483647, %v2009
      %v2012 = vcvt.s32.f32 %v2005
      %v2013 = vmul.f32 %v2012, %v2010
      %v2014 = vxor.u32 %v2013, 2147483648
      %v2015 = vsel %vm1932, %v2014, %v2013
      %v2016 = vsub.s32 4, %v1992
      %v2017 = vsel %vm1932, %v2016, %v1992
      %v2018 = vsel %vm1931, %v148, %v2015
      %v2019 = vsel %vm1931, 0, %v2017
      %v2020 = vcosq.f32.pop %v2018
      %v2021 = vsinq.f32.pop %v2018
      %vm2022 = vweird.f32 %v148
      %v2023 = vand.u32 %v2019, 3
      %vm2024 = vcmp.lt.s32.totalorder %v2023, 2
      %vm2025 = vcmp.eq.s32.totalorder %v2023, 0
      %v2026 = vxor.u32 %v2021, 2147483648
      %v2027 = vsel %vm2025, %v2020, %v2026
      %vm2028 = vcmp.eq.s32.totalorder %v2023, 2
      %v2029 = vxor.u32 %v2020, 2147483648
      %v2030 = vsel %vm2028, %v2029, %v2021
      %v2031 = vsel %vm2024, %v2027, %v2030
      %v2032 = vsel %vm2022, nan, %v2031
      %v2033 = vand.u32 2147483647, %v149
      %vm2034 = vcmp.le.f32.partialorder %v2033, 0.7853982
      %vm2035 = vcmp.lt.s32.totalorder %v149, 0
      %v2036 = vand.u32 %v149, 2139095040
      %v2037 = vshrl.u32 %v2036, 23
      %v2038 = vsub.s32 %v2037, 127
      %v2039 = vand.u32 2147483647, %v149
      %v2040 = vand.u32 %v2039, 8388607
      %v2041 = vor.u32 %v2040, 8388608
      %v2042 = vsub.s32 0, %v2041
      %v2043 = vadd.s32 %v2038, 1
      %vm2044 = vcmp.gt.s32.totalorder %v2043, 0
      %v2045 = vsel %vm2044, %v2043, 0
      %v2046 = vshrl.u32 %v2045, 5
      %v2047 = vand.u32 %v2045, 31
      %v2048 = vsub.s32 32, %v2047
      %v2049 = vshrl.u32 683565275, %v2048
      %v2050 = vshll.u32 683565275, %v2047
      %v2051 = vshrl.u32 2475754826, %v2048
      %v2052 = vor.u32 %v2050, %v2051
      %v2053 = vshll.u32 2475754826, %v2047
      %v2054 = vshrl.u32 2131351028, %v2048
      %v2055 = vor.u32 %v2053, %v2054
      %v2056 = vshll.u32 2131351028, %v2047
      %v2057 = vshrl.u32 2102212464, %v2048
      %v2058 = vor.u32 %v2056, %v2057
      %v2059 = vshll.u32 2102212464, %v2047
      %v2060 = vshrl.u32 920167782, %v2048
      %v2061 = vor.u32 %v2059, %v2060
      %v2062 = vshll.u32 920167782, %v2047
      %v2063 = vshrl.u32 1326507024, %v2048
      %v2064 = vor.u32 %v2062, %v2063
      %vm2065 = vcmp.lt.s32.totalorder %v2046, 1
      %vm2066 = vcmp.lt.s32.totalorder %v2046, 2
      %vm2067 = vcmp.lt.s32.totalorder %v2046, 3
      %vm2068 = vcmp.lt.s32.totalorder %v2046, 4
      %v2069 = vsel %vm2065, %v2049, %v2052
      %v2070 = vsel %vm2068, %v2058, 2102212464
      %v2071 = vsel %vm2067, %v2055, %v2070
      %v2072 = vsel %vm2066, %v2069, %v2071
      %v2073 = vsel %vm2065, %v2052, %v2055
      %v2074 = vsel %vm2068, %v2061, 920167782
      %v2075 = vsel %vm2067, %v2058, %v2074
      %v2076 = vsel %vm2066, %v2073, %v2075
      %v2077 = vsel %vm2065, %v2055, %v2058
      %v2078 = vsel %vm2068, %v2064, 1326507024
      %v2079 = vsel %vm2067, %v2061, %v2078
      %v2080 = vsel %vm2066, %v2077, %v2079
      %v2081 = vshll.u32 %v2041, 8
      %v2082 = vmul.u32.u64.compose %v2081, %v2080
      %v2083 = vextract.low.u32 %v2082
      %v2084 = vextract.high.u32 %v2082
      %v2085 = vmul.u32.u64.compose %v2081, %v2076
      %v2086 = vextract.low.u32 %v2085
      %v2087 = vextract.high.u32 %v2085
      %v2088 = vmul.u32 %v2081, %v2072
      %v2089 = vadd.s32 %v2084, %v2086
      %vm2090 = vc.u32 %v2084, %v2086
      %v2091 = vadd.s32 %v2087, 1
      %v2092 = vsel %vm2090, %v2091, %v2087
      %v2093 = vadd.s32 %v2088, %v2092
      %v2094 = vadd.s32 %v2093, 536870912
      %v2095 = vshrl.u32 %v2094, 30
      %v2096 = vshll.u32 %v2095, 30
      %v2097 = vsub.s32 %v2093, %v2096
      %vm2098 = vcmp.lt.s32.totalorder %v2097, 0
      %v2099 = vsub.s32 0, %v2097
      %v2100 = vsel %vm2098, %v2099, %v2097
      %v2101 = vclz %v2100
      %v2102 = vsub.s32 %v2101, 2
      %vm2103 = vcmp.gt.s32.totalorder 0, %v2102
      %v2104 = vsel %vm2103, 0, %v2102
      %v2105 = vsub.s32 32, %v2104
      %v2106 = vshll.u32 %v2097, %v2104
      %v2107 = vshrl.u32 %v2089, %v2105
      %v2108 = vor.u32 %v2106, %v2107
      %v2109 = vsub.s32 4294967266, %v2104
      %v2110 = vadd.s32 %v2109, 127
      %v2111 = vshll.u32 %v2110, 23
      %v2112 = vor.u32 4788187, %v2111
      %v2113 = vand.u32 2147483647, %v2112
      %v2115 = vcvt.s32.f32 %v2108
      %v2116 = vmul.f32 %v2115, %v2113
      %v2117 = vxor.u32 %v2116, 2147483648
      %v2118 = vsel %vm2035, %v2117, %v2116
      %v2119 = vsub.s32 4, %v2095
      %v2120 = vsel %vm2035, %v2119, %v2095
      %v2121 = vsel %vm2034, %v149, %v2118
      %v2122 = vsel %vm2034, 0, %v2120
      %v2123 = vcosq.f32.pop %v2121
      %v2124 = vsinq.f32.pop %v2121
      %vm2125 = vweird.f32 %v149
      %v2126 = vand.u32 %v2122, 3
      %vm2127 = vcmp.lt.s32.totalorder %v2126, 2
      %vm2128 = vcmp.eq.s32.totalorder %v2126, 0
      %v2129 = vxor.u32 %v2124, 2147483648
      %v2130 = vsel %vm2128, %v2123, %v2129
      %vm2131 = vcmp.eq.s32.totalorder %v2126, 2
      %v2132 = vxor.u32 %v2123, 2147483648
      %v2133 = vsel %vm2131, %v2132, %v2124
      %v2134 = vsel %vm2127, %v2130, %v2133
      %v2135 = vsel %vm2125, nan, %v2134
      %v2136 = vand.u32 2147483647, %v150
      %vm2137 = vcmp.le.f32.partialorder %v2136, 0.7853982
      %vm2138 = vcmp.lt.s32.totalorder %v150, 0
      %v2139 = vand.u32 %v150, 2139095040
      %v2140 = vshrl.u32 %v2139, 23
      %v2141 = vsub.s32 %v2140, 127
      %v2142 = vand.u32 2147483647, %v150
      %v2143 = vand.u32 %v2142, 8388607
      %v2144 = vor.u32 %v2143, 8388608
      %v2145 = vsub.s32 0, %v2144
      %v2146 = vadd.s32 %v2141, 1
      %vm2147 = vcmp.gt.s32.totalorder %v2146, 0
      %v2148 = vsel %vm2147, %v2146, 0
      %v2149 = vshrl.u32 %v2148, 5
      %v2150 = vand.u32 %v2148, 31
      %v2151 = vsub.s32 32, %v2150
      %v2152 = vshrl.u32 683565275, %v2151
      %v2153 = vshll.u32 683565275, %v2150
      %v2154 = vshrl.u32 2475754826, %v2151
      %v2155 = vor.u32 %v2153, %v2154
      %v2156 = vshll.u32 2475754826, %v2150
      %v2157 = vshrl.u32 2131351028, %v2151
      %v2158 = vor.u32 %v2156, %v2157
      %v2159 = vshll.u32 2131351028, %v2150
      %v2160 = vshrl.u32 2102212464, %v2151
      %v2161 = vor.u32 %v2159, %v2160
      %v2162 = vshll.u32 2102212464, %v2150
      %v2163 = vshrl.u32 920167782, %v2151
      %v2164 = vor.u32 %v2162, %v2163
      %v2165 = vshll.u32 920167782, %v2150
      %v2166 = vshrl.u32 1326507024, %v2151
      %v2167 = vor.u32 %v2165, %v2166
      %vm2168 = vcmp.lt.s32.totalorder %v2149, 1
      %vm2169 = vcmp.lt.s32.totalorder %v2149, 2
      %vm2170 = vcmp.lt.s32.totalorder %v2149, 3
      %vm2171 = vcmp.lt.s32.totalorder %v2149, 4
      %v2172 = vsel %vm2168, %v2152, %v2155
      %v2173 = vsel %vm2171, %v2161, 2102212464
      %v2174 = vsel %vm2170, %v2158, %v2173
      %v2175 = vsel %vm2169, %v2172, %v2174
      %v2176 = vsel %vm2168, %v2155, %v2158
      %v2177 = vsel %vm2171, %v2164, 920167782
      %v2178 = vsel %vm2170, %v2161, %v2177
      %v2179 = vsel %vm2169, %v2176, %v2178
      %v2180 = vsel %vm2168, %v2158, %v2161
      %v2181 = vsel %vm2171, %v2167, 1326507024
      %v2182 = vsel %vm2170, %v2164, %v2181
      %v2183 = vsel %vm2169, %v2180, %v2182
      %v2184 = vshll.u32 %v2144, 8
      %v2185 = vmul.u32.u64.compose %v2184, %v2183
      %v2186 = vextract.low.u32 %v2185
      %v2187 = vextract.high.u32 %v2185
      %v2188 = vmul.u32.u64.compose %v2184, %v2179
      %v2189 = vextract.low.u32 %v2188
      %v2190 = vextract.high.u32 %v2188
      %v2191 = vmul.u32 %v2184, %v2175
      %v2192 = vadd.s32 %v2187, %v2189
      %vm2193 = vc.u32 %v2187, %v2189
      %v2194 = vadd.s32 %v2190, 1
      %v2195 = vsel %vm2193, %v2194, %v2190
      %v2196 = vadd.s32 %v2191, %v2195
      %v2197 = vadd.s32 %v2196, 536870912
      %v2198 = vshrl.u32 %v2197, 30
      %v2199 = vshll.u32 %v2198, 30
      %v2200 = vsub.s32 %v2196, %v2199
      %vm2201 = vcmp.lt.s32.totalorder %v2200, 0
      %v2202 = vsub.s32 0, %v2200
      %v2203 = vsel %vm2201, %v2202, %v2200
      %v2204 = vclz %v2203
      %v2205 = vsub.s32 %v2204, 2
      %vm2206 = vcmp.gt.s32.totalorder 0, %v2205
      %v2207 = vsel %vm2206, 0, %v2205
      %v2208 = vsub.s32 32, %v2207
      %v2209 = vshll.u32 %v2200, %v2207
      %v2210 = vshrl.u32 %v2192, %v2208
      %v2211 = vor.u32 %v2209, %v2210
      %v2212 = vsub.s32 4294967266, %v2207
      %v2213 = vadd.s32 %v2212, 127
      %v2214 = vshll.u32 %v2213, 23
      %v2215 = vor.u32 4788187, %v2214
      %v2216 = vand.u32 2147483647, %v2215
      %v2218 = vcvt.s32.f32 %v2211
      %v2219 = vmul.f32 %v2218, %v2216
      %v2220 = vxor.u32 %v2219, 2147483648
      %v2221 = vsel %vm2138, %v2220, %v2219
      %v2222 = vsub.s32 4, %v2198
      %v2223 = vsel %vm2138, %v2222, %v2198
      %v2224 = vsel %vm2137, %v150, %v2221
      %v2225 = vsel %vm2137, 0, %v2223
      %v2226 = vcosq.f32.pop %v2224
      %v2227 = vsinq.f32.pop %v2224
      %vm2228 = vweird.f32 %v150
      %v2229 = vand.u32 %v2225, 3
      %vm2230 = vcmp.lt.s32.totalorder %v2229, 2
      %vm2231 = vcmp.eq.s32.totalorder %v2229, 0
      %v2232 = vxor.u32 %v2227, 2147483648
      %v2233 = vsel %vm2231, %v2226, %v2232
      %vm2234 = vcmp.eq.s32.totalorder %v2229, 2
      %v2235 = vxor.u32 %v2226, 2147483648
      %v2236 = vsel %vm2234, %v2235, %v2227
      %v2237 = vsel %vm2230, %v2233, %v2236
      %v2238 = vsel %vm2228, nan, %v2237
      %v2239 = vand.u32 2147483647, %v567
      %vm2240 = vcmp.le.f32.partialorder %v2239, 0.7853982
      %vm2241 = vcmp.lt.s32.totalorder %v567, 0
      %v2242 = vand.u32 %v567, 2139095040
      %v2243 = vshrl.u32 %v2242, 23
      %v2244 = vsub.s32 %v2243, 127
      %v2245 = vand.u32 2147483647, %v567
      %v2246 = vand.u32 %v2245, 8388607
      %v2247 = vor.u32 %v2246, 8388608
      %v2248 = vsub.s32 0, %v2247
      %v2249 = vadd.s32 %v2244, 1
      %vm2250 = vcmp.gt.s32.totalorder %v2249, 0
      %v2251 = vsel %vm2250, %v2249, 0
      %v2252 = vshrl.u32 %v2251, 5
      %v2253 = vand.u32 %v2251, 31
      %v2254 = vsub.s32 32, %v2253
      %v2255 = vshrl.u32 683565275, %v2254
      %v2256 = vshll.u32 683565275, %v2253
      %v2257 = vshrl.u32 2475754826, %v2254
      %v2258 = vor.u32 %v2256, %v2257
      %v2259 = vshll.u32 2475754826, %v2253
      %v2260 = vshrl.u32 2131351028, %v2254
      %v2261 = vor.u32 %v2259, %v2260
      %v2262 = vshll.u32 2131351028, %v2253
      %v2263 = vshrl.u32 2102212464, %v2254
      %v2264 = vor.u32 %v2262, %v2263
      %v2265 = vshll.u32 2102212464, %v2253
      %v2266 = vshrl.u32 920167782, %v2254
      %v2267 = vor.u32 %v2265, %v2266
      %v2268 = vshll.u32 920167782, %v2253
      %v2269 = vshrl.u32 1326507024, %v2254
      %v2270 = vor.u32 %v2268, %v2269
      %vm2271 = vcmp.lt.s32.totalorder %v2252, 1
      %vm2272 = vcmp.lt.s32.totalorder %v2252, 2
      %vm2273 = vcmp.lt.s32.totalorder %v2252, 3
      %vm2274 = vcmp.lt.s32.totalorder %v2252, 4
      %v2275 = vsel %vm2271, %v2255, %v2258
      %v2276 = vsel %vm2274, %v2264, 2102212464
      %v2277 = vsel %vm2273, %v2261, %v2276
      %v2278 = vsel %vm2272, %v2275, %v2277
      %v2279 = vsel %vm2271, %v2258, %v2261
      %v2280 = vsel %vm2274, %v2267, 920167782
      %v2281 = vsel %vm2273, %v2264, %v2280
      %v2282 = vsel %vm2272, %v2279, %v2281
      %v2283 = vsel %vm2271, %v2261, %v2264
      %v2284 = vsel %vm2274, %v2270, 1326507024
      %v2285 = vsel %vm2273, %v2267, %v2284
      %v2286 = vsel %vm2272, %v2283, %v2285
      %v2287 = vshll.u32 %v2247, 8
      %v2288 = vmul.u32.u64.compose %v2287, %v2286
      %v2289 = vextract.low.u32 %v2288
      %v2290 = vextract.high.u32 %v2288
      %v2291 = vmul.u32.u64.compose %v2287, %v2282
      %v2292 = vextract.low.u32 %v2291
      %v2293 = vextract.high.u32 %v2291
      %v2294 = vmul.u32 %v2287, %v2278
      %v2295 = vadd.s32 %v2290, %v2292
      %vm2296 = vc.u32 %v2290, %v2292
      %v2297 = vadd.s32 %v2293, 1
      %v2298 = vsel %vm2296, %v2297, %v2293
      %v2299 = vadd.s32 %v2294, %v2298
      %v2300 = vadd.s32 %v2299, 536870912
      %v2301 = vshrl.u32 %v2300, 30
      %v2302 = vshll.u32 %v2301, 30
      %v2303 = vsub.s32 %v2299, %v2302
      %vm2304 = vcmp.lt.s32.totalorder %v2303, 0
      %v2305 = vsub.s32 0, %v2303
      %v2306 = vsel %vm2304, %v2305, %v2303
      %v2307 = vclz %v2306
      %v2308 = vsub.s32 %v2307, 2
      %vm2309 = vcmp.gt.s32.totalorder 0, %v2308
      %v2310 = vsel %vm2309, 0, %v2308
      %v2311 = vsub.s32 32, %v2310
      %v2312 = vshll.u32 %v2303, %v2310
      %v2313 = vshrl.u32 %v2295, %v2311
      %v2314 = vor.u32 %v2312, %v2313
      %v2315 = vsub.s32 4294967266, %v2310
      %v2316 = vadd.s32 %v2315, 127
      %v2317 = vshll.u32 %v2316, 23
      %v2318 = vor.u32 4788187, %v2317
      %v2319 = vand.u32 2147483647, %v2318
      %v2321 = vcvt.s32.f32 %v2314
      %v2322 = vmul.f32 %v2321, %v2319
      %v2323 = vxor.u32 %v2322, 2147483648
      %v2324 = vsel %vm2241, %v2323, %v2322
      %v2325 = vsub.s32 4, %v2301
      %v2326 = vsel %vm2241, %v2325, %v2301
      %v2327 = vsel %vm2240, %v567, %v2324
      %v2328 = vsel %vm2240, 0, %v2326
      %v2329 = vcosq.f32.pop %v2327
      %v2330 = vsinq.f32.pop %v2327
      %vm2331 = vweird.f32 %v567
      %v2332 = vand.u32 %v2328, 3
      %vm2333 = vcmp.lt.s32.totalorder %v2332, 2
      %vm2334 = vcmp.eq.s32.totalorder %v2332, 0
      %v2335 = vxor.u32 %v2330, 2147483648
      %v2336 = vsel %vm2334, %v2329, %v2335
      %vm2337 = vcmp.eq.s32.totalorder %v2332, 2
      %v2338 = vxor.u32 %v2329, 2147483648
      %v2339 = vsel %vm2337, %v2338, %v2330
      %v2340 = vsel %vm2333, %v2336, %v2339
      %v2341 = vsel %vm2331, nan, %v2340
      %v2342 = vand.u32 2147483647, %v568
      %vm2343 = vcmp.le.f32.partialorder %v2342, 0.7853982
      %vm2344 = vcmp.lt.s32.totalorder %v568, 0
      %v2345 = vand.u32 %v568, 2139095040
      %v2346 = vshrl.u32 %v2345, 23
      %v2347 = vsub.s32 %v2346, 127
      %v2348 = vand.u32 2147483647, %v568
      %v2349 = vand.u32 %v2348, 8388607
      %v2350 = vor.u32 %v2349, 8388608
      %v2351 = vsub.s32 0, %v2350
      %v2352 = vadd.s32 %v2347, 1
      %vm2353 = vcmp.gt.s32.totalorder %v2352, 0
      %v2354 = vsel %vm2353, %v2352, 0
      %v2355 = vshrl.u32 %v2354, 5
      %v2356 = vand.u32 %v2354, 31
      %v2357 = vsub.s32 32, %v2356
      %v2358 = vshrl.u32 683565275, %v2357
      %v2359 = vshll.u32 683565275, %v2356
      %v2360 = vshrl.u32 2475754826, %v2357
      %v2361 = vor.u32 %v2359, %v2360
      %v2362 = vshll.u32 2475754826, %v2356
      %v2363 = vshrl.u32 2131351028, %v2357
      %v2364 = vor.u32 %v2362, %v2363
      %v2365 = vshll.u32 2131351028, %v2356
      %v2366 = vshrl.u32 2102212464, %v2357
      %v2367 = vor.u32 %v2365, %v2366
      %v2368 = vshll.u32 2102212464, %v2356
      %v2369 = vshrl.u32 920167782, %v2357
      %v2370 = vor.u32 %v2368, %v2369
      %v2371 = vshll.u32 920167782, %v2356
      %v2372 = vshrl.u32 1326507024, %v2357
      %v2373 = vor.u32 %v2371, %v2372
      %vm2374 = vcmp.lt.s32.totalorder %v2355, 1
      %vm2375 = vcmp.lt.s32.totalorder %v2355, 2
      %vm2376 = vcmp.lt.s32.totalorder %v2355, 3
      %vm2377 = vcmp.lt.s32.totalorder %v2355, 4
      %v2378 = vsel %vm2374, %v2358, %v2361
      %v2379 = vsel %vm2377, %v2367, 2102212464
      %v2380 = vsel %vm2376, %v2364, %v2379
      %v2381 = vsel %vm2375, %v2378, %v2380
      %v2382 = vsel %vm2374, %v2361, %v2364
      %v2383 = vsel %vm2377, %v2370, 920167782
      %v2384 = vsel %vm2376, %v2367, %v2383
      %v2385 = vsel %vm2375, %v2382, %v2384
      %v2386 = vsel %vm2374, %v2364, %v2367
      %v2387 = vsel %vm2377, %v2373, 1326507024
      %v2388 = vsel %vm2376, %v2370, %v2387
      %v2389 = vsel %vm2375, %v2386, %v2388
      %v2390 = vshll.u32 %v2350, 8
      %v2391 = vmul.u32.u64.compose %v2390, %v2389
      %v2392 = vextract.low.u32 %v2391
      %v2393 = vextract.high.u32 %v2391
      %v2394 = vmul.u32.u64.compose %v2390, %v2385
      %v2395 = vextract.low.u32 %v2394
      %v2396 = vextract.high.u32 %v2394
      %v2397 = vmul.u32 %v2390, %v2381
      %v2398 = vadd.s32 %v2393, %v2395
      %vm2399 = vc.u32 %v2393, %v2395
      %v2400 = vadd.s32 %v2396, 1
      %v2401 = vsel %vm2399, %v2400, %v2396
      %v2402 = vadd.s32 %v2397, %v2401
      %v2403 = vadd.s32 %v2402, 536870912
      %v2404 = vshrl.u32 %v2403, 30
      %v2405 = vshll.u32 %v2404, 30
      %v2406 = vsub.s32 %v2402, %v2405
      %vm2407 = vcmp.lt.s32.totalorder %v2406, 0
      %v2408 = vsub.s32 0, %v2406
      %v2409 = vsel %vm2407, %v2408, %v2406
      %v2410 = vclz %v2409
      %v2411 = vsub.s32 %v2410, 2
      %vm2412 = vcmp.gt.s32.totalorder 0, %v2411
      %v2413 = vsel %vm2412, 0, %v2411
      %v2414 = vsub.s32 32, %v2413
      %v2415 = vshll.u32 %v2406, %v2413
      %v2416 = vshrl.u32 %v2398, %v2414
      %v2417 = vor.u32 %v2415, %v2416
      %v2418 = vsub.s32 4294967266, %v2413
      %v2419 = vadd.s32 %v2418, 127
      %v2420 = vshll.u32 %v2419, 23
      %v2421 = vor.u32 4788187, %v2420
      %v2422 = vand.u32 2147483647, %v2421
      %v2424 = vcvt.s32.f32 %v2417
      %v2425 = vmul.f32 %v2424, %v2422
      %v2426 = vxor.u32 %v2425, 2147483648
      %v2427 = vsel %vm2344, %v2426, %v2425
      %v2428 = vsub.s32 4, %v2404
      %v2429 = vsel %vm2344, %v2428, %v2404
      %v2430 = vsel %vm2343, %v568, %v2427
      %v2431 = vsel %vm2343, 0, %v2429
      %v2432 = vcosq.f32.pop %v2430
      %v2433 = vsinq.f32.pop %v2430
      %vm2434 = vweird.f32 %v568
      %v2435 = vand.u32 %v2431, 3
      %vm2436 = vcmp.lt.s32.totalorder %v2435, 2
      %vm2437 = vcmp.eq.s32.totalorder %v2435, 0
      %v2438 = vxor.u32 %v2433, 2147483648
      %v2439 = vsel %vm2437, %v2432, %v2438
      %vm2440 = vcmp.eq.s32.totalorder %v2435, 2
      %v2441 = vxor.u32 %v2432, 2147483648
      %v2442 = vsel %vm2440, %v2441, %v2433
      %v2443 = vsel %vm2436, %v2439, %v2442
      %v2444 = vsel %vm2434, nan, %v2443
      %v2445 = vand.u32 2147483647, %v569
      %vm2446 = vcmp.le.f32.partialorder %v2445, 0.7853982
      %vm2447 = vcmp.lt.s32.totalorder %v569, 0
      %v2448 = vand.u32 %v569, 2139095040
      %v2449 = vshrl.u32 %v2448, 23
      %v2450 = vsub.s32 %v2449, 127
      %v2451 = vand.u32 2147483647, %v569
      %v2452 = vand.u32 %v2451, 8388607
      %v2453 = vor.u32 %v2452, 8388608
      %v2454 = vsub.s32 0, %v2453
      %v2455 = vadd.s32 %v2450, 1
      %vm2456 = vcmp.gt.s32.totalorder %v2455, 0
      %v2457 = vsel %vm2456, %v2455, 0
      %v2458 = vshrl.u32 %v2457, 5
      %v2459 = vand.u32 %v2457, 31
      %v2460 = vsub.s32 32, %v2459
      %v2461 = vshrl.u32 683565275, %v2460
      %v2462 = vshll.u32 683565275, %v2459
      %v2463 = vshrl.u32 2475754826, %v2460
      %v2464 = vor.u32 %v2462, %v2463
      %v2465 = vshll.u32 2475754826, %v2459
      %v2466 = vshrl.u32 2131351028, %v2460
      %v2467 = vor.u32 %v2465, %v2466
      %v2468 = vshll.u32 2131351028, %v2459
      %v2469 = vshrl.u32 2102212464, %v2460
      %v2470 = vor.u32 %v2468, %v2469
      %v2471 = vshll.u32 2102212464, %v2459
      %v2472 = vshrl.u32 920167782, %v2460
      %v2473 = vor.u32 %v2471, %v2472
      %v2474 = vshll.u32 920167782, %v2459
      %v2475 = vshrl.u32 1326507024, %v2460
      %v2476 = vor.u32 %v2474, %v2475
      %vm2477 = vcmp.lt.s32.totalorder %v2458, 1
      %vm2478 = vcmp.lt.s32.totalorder %v2458, 2
      %vm2479 = vcmp.lt.s32.totalorder %v2458, 3
      %vm2480 = vcmp.lt.s32.totalorder %v2458, 4
      %v2481 = vsel %vm2477, %v2461, %v2464
      %v2482 = vsel %vm2480, %v2470, 2102212464
      %v2483 = vsel %vm2479, %v2467, %v2482
      %v2484 = vsel %vm2478, %v2481, %v2483
      %v2485 = vsel %vm2477, %v2464, %v2467
      %v2486 = vsel %vm2480, %v2473, 920167782
      %v2487 = vsel %vm2479, %v2470, %v2486
      %v2488 = vsel %vm2478, %v2485, %v2487
      %v2489 = vsel %vm2477, %v2467, %v2470
      %v2490 = vsel %vm2480, %v2476, 1326507024
      %v2491 = vsel %vm2479, %v2473, %v2490
      %v2492 = vsel %vm2478, %v2489, %v2491
      %v2493 = vshll.u32 %v2453, 8
      %v2494 = vmul.u32.u64.compose %v2493, %v2492
      %v2495 = vextract.low.u32 %v2494
      %v2496 = vextract.high.u32 %v2494
      %v2497 = vmul.u32.u64.compose %v2493, %v2488
      %v2498 = vextract.low.u32 %v2497
      %v2499 = vextract.high.u32 %v2497
      %v2500 = vmul.u32 %v2493, %v2484
      %v2501 = vadd.s32 %v2496, %v2498
      %vm2502 = vc.u32 %v2496, %v2498
      %v2503 = vadd.s32 %v2499, 1
      %v2504 = vsel %vm2502, %v2503, %v2499
      %v2505 = vadd.s32 %v2500, %v2504
      %v2506 = vadd.s32 %v2505, 536870912
      %v2507 = vshrl.u32 %v2506, 30
      %v2508 = vshll.u32 %v2507, 30
      %v2509 = vsub.s32 %v2505, %v2508
      %vm2510 = vcmp.lt.s32.totalorder %v2509, 0
      %v2511 = vsub.s32 0, %v2509
      %v2512 = vsel %vm2510, %v2511, %v2509
      %v2513 = vclz %v2512
      %v2514 = vsub.s32 %v2513, 2
      %vm2515 = vcmp.gt.s32.totalorder 0, %v2514
      %v2516 = vsel %vm2515, 0, %v2514
      %v2517 = vsub.s32 32, %v2516
      %v2518 = vshll.u32 %v2509, %v2516
      %v2519 = vshrl.u32 %v2501, %v2517
      %v2520 = vor.u32 %v2518, %v2519
      %v2521 = vsub.s32 4294967266, %v2516
      %v2522 = vadd.s32 %v2521, 127
      %v2523 = vshll.u32 %v2522, 23
      %v2524 = vor.u32 4788187, %v2523
      %v2525 = vand.u32 2147483647, %v2524
      %v2527 = vcvt.s32.f32 %v2520
      %v2528 = vmul.f32 %v2527, %v2525
      %v2529 = vxor.u32 %v2528, 2147483648
      %v2530 = vsel %vm2447, %v2529, %v2528
      %v2531 = vsub.s32 4, %v2507
      %v2532 = vsel %vm2447, %v2531, %v2507
      %v2533 = vsel %vm2446, %v569, %v2530
      %v2534 = vsel %vm2446, 0, %v2532
      %v2535 = vcosq.f32.pop %v2533
      %v2536 = vsinq.f32.pop %v2533
      %vm2537 = vweird.f32 %v569
      %v2538 = vand.u32 %v2534, 3
      %vm2539 = vcmp.lt.s32.totalorder %v2538, 2
      %vm2540 = vcmp.eq.s32.totalorder %v2538, 0
      %v2541 = vxor.u32 %v2536, 2147483648
      %v2542 = vsel %vm2540, %v2535, %v2541
      %vm2543 = vcmp.eq.s32.totalorder %v2538, 2
      %v2544 = vxor.u32 %v2535, 2147483648
      %v2545 = vsel %vm2543, %v2544, %v2536
      %v2546 = vsel %vm2539, %v2542, %v2545
      %v2547 = vsel %vm2537, nan, %v2546
      %v2548 = vand.u32 2147483647, %v570
      %vm2549 = vcmp.le.f32.partialorder %v2548, 0.7853982
      %vm2550 = vcmp.lt.s32.totalorder %v570, 0
      %v2551 = vand.u32 %v570, 2139095040
      %v2552 = vshrl.u32 %v2551, 23
      %v2553 = vsub.s32 %v2552, 127
      %v2554 = vand.u32 2147483647, %v570
      %v2555 = vand.u32 %v2554, 8388607
      %v2556 = vor.u32 %v2555, 8388608
      %v2557 = vsub.s32 0, %v2556
      %v2558 = vadd.s32 %v2553, 1
      %vm2559 = vcmp.gt.s32.totalorder %v2558, 0
      %v2560 = vsel %vm2559, %v2558, 0
      %v2561 = vshrl.u32 %v2560, 5
      %v2562 = vand.u32 %v2560, 31
      %v2563 = vsub.s32 32, %v2562
      %v2564 = vshrl.u32 683565275, %v2563
      %v2565 = vshll.u32 683565275, %v2562
      %v2566 = vshrl.u32 2475754826, %v2563
      %v2567 = vor.u32 %v2565, %v2566
      %v2568 = vshll.u32 2475754826, %v2562
      %v2569 = vshrl.u32 2131351028, %v2563
      %v2570 = vor.u32 %v2568, %v2569
      %v2571 = vshll.u32 2131351028, %v2562
      %v2572 = vshrl.u32 2102212464, %v2563
      %v2573 = vor.u32 %v2571, %v2572
      %v2574 = vshll.u32 2102212464, %v2562
      %v2575 = vshrl.u32 920167782, %v2563
      %v2576 = vor.u32 %v2574, %v2575
      %v2577 = vshll.u32 920167782, %v2562
      %v2578 = vshrl.u32 1326507024, %v2563
      %v2579 = vor.u32 %v2577, %v2578
      %vm2580 = vcmp.lt.s32.totalorder %v2561, 1
      %vm2581 = vcmp.lt.s32.totalorder %v2561, 2
      %vm2582 = vcmp.lt.s32.totalorder %v2561, 3
      %vm2583 = vcmp.lt.s32.totalorder %v2561, 4
      %v2584 = vsel %vm2580, %v2564, %v2567
      %v2585 = vsel %vm2583, %v2573, 2102212464
      %v2586 = vsel %vm2582, %v2570, %v2585
      %v2587 = vsel %vm2581, %v2584, %v2586
      %v2588 = vsel %vm2580, %v2567, %v2570
      %v2589 = vsel %vm2583, %v2576, 920167782
      %v2590 = vsel %vm2582, %v2573, %v2589
      %v2591 = vsel %vm2581, %v2588, %v2590
      %v2592 = vsel %vm2580, %v2570, %v2573
      %v2593 = vsel %vm2583, %v2579, 1326507024
      %v2594 = vsel %vm2582, %v2576, %v2593
      %v2595 = vsel %vm2581, %v2592, %v2594
      %v2596 = vshll.u32 %v2556, 8
      %v2597 = vmul.u32.u64.compose %v2596, %v2595
      %v2598 = vextract.low.u32 %v2597
      %v2599 = vextract.high.u32 %v2597
      %v2600 = vmul.u32.u64.compose %v2596, %v2591
      %v2601 = vextract.low.u32 %v2600
      %v2602 = vextract.high.u32 %v2600
      %v2603 = vmul.u32 %v2596, %v2587
      %v2604 = vadd.s32 %v2599, %v2601
      %vm2605 = vc.u32 %v2599, %v2601
      %v2606 = vadd.s32 %v2602, 1
      %v2607 = vsel %vm2605, %v2606, %v2602
      %v2608 = vadd.s32 %v2603, %v2607
      %v2609 = vadd.s32 %v2608, 536870912
      %v2610 = vshrl.u32 %v2609, 30
      %v2611 = vshll.u32 %v2610, 30
      %v2612 = vsub.s32 %v2608, %v2611
      %vm2613 = vcmp.lt.s32.totalorder %v2612, 0
      %v2614 = vsub.s32 0, %v2612
      %v2615 = vsel %vm2613, %v2614, %v2612
      %v2616 = vclz %v2615
      %v2617 = vsub.s32 %v2616, 2
      %vm2618 = vcmp.gt.s32.totalorder 0, %v2617
      %v2619 = vsel %vm2618, 0, %v2617
      %v2620 = vsub.s32 32, %v2619
      %v2621 = vshll.u32 %v2612, %v2619
      %v2622 = vshrl.u32 %v2604, %v2620
      %v2623 = vor.u32 %v2621, %v2622
      %v2624 = vsub.s32 4294967266, %v2619
      %v2625 = vadd.s32 %v2624, 127
      %v2626 = vshll.u32 %v2625, 23
      %v2627 = vor.u32 4788187, %v2626
      %v2628 = vand.u32 2147483647, %v2627
      %v2630 = vcvt.s32.f32 %v2623
      %v2631 = vmul.f32 %v2630, %v2628
      %v2632 = vxor.u32 %v2631, 2147483648
      %v2633 = vsel %vm2550, %v2632, %v2631
      %v2634 = vsub.s32 4, %v2610
      %v2635 = vsel %vm2550, %v2634, %v2610
      %v2636 = vsel %vm2549, %v570, %v2633
      %v2637 = vsel %vm2549, 0, %v2635
      %v2638 = vcosq.f32.pop %v2636
      %v2639 = vsinq.f32.pop %v2636
      %vm2640 = vweird.f32 %v570
      %v2641 = vand.u32 %v2637, 3
      %vm2642 = vcmp.lt.s32.totalorder %v2641, 2
      %vm2643 = vcmp.eq.s32.totalorder %v2641, 0
      %v2644 = vxor.u32 %v2639, 2147483648
      %v2645 = vsel %vm2643, %v2638, %v2644
      %vm2646 = vcmp.eq.s32.totalorder %v2641, 2
      %v2647 = vxor.u32 %v2638, 2147483648
      %v2648 = vsel %vm2646, %v2647, %v2639
      %v2649 = vsel %vm2642, %v2645, %v2648
      %v2650 = vsel %vm2640, nan, %v2649
      %v2651 = vand.u32 2147483647, %v987
      %vm2652 = vcmp.le.f32.partialorder %v2651, 0.7853982
      %vm2653 = vcmp.lt.s32.totalorder %v987, 0
      %v2654 = vand.u32 %v987, 2139095040
      %v2655 = vshrl.u32 %v2654, 23
      %v2656 = vsub.s32 %v2655, 127
      %v2657 = vand.u32 2147483647, %v987
      %v2658 = vand.u32 %v2657, 8388607
      %v2659 = vor.u32 %v2658, 8388608
      %v2660 = vsub.s32 0, %v2659
      %v2661 = vadd.s32 %v2656, 1
      %vm2662 = vcmp.gt.s32.totalorder %v2661, 0
      %v2663 = vsel %vm2662, %v2661, 0
      %v2664 = vshrl.u32 %v2663, 5
      %v2665 = vand.u32 %v2663, 31
      %v2666 = vsub.s32 32, %v2665
      %v2667 = vshrl.u32 683565275, %v2666
      %v2668 = vshll.u32 683565275, %v2665
      %v2669 = vshrl.u32 2475754826, %v2666
      %v2670 = vor.u32 %v2668, %v2669
      %v2671 = vshll.u32 2475754826, %v2665
      %v2672 = vshrl.u32 2131351028, %v2666
      %v2673 = vor.u32 %v2671, %v2672
      %v2674 = vshll.u32 2131351028, %v2665
      %v2675 = vshrl.u32 2102212464, %v2666
      %v2676 = vor.u32 %v2674, %v2675
      %v2677 = vshll.u32 2102212464, %v2665
      %v2678 = vshrl.u32 920167782, %v2666
      %v2679 = vor.u32 %v2677, %v2678
      %v2680 = vshll.u32 920167782, %v2665
      %v2681 = vshrl.u32 1326507024, %v2666
      %v2682 = vor.u32 %v2680, %v2681
      %vm2683 = vcmp.lt.s32.totalorder %v2664, 1
      %vm2684 = vcmp.lt.s32.totalorder %v2664, 2
      %vm2685 = vcmp.lt.s32.totalorder %v2664, 3
      %vm2686 = vcmp.lt.s32.totalorder %v2664, 4
      %v2687 = vsel %vm2683, %v2667, %v2670
      %v2688 = vsel %vm2686, %v2676, 2102212464
      %v2689 = vsel %vm2685, %v2673, %v2688
      %v2690 = vsel %vm2684, %v2687, %v2689
      %v2691 = vsel %vm2683, %v2670, %v2673
      %v2692 = vsel %vm2686, %v2679, 920167782
      %v2693 = vsel %vm2685, %v2676, %v2692
      %v2694 = vsel %vm2684, %v2691, %v2693
      %v2695 = vsel %vm2683, %v2673, %v2676
      %v2696 = vsel %vm2686, %v2682, 1326507024
      %v2697 = vsel %vm2685, %v2679, %v2696
      %v2698 = vsel %vm2684, %v2695, %v2697
      %v2699 = vshll.u32 %v2659, 8
      %v2700 = vmul.u32.u64.compose %v2699, %v2698
      %v2701 = vextract.low.u32 %v2700
      %v2702 = vextract.high.u32 %v2700
      %v2703 = vmul.u32.u64.compose %v2699, %v2694
      %v2704 = vextract.low.u32 %v2703
      %v2705 = vextract.high.u32 %v2703
      %v2706 = vmul.u32 %v2699, %v2690
      %v2707 = vadd.s32 %v2702, %v2704
      %vm2708 = vc.u32 %v2702, %v2704
      %v2709 = vadd.s32 %v2705, 1
      %v2710 = vsel %vm2708, %v2709, %v2705
      %v2711 = vadd.s32 %v2706, %v2710
      %v2712 = vadd.s32 %v2711, 536870912
      %v2713 = vshrl.u32 %v2712, 30
      %v2714 = vshll.u32 %v2713, 30
      %v2715 = vsub.s32 %v2711, %v2714
      %vm2716 = vcmp.lt.s32.totalorder %v2715, 0
      %v2717 = vsub.s32 0, %v2715
      %v2718 = vsel %vm2716, %v2717, %v2715
      %v2719 = vclz %v2718
      %v2720 = vsub.s32 %v2719, 2
      %vm2721 = vcmp.gt.s32.totalorder 0, %v2720
      %v2722 = vsel %vm2721, 0, %v2720
      %v2723 = vsub.s32 32, %v2722
      %v2724 = vshll.u32 %v2715, %v2722
      %v2725 = vshrl.u32 %v2707, %v2723
      %v2726 = vor.u32 %v2724, %v2725
      %v2727 = vsub.s32 4294967266, %v2722
      %v2728 = vadd.s32 %v2727, 127
      %v2729 = vshll.u32 %v2728, 23
      %v2730 = vor.u32 4788187, %v2729
      %v2731 = vand.u32 2147483647, %v2730
      %v2733 = vcvt.s32.f32 %v2726
      %v2734 = vmul.f32 %v2733, %v2731
      %v2735 = vxor.u32 %v2734, 2147483648
      %v2736 = vsel %vm2653, %v2735, %v2734
      %v2737 = vsub.s32 4, %v2713
      %v2738 = vsel %vm2653, %v2737, %v2713
      %v2739 = vsel %vm2652, %v987, %v2736
      %v2740 = vsel %vm2652, 0, %v2738
      %v2741 = vcosq.f32.pop %v2739
      %v2742 = vsinq.f32.pop %v2739
      %vm2743 = vweird.f32 %v987
      %v2744 = vand.u32 %v2740, 3
      %vm2745 = vcmp.lt.s32.totalorder %v2744, 2
      %vm2746 = vcmp.eq.s32.totalorder %v2744, 0
      %v2747 = vxor.u32 %v2742, 2147483648
      %v2748 = vsel %vm2746, %v2741, %v2747
      %vm2749 = vcmp.eq.s32.totalorder %v2744, 2
      %v2750 = vxor.u32 %v2741, 2147483648
      %v2751 = vsel %vm2749, %v2750, %v2742
      %v2752 = vsel %vm2745, %v2748, %v2751
      %v2753 = vsel %vm2743, nan, %v2752
      %v2754 = vand.u32 2147483647, %v988
      %vm2755 = vcmp.le.f32.partialorder %v2754, 0.7853982
      %vm2756 = vcmp.lt.s32.totalorder %v988, 0
      %v2757 = vand.u32 %v988, 2139095040
      %v2758 = vshrl.u32 %v2757, 23
      %v2759 = vsub.s32 %v2758, 127
      %v2760 = vand.u32 2147483647, %v988
      %v2761 = vand.u32 %v2760, 8388607
      %v2762 = vor.u32 %v2761, 8388608
      %v2763 = vsub.s32 0, %v2762
      %v2764 = vadd.s32 %v2759, 1
      %vm2765 = vcmp.gt.s32.totalorder %v2764, 0
      %v2766 = vsel %vm2765, %v2764, 0
      %v2767 = vshrl.u32 %v2766, 5
      %v2768 = vand.u32 %v2766, 31
      %v2769 = vsub.s32 32, %v2768
      %v2770 = vshrl.u32 683565275, %v2769
      %v2771 = vshll.u32 683565275, %v2768
      %v2772 = vshrl.u32 2475754826, %v2769
      %v2773 = vor.u32 %v2771, %v2772
      %v2774 = vshll.u32 2475754826, %v2768
      %v2775 = vshrl.u32 2131351028, %v2769
      %v2776 = vor.u32 %v2774, %v2775
      %v2777 = vshll.u32 2131351028, %v2768
      %v2778 = vshrl.u32 2102212464, %v2769
      %v2779 = vor.u32 %v2777, %v2778
      %v2780 = vshll.u32 2102212464, %v2768
      %v2781 = vshrl.u32 920167782, %v2769
      %v2782 = vor.u32 %v2780, %v2781
      %v2783 = vshll.u32 920167782, %v2768
      %v2784 = vshrl.u32 1326507024, %v2769
      %v2785 = vor.u32 %v2783, %v2784
      %vm2786 = vcmp.lt.s32.totalorder %v2767, 1
      %vm2787 = vcmp.lt.s32.totalorder %v2767, 2
      %vm2788 = vcmp.lt.s32.totalorder %v2767, 3
      %vm2789 = vcmp.lt.s32.totalorder %v2767, 4
      %v2790 = vsel %vm2786, %v2770, %v2773
      %v2791 = vsel %vm2789, %v2779, 2102212464
      %v2792 = vsel %vm2788, %v2776, %v2791
      %v2793 = vsel %vm2787, %v2790, %v2792
      %v2794 = vsel %vm2786, %v2773, %v2776
      %v2795 = vsel %vm2789, %v2782, 920167782
      %v2796 = vsel %vm2788, %v2779, %v2795
      %v2797 = vsel %vm2787, %v2794, %v2796
      %v2798 = vsel %vm2786, %v2776, %v2779
      %v2799 = vsel %vm2789, %v2785, 1326507024
      %v2800 = vsel %vm2788, %v2782, %v2799
      %v2801 = vsel %vm2787, %v2798, %v2800
      %v2802 = vshll.u32 %v2762, 8
      %v2803 = vmul.u32.u64.compose %v2802, %v2801
      %v2804 = vextract.low.u32 %v2803
      %v2805 = vextract.high.u32 %v2803
      %v2806 = vmul.u32.u64.compose %v2802, %v2797
      %v2807 = vextract.low.u32 %v2806
      %v2808 = vextract.high.u32 %v2806
      %v2809 = vmul.u32 %v2802, %v2793
      %v2810 = vadd.s32 %v2805, %v2807
      %vm2811 = vc.u32 %v2805, %v2807
      %v2812 = vadd.s32 %v2808, 1
      %v2813 = vsel %vm2811, %v2812, %v2808
      %v2814 = vadd.s32 %v2809, %v2813
      %v2815 = vadd.s32 %v2814, 536870912
      %v2816 = vshrl.u32 %v2815, 30
      %v2817 = vshll.u32 %v2816, 30
      %v2818 = vsub.s32 %v2814, %v2817
      %vm2819 = vcmp.lt.s32.totalorder %v2818, 0
      %v2820 = vsub.s32 0, %v2818
      %v2821 = vsel %vm2819, %v2820, %v2818
      %v2822 = vclz %v2821
      %v2823 = vsub.s32 %v2822, 2
      %vm2824 = vcmp.gt.s32.totalorder 0, %v2823
      %v2825 = vsel %vm2824, 0, %v2823
      %v2826 = vsub.s32 32, %v2825
      %v2827 = vshll.u32 %v2818, %v2825
      %v2828 = vshrl.u32 %v2810, %v2826
      %v2829 = vor.u32 %v2827, %v2828
      %v2830 = vsub.s32 4294967266, %v2825
      %v2831 = vadd.s32 %v2830, 127
      %v2832 = vshll.u32 %v2831, 23
      %v2833 = vor.u32 4788187, %v2832
      %v2834 = vand.u32 2147483647, %v2833
      %v2836 = vcvt.s32.f32 %v2829
      %v2837 = vmul.f32 %v2836, %v2834
      %v2838 = vxor.u32 %v2837, 2147483648
      %v2839 = vsel %vm2756, %v2838, %v2837
      %v2840 = vsub.s32 4, %v2816
      %v2841 = vsel %vm2756, %v2840, %v2816
      %v2842 = vsel %vm2755, %v988, %v2839
      %v2843 = vsel %vm2755, 0, %v2841
      %v2844 = vcosq.f32.pop %v2842
      %v2845 = vsinq.f32.pop %v2842
      %vm2846 = vweird.f32 %v988
      %v2847 = vand.u32 %v2843, 3
      %vm2848 = vcmp.lt.s32.totalorder %v2847, 2
      %vm2849 = vcmp.eq.s32.totalorder %v2847, 0
      %v2850 = vxor.u32 %v2845, 2147483648
      %v2851 = vsel %vm2849, %v2844, %v2850
      %vm2852 = vcmp.eq.s32.totalorder %v2847, 2
      %v2853 = vxor.u32 %v2844, 2147483648
      %v2854 = vsel %vm2852, %v2853, %v2845
      %v2855 = vsel %vm2848, %v2851, %v2854
      %v2856 = vsel %vm2846, nan, %v2855
      %v2857 = vand.u32 2147483647, %v989
      %vm2858 = vcmp.le.f32.partialorder %v2857, 0.7853982
      %vm2859 = vcmp.lt.s32.totalorder %v989, 0
      %v2860 = vand.u32 %v989, 2139095040
      %v2861 = vshrl.u32 %v2860, 23
      %v2862 = vsub.s32 %v2861, 127
      %v2863 = vand.u32 2147483647, %v989
      %v2864 = vand.u32 %v2863, 8388607
      %v2865 = vor.u32 %v2864, 8388608
      %v2866 = vsub.s32 0, %v2865
      %v2867 = vadd.s32 %v2862, 1
      %vm2868 = vcmp.gt.s32.totalorder %v2867, 0
      %v2869 = vsel %vm2868, %v2867, 0
      %v2870 = vshrl.u32 %v2869, 5
      %v2871 = vand.u32 %v2869, 31
      %v2872 = vsub.s32 32, %v2871
      %v2873 = vshrl.u32 683565275, %v2872
      %v2874 = vshll.u32 683565275, %v2871
      %v2875 = vshrl.u32 2475754826, %v2872
      %v2876 = vor.u32 %v2874, %v2875
      %v2877 = vshll.u32 2475754826, %v2871
      %v2878 = vshrl.u32 2131351028, %v2872
      %v2879 = vor.u32 %v2877, %v2878
      %v2880 = vshll.u32 2131351028, %v2871
      %v2881 = vshrl.u32 2102212464, %v2872
      %v2882 = vor.u32 %v2880, %v2881
      %v2883 = vshll.u32 2102212464, %v2871
      %v2884 = vshrl.u32 920167782, %v2872
      %v2885 = vor.u32 %v2883, %v2884
      %v2886 = vshll.u32 920167782, %v2871
      %v2887 = vshrl.u32 1326507024, %v2872
      %v2888 = vor.u32 %v2886, %v2887
      %vm2889 = vcmp.lt.s32.totalorder %v2870, 1
      %vm2890 = vcmp.lt.s32.totalorder %v2870, 2
      %vm2891 = vcmp.lt.s32.totalorder %v2870, 3
      %vm2892 = vcmp.lt.s32.totalorder %v2870, 4
      %v2893 = vsel %vm2889, %v2873, %v2876
      %v2894 = vsel %vm2892, %v2882, 2102212464
      %v2895 = vsel %vm2891, %v2879, %v2894
      %v2896 = vsel %vm2890, %v2893, %v2895
      %v2897 = vsel %vm2889, %v2876, %v2879
      %v2898 = vsel %vm2892, %v2885, 920167782
      %v2899 = vsel %vm2891, %v2882, %v2898
      %v2900 = vsel %vm2890, %v2897, %v2899
      %v2901 = vsel %vm2889, %v2879, %v2882
      %v2902 = vsel %vm2892, %v2888, 1326507024
      %v2903 = vsel %vm2891, %v2885, %v2902
      %v2904 = vsel %vm2890, %v2901, %v2903
      %v2905 = vshll.u32 %v2865, 8
      %v2906 = vmul.u32.u64.compose %v2905, %v2904
      %v2907 = vextract.low.u32 %v2906
      %v2908 = vextract.high.u32 %v2906
      %v2909 = vmul.u32.u64.compose %v2905, %v2900
      %v2910 = vextract.low.u32 %v2909
      %v2911 = vextract.high.u32 %v2909
      %v2912 = vmul.u32 %v2905, %v2896
      %v2913 = vadd.s32 %v2908, %v2910
      %vm2914 = vc.u32 %v2908, %v2910
      %v2915 = vadd.s32 %v2911, 1
      %v2916 = vsel %vm2914, %v2915, %v2911
      %v2917 = vadd.s32 %v2912, %v2916
      %v2918 = vadd.s32 %v2917, 536870912
      %v2919 = vshrl.u32 %v2918, 30
      %v2920 = vshll.u32 %v2919, 30
      %v2921 = vsub.s32 %v2917, %v2920
      %vm2922 = vcmp.lt.s32.totalorder %v2921, 0
      %v2923 = vsub.s32 0, %v2921
      %v2924 = vsel %vm2922, %v2923, %v2921
      %v2925 = vclz %v2924
      %v2926 = vsub.s32 %v2925, 2
      %vm2927 = vcmp.gt.s32.totalorder 0, %v2926
      %v2928 = vsel %vm2927, 0, %v2926
      %v2929 = vsub.s32 32, %v2928
      %v2930 = vshll.u32 %v2921, %v2928
      %v2931 = vshrl.u32 %v2913, %v2929
      %v2932 = vor.u32 %v2930, %v2931
      %v2933 = vsub.s32 4294967266, %v2928
      %v2934 = vadd.s32 %v2933, 127
      %v2935 = vshll.u32 %v2934, 23
      %v2936 = vor.u32 4788187, %v2935
      %v2937 = vand.u32 2147483647, %v2936
      %v2939 = vcvt.s32.f32 %v2932
      %v2940 = vmul.f32 %v2939, %v2937
      %v2941 = vxor.u32 %v2940, 2147483648
      %v2942 = vsel %vm2859, %v2941, %v2940
      %v2943 = vsub.s32 4, %v2919
      %v2944 = vsel %vm2859, %v2943, %v2919
      %v2945 = vsel %vm2858, %v989, %v2942
      %v2946 = vsel %vm2858, 0, %v2944
      %v2947 = vcosq.f32.pop %v2945
      %v2948 = vsinq.f32.pop %v2945
      %vm2949 = vweird.f32 %v989
      %v2950 = vand.u32 %v2946, 3
      %vm2951 = vcmp.lt.s32.totalorder %v2950, 2
      %vm2952 = vcmp.eq.s32.totalorder %v2950, 0
      %v2953 = vxor.u32 %v2948, 2147483648
      %v2954 = vsel %vm2952, %v2947, %v2953
      %vm2955 = vcmp.eq.s32.totalorder %v2950, 2
      %v2956 = vxor.u32 %v2947, 2147483648
      %v2957 = vsel %vm2955, %v2956, %v2948
      %v2958 = vsel %vm2951, %v2954, %v2957
      %v2959 = vsel %vm2949, nan, %v2958
      %v2960 = vand.u32 2147483647, %v990
      %vm2961 = vcmp.le.f32.partialorder %v2960, 0.7853982
      %vm2962 = vcmp.lt.s32.totalorder %v990, 0
      %v2963 = vand.u32 %v990, 2139095040
      %v2964 = vshrl.u32 %v2963, 23
      %v2965 = vsub.s32 %v2964, 127
      %v2966 = vand.u32 2147483647, %v990
      %v2967 = vand.u32 %v2966, 8388607
      %v2968 = vor.u32 %v2967, 8388608
      %v2969 = vsub.s32 0, %v2968
      %v2970 = vadd.s32 %v2965, 1
      %vm2971 = vcmp.gt.s32.totalorder %v2970, 0
      %v2972 = vsel %vm2971, %v2970, 0
      %v2973 = vshrl.u32 %v2972, 5
      %v2974 = vand.u32 %v2972, 31
      %v2975 = vsub.s32 32, %v2974
      %v2976 = vshrl.u32 683565275, %v2975
      %v2977 = vshll.u32 683565275, %v2974
      %v2978 = vshrl.u32 2475754826, %v2975
      %v2979 = vor.u32 %v2977, %v2978
      %v2980 = vshll.u32 2475754826, %v2974
      %v2981 = vshrl.u32 2131351028, %v2975
      %v2982 = vor.u32 %v2980, %v2981
      %v2983 = vshll.u32 2131351028, %v2974
      %v2984 = vshrl.u32 2102212464, %v2975
      %v2985 = vor.u32 %v2983, %v2984
      %v2986 = vshll.u32 2102212464, %v2974
      %v2987 = vshrl.u32 920167782, %v2975
      %v2988 = vor.u32 %v2986, %v2987
      %v2989 = vshll.u32 920167782, %v2974
      %v2990 = vshrl.u32 1326507024, %v2975
      %v2991 = vor.u32 %v2989, %v2990
      %vm2992 = vcmp.lt.s32.totalorder %v2973, 1
      %vm2993 = vcmp.lt.s32.totalorder %v2973, 2
      %vm2994 = vcmp.lt.s32.totalorder %v2973, 3
      %vm2995 = vcmp.lt.s32.totalorder %v2973, 4
      %v2996 = vsel %vm2992, %v2976, %v2979
      %v2997 = vsel %vm2995, %v2985, 2102212464
      %v2998 = vsel %vm2994, %v2982, %v2997
      %v2999 = vsel %vm2993, %v2996, %v2998
      %v3000 = vsel %vm2992, %v2979, %v2982
      %v3001 = vsel %vm2995, %v2988, 920167782
      %v3002 = vsel %vm2994, %v2985, %v3001
      %v3003 = vsel %vm2993, %v3000, %v3002
      %v3004 = vsel %vm2992, %v2982, %v2985
      %v3005 = vsel %vm2995, %v2991, 1326507024
      %v3006 = vsel %vm2994, %v2988, %v3005
      %v3007 = vsel %vm2993, %v3004, %v3006
      %v3008 = vshll.u32 %v2968, 8
      %v3009 = vmul.u32.u64.compose %v3008, %v3007
      %v3010 = vextract.low.u32 %v3009
      %v3011 = vextract.high.u32 %v3009
      %v3012 = vmul.u32.u64.compose %v3008, %v3003
      %v3013 = vextract.low.u32 %v3012
      %v3014 = vextract.high.u32 %v3012
      %v3015 = vmul.u32 %v3008, %v2999
      %v3016 = vadd.s32 %v3011, %v3013
      %vm3017 = vc.u32 %v3011, %v3013
      %v3018 = vadd.s32 %v3014, 1
      %v3019 = vsel %vm3017, %v3018, %v3014
      %v3020 = vadd.s32 %v3015, %v3019
      %v3021 = vadd.s32 %v3020, 536870912
      %v3022 = vshrl.u32 %v3021, 30
      %v3023 = vshll.u32 %v3022, 30
      %v3024 = vsub.s32 %v3020, %v3023
      %vm3025 = vcmp.lt.s32.totalorder %v3024, 0
      %v3026 = vsub.s32 0, %v3024
      %v3027 = vsel %vm3025, %v3026, %v3024
      %v3028 = vclz %v3027
      %v3029 = vsub.s32 %v3028, 2
      %vm3030 = vcmp.gt.s32.totalorder 0, %v3029
      %v3031 = vsel %vm3030, 0, %v3029
      %v3032 = vsub.s32 32, %v3031
      %v3033 = vshll.u32 %v3024, %v3031
      %v3034 = vshrl.u32 %v3016, %v3032
      %v3035 = vor.u32 %v3033, %v3034
      %v3036 = vsub.s32 4294967266, %v3031
      %v3037 = vadd.s32 %v3036, 127
      %v3038 = vshll.u32 %v3037, 23
      %v3039 = vor.u32 4788187, %v3038
      %v3040 = vand.u32 2147483647, %v3039
      %v3042 = vcvt.s32.f32 %v3035
      %v3043 = vmul.f32 %v3042, %v3040
      %v3044 = vxor.u32 %v3043, 2147483648
      %v3045 = vsel %vm2962, %v3044, %v3043
      %v3046 = vsub.s32 4, %v3022
      %v3047 = vsel %vm2962, %v3046, %v3022
      %v3048 = vsel %vm2961, %v990, %v3045
      %v3049 = vsel %vm2961, 0, %v3047
      %v3050 = vcosq.f32.pop %v3048
      %v3051 = vsinq.f32.pop %v3048
      %vm3052 = vweird.f32 %v990
      %v3053 = vand.u32 %v3049, 3
      %vm3054 = vcmp.lt.s32.totalorder %v3053, 2
      %vm3055 = vcmp.eq.s32.totalorder %v3053, 0
      %v3056 = vxor.u32 %v3051, 2147483648
      %v3057 = vsel %vm3055, %v3050, %v3056
      %vm3058 = vcmp.eq.s32.totalorder %v3053, 2
      %v3059 = vxor.u32 %v3050, 2147483648
      %v3060 = vsel %vm3058, %v3059, %v3051
      %v3061 = vsel %vm3054, %v3057, %v3060
      %v3062 = vsel %vm3052, nan, %v3061
      %v3063 = vand.u32 2147483647, %v1407
      %vm3064 = vcmp.le.f32.partialorder %v3063, 0.7853982
      %vm3065 = vcmp.lt.s32.totalorder %v1407, 0
      %v3066 = vand.u32 %v1407, 2139095040
      %v3067 = vshrl.u32 %v3066, 23
      %v3068 = vsub.s32 %v3067, 127
      %v3069 = vand.u32 2147483647, %v1407
      %v3070 = vand.u32 %v3069, 8388607
      %v3071 = vor.u32 %v3070, 8388608
      %v3072 = vsub.s32 0, %v3071
      %v3073 = vadd.s32 %v3068, 1
      %vm3074 = vcmp.gt.s32.totalorder %v3073, 0
      %v3075 = vsel %vm3074, %v3073, 0
      %v3076 = vshrl.u32 %v3075, 5
      %v3077 = vand.u32 %v3075, 31
      %v3078 = vsub.s32 32, %v3077
      %v3079 = vshrl.u32 683565275, %v3078
      %v3080 = vshll.u32 683565275, %v3077
      %v3081 = vshrl.u32 2475754826, %v3078
      %v3082 = vor.u32 %v3080, %v3081
      %v3083 = vshll.u32 2475754826, %v3077
      %v3084 = vshrl.u32 2131351028, %v3078
      %v3085 = vor.u32 %v3083, %v3084
      %v3086 = vshll.u32 2131351028, %v3077
      %v3087 = vshrl.u32 2102212464, %v3078
      %v3088 = vor.u32 %v3086, %v3087
      %v3089 = vshll.u32 2102212464, %v3077
      %v3090 = vshrl.u32 920167782, %v3078
      %v3091 = vor.u32 %v3089, %v3090
      %v3092 = vshll.u32 920167782, %v3077
      %v3093 = vshrl.u32 1326507024, %v3078
      %v3094 = vor.u32 %v3092, %v3093
      %vm3095 = vcmp.lt.s32.totalorder %v3076, 1
      %vm3096 = vcmp.lt.s32.totalorder %v3076, 2
      %vm3097 = vcmp.lt.s32.totalorder %v3076, 3
      %vm3098 = vcmp.lt.s32.totalorder %v3076, 4
      %v3099 = vsel %vm3095, %v3079, %v3082
      %v3100 = vsel %vm3098, %v3088, 2102212464
      %v3101 = vsel %vm3097, %v3085, %v3100
      %v3102 = vsel %vm3096, %v3099, %v3101
      %v3103 = vsel %vm3095, %v3082, %v3085
      %v3104 = vsel %vm3098, %v3091, 920167782
      %v3105 = vsel %vm3097, %v3088, %v3104
      %v3106 = vsel %vm3096, %v3103, %v3105
      %v3107 = vsel %vm3095, %v3085, %v3088
      %v3108 = vsel %vm3098, %v3094, 1326507024
      %v3109 = vsel %vm3097, %v3091, %v3108
      %v3110 = vsel %vm3096, %v3107, %v3109
      %v3111 = vshll.u32 %v3071, 8
      %v3112 = vmul.u32.u64.compose %v3111, %v3110
      %v3113 = vextract.low.u32 %v3112
      %v3114 = vextract.high.u32 %v3112
      %v3115 = vmul.u32.u64.compose %v3111, %v3106
      %v3116 = vextract.low.u32 %v3115
      %v3117 = vextract.high.u32 %v3115
      %v3118 = vmul.u32 %v3111, %v3102
      %v3119 = vadd.s32 %v3114, %v3116
      %vm3120 = vc.u32 %v3114, %v3116
      %v3121 = vadd.s32 %v3117, 1
      %v3122 = vsel %vm3120, %v3121, %v3117
      %v3123 = vadd.s32 %v3118, %v3122
      %v3124 = vadd.s32 %v3123, 536870912
      %v3125 = vshrl.u32 %v3124, 30
      %v3126 = vshll.u32 %v3125, 30
      %v3127 = vsub.s32 %v3123, %v3126
      %vm3128 = vcmp.lt.s32.totalorder %v3127, 0
      %v3129 = vsub.s32 0, %v3127
      %v3130 = vsel %vm3128, %v3129, %v3127
      %v3131 = vclz %v3130
      %v3132 = vsub.s32 %v3131, 2
      %vm3133 = vcmp.gt.s32.totalorder 0, %v3132
      %v3134 = vsel %vm3133, 0, %v3132
      %v3135 = vsub.s32 32, %v3134
      %v3136 = vshll.u32 %v3127, %v3134
      %v3137 = vshrl.u32 %v3119, %v3135
      %v3138 = vor.u32 %v3136, %v3137
      %v3139 = vsub.s32 4294967266, %v3134
      %v3140 = vadd.s32 %v3139, 127
      %v3141 = vshll.u32 %v3140, 23
      %v3142 = vor.u32 4788187, %v3141
      %v3143 = vand.u32 2147483647, %v3142
      %v3145 = vcvt.s32.f32 %v3138
      %v3146 = vmul.f32 %v3145, %v3143
      %v3147 = vxor.u32 %v3146, 2147483648
      %v3148 = vsel %vm3065, %v3147, %v3146
      %v3149 = vsub.s32 4, %v3125
      %v3150 = vsel %vm3065, %v3149, %v3125
      %v3151 = vsel %vm3064, %v1407, %v3148
      %v3152 = vsel %vm3064, 0, %v3150
      %v3153 = vcosq.f32.pop %v3151
      %v3154 = vsinq.f32.pop %v3151
      %vm3155 = vweird.f32 %v1407
      %v3156 = vand.u32 %v3152, 3
      %vm3157 = vcmp.lt.s32.totalorder %v3156, 2
      %vm3158 = vcmp.eq.s32.totalorder %v3156, 0
      %v3159 = vxor.u32 %v3154, 2147483648
      %v3160 = vsel %vm3158, %v3153, %v3159
      %vm3161 = vcmp.eq.s32.totalorder %v3156, 2
      %v3162 = vxor.u32 %v3153, 2147483648
      %v3163 = vsel %vm3161, %v3162, %v3154
      %v3164 = vsel %vm3157, %v3160, %v3163
      %v3165 = vsel %vm3155, nan, %v3164
      %v3166 = vand.u32 2147483647, %v1408
      %vm3167 = vcmp.le.f32.partialorder %v3166, 0.7853982
      %vm3168 = vcmp.lt.s32.totalorder %v1408, 0
      %v3169 = vand.u32 %v1408, 2139095040
      %v3170 = vshrl.u32 %v3169, 23
      %v3171 = vsub.s32 %v3170, 127
      %v3172 = vand.u32 2147483647, %v1408
      %v3173 = vand.u32 %v3172, 8388607
      %v3174 = vor.u32 %v3173, 8388608
      %v3175 = vsub.s32 0, %v3174
      %v3176 = vadd.s32 %v3171, 1
      %vm3177 = vcmp.gt.s32.totalorder %v3176, 0
      %v3178 = vsel %vm3177, %v3176, 0
      %v3179 = vshrl.u32 %v3178, 5
      %v3180 = vand.u32 %v3178, 31
      %v3181 = vsub.s32 32, %v3180
      %v3182 = vshrl.u32 683565275, %v3181
      %v3183 = vshll.u32 683565275, %v3180
      %v3184 = vshrl.u32 2475754826, %v3181
      %v3185 = vor.u32 %v3183, %v3184
      %v3186 = vshll.u32 2475754826, %v3180
      %v3187 = vshrl.u32 2131351028, %v3181
      %v3188 = vor.u32 %v3186, %v3187
      %v3189 = vshll.u32 2131351028, %v3180
      %v3190 = vshrl.u32 2102212464, %v3181
      %v3191 = vor.u32 %v3189, %v3190
      %v3192 = vshll.u32 2102212464, %v3180
      %v3193 = vshrl.u32 920167782, %v3181
      %v3194 = vor.u32 %v3192, %v3193
      %v3195 = vshll.u32 920167782, %v3180
      %v3196 = vshrl.u32 1326507024, %v3181
      %v3197 = vor.u32 %v3195, %v3196
      %vm3198 = vcmp.lt.s32.totalorder %v3179, 1
      %vm3199 = vcmp.lt.s32.totalorder %v3179, 2
      %vm3200 = vcmp.lt.s32.totalorder %v3179, 3
      %vm3201 = vcmp.lt.s32.totalorder %v3179, 4
      %v3202 = vsel %vm3198, %v3182, %v3185
      %v3203 = vsel %vm3201, %v3191, 2102212464
      %v3204 = vsel %vm3200, %v3188, %v3203
      %v3205 = vsel %vm3199, %v3202, %v3204
      %v3206 = vsel %vm3198, %v3185, %v3188
      %v3207 = vsel %vm3201, %v3194, 920167782
      %v3208 = vsel %vm3200, %v3191, %v3207
      %v3209 = vsel %vm3199, %v3206, %v3208
      %v3210 = vsel %vm3198, %v3188, %v3191
      %v3211 = vsel %vm3201, %v3197, 1326507024
      %v3212 = vsel %vm3200, %v3194, %v3211
      %v3213 = vsel %vm3199, %v3210, %v3212
      %v3214 = vshll.u32 %v3174, 8
      %v3215 = vmul.u32.u64.compose %v3214, %v3213
      %v3216 = vextract.low.u32 %v3215
      %v3217 = vextract.high.u32 %v3215
      %v3218 = vmul.u32.u64.compose %v3214, %v3209
      %v3219 = vextract.low.u32 %v3218
      %v3220 = vextract.high.u32 %v3218
      %v3221 = vmul.u32 %v3214, %v3205
      %v3222 = vadd.s32 %v3217, %v3219
      %vm3223 = vc.u32 %v3217, %v3219
      %v3224 = vadd.s32 %v3220, 1
      %v3225 = vsel %vm3223, %v3224, %v3220
      %v3226 = vadd.s32 %v3221, %v3225
      %v3227 = vadd.s32 %v3226, 536870912
      %v3228 = vshrl.u32 %v3227, 30
      %v3229 = vshll.u32 %v3228, 30
      %v3230 = vsub.s32 %v3226, %v3229
      %vm3231 = vcmp.lt.s32.totalorder %v3230, 0
      %v3232 = vsub.s32 0, %v3230
      %v3233 = vsel %vm3231, %v3232, %v3230
      %v3234 = vclz %v3233
      %v3235 = vsub.s32 %v3234, 2
      %vm3236 = vcmp.gt.s32.totalorder 0, %v3235
      %v3237 = vsel %vm3236, 0, %v3235
      %v3238 = vsub.s32 32, %v3237
      %v3239 = vshll.u32 %v3230, %v3237
      %v3240 = vshrl.u32 %v3222, %v3238
      %v3241 = vor.u32 %v3239, %v3240
      %v3242 = vsub.s32 4294967266, %v3237
      %v3243 = vadd.s32 %v3242, 127
      %v3244 = vshll.u32 %v3243, 23
      %v3245 = vor.u32 4788187, %v3244
      %v3246 = vand.u32 2147483647, %v3245
      %v3248 = vcvt.s32.f32 %v3241
      %v3249 = vmul.f32 %v3248, %v3246
      %v3250 = vxor.u32 %v3249, 2147483648
      %v3251 = vsel %vm3168, %v3250, %v3249
      %v3252 = vsub.s32 4, %v3228
      %v3253 = vsel %vm3168, %v3252, %v3228
      %v3254 = vsel %vm3167, %v1408, %v3251
      %v3255 = vsel %vm3167, 0, %v3253
      %v3256 = vcosq.f32.pop %v3254
      %v3257 = vsinq.f32.pop %v3254
      %vm3258 = vweird.f32 %v1408
      %v3259 = vand.u32 %v3255, 3
      %vm3260 = vcmp.lt.s32.totalorder %v3259, 2
      %vm3261 = vcmp.eq.s32.totalorder %v3259, 0
      %v3262 = vxor.u32 %v3257, 2147483648
      %v3263 = vsel %vm3261, %v3256, %v3262
      %vm3264 = vcmp.eq.s32.totalorder %v3259, 2
      %v3265 = vxor.u32 %v3256, 2147483648
      %v3266 = vsel %vm3264, %v3265, %v3257
      %v3267 = vsel %vm3260, %v3263, %v3266
      %v3268 = vsel %vm3258, nan, %v3267
      %v3269 = vand.u32 2147483647, %v1409
      %vm3270 = vcmp.le.f32.partialorder %v3269, 0.7853982
      %vm3271 = vcmp.lt.s32.totalorder %v1409, 0
      %v3272 = vand.u32 %v1409, 2139095040
      %v3273 = vshrl.u32 %v3272, 23
      %v3274 = vsub.s32 %v3273, 127
      %v3275 = vand.u32 2147483647, %v1409
      %v3276 = vand.u32 %v3275, 8388607
      %v3277 = vor.u32 %v3276, 8388608
      %v3278 = vsub.s32 0, %v3277
      %v3279 = vadd.s32 %v3274, 1
      %vm3280 = vcmp.gt.s32.totalorder %v3279, 0
      %v3281 = vsel %vm3280, %v3279, 0
      %v3282 = vshrl.u32 %v3281, 5
      %v3283 = vand.u32 %v3281, 31
      %v3284 = vsub.s32 32, %v3283
      %v3285 = vshrl.u32 683565275, %v3284
      %v3286 = vshll.u32 683565275, %v3283
      %v3287 = vshrl.u32 2475754826, %v3284
      %v3288 = vor.u32 %v3286, %v3287
      %v3289 = vshll.u32 2475754826, %v3283
      %v3290 = vshrl.u32 2131351028, %v3284
      %v3291 = vor.u32 %v3289, %v3290
      %v3292 = vshll.u32 2131351028, %v3283
      %v3293 = vshrl.u32 2102212464, %v3284
      %v3294 = vor.u32 %v3292, %v3293
      %v3295 = vshll.u32 2102212464, %v3283
      %v3296 = vshrl.u32 920167782, %v3284
      %v3297 = vor.u32 %v3295, %v3296
      %v3298 = vshll.u32 920167782, %v3283
      %v3299 = vshrl.u32 1326507024, %v3284
      %v3300 = vor.u32 %v3298, %v3299
      %vm3301 = vcmp.lt.s32.totalorder %v3282, 1
      %vm3302 = vcmp.lt.s32.totalorder %v3282, 2
      %vm3303 = vcmp.lt.s32.totalorder %v3282, 3
      %vm3304 = vcmp.lt.s32.totalorder %v3282, 4
      %v3305 = vsel %vm3301, %v3285, %v3288
      %v3306 = vsel %vm3304, %v3294, 2102212464
      %v3307 = vsel %vm3303, %v3291, %v3306
      %v3308 = vsel %vm3302, %v3305, %v3307
      %v3309 = vsel %vm3301, %v3288, %v3291
      %v3310 = vsel %vm3304, %v3297, 920167782
      %v3311 = vsel %vm3303, %v3294, %v3310
      %v3312 = vsel %vm3302, %v3309, %v3311
      %v3313 = vsel %vm3301, %v3291, %v3294
      %v3314 = vsel %vm3304, %v3300, 1326507024
      %v3315 = vsel %vm3303, %v3297, %v3314
      %v3316 = vsel %vm3302, %v3313, %v3315
      %v3317 = vshll.u32 %v3277, 8
      %v3318 = vmul.u32.u64.compose %v3317, %v3316
      %v3319 = vextract.low.u32 %v3318
      %v3320 = vextract.high.u32 %v3318
      %v3321 = vmul.u32.u64.compose %v3317, %v3312
      %v3322 = vextract.low.u32 %v3321
      %v3323 = vextract.high.u32 %v3321
      %v3324 = vmul.u32 %v3317, %v3308
      %v3325 = vadd.s32 %v3320, %v3322
      %vm3326 = vc.u32 %v3320, %v3322
      %v3327 = vadd.s32 %v3323, 1
      %v3328 = vsel %vm3326, %v3327, %v3323
      %v3329 = vadd.s32 %v3324, %v3328
      %v3330 = vadd.s32 %v3329, 536870912
      %v3331 = vshrl.u32 %v3330, 30
      %v3332 = vshll.u32 %v3331, 30
      %v3333 = vsub.s32 %v3329, %v3332
      %vm3334 = vcmp.lt.s32.totalorder %v3333, 0
      %v3335 = vsub.s32 0, %v3333
      %v3336 = vsel %vm3334, %v3335, %v3333
      %v3337 = vclz %v3336
      %v3338 = vsub.s32 %v3337, 2
      %vm3339 = vcmp.gt.s32.totalorder 0, %v3338
      %v3340 = vsel %vm3339, 0, %v3338
      %v3341 = vsub.s32 32, %v3340
      %v3342 = vshll.u32 %v3333, %v3340
      %v3343 = vshrl.u32 %v3325, %v3341
      %v3344 = vor.u32 %v3342, %v3343
      %v3345 = vsub.s32 4294967266, %v3340
      %v3346 = vadd.s32 %v3345, 127
      %v3347 = vshll.u32 %v3346, 23
      %v3348 = vor.u32 4788187, %v3347
      %v3349 = vand.u32 2147483647, %v3348
      %v3351 = vcvt.s32.f32 %v3344
      %v3352 = vmul.f32 %v3351, %v3349
      %v3353 = vxor.u32 %v3352, 2147483648
      %v3354 = vsel %vm3271, %v3353, %v3352
      %v3355 = vsub.s32 4, %v3331
      %v3356 = vsel %vm3271, %v3355, %v3331
      %v3357 = vsel %vm3270, %v1409, %v3354
      %v3358 = vsel %vm3270, 0, %v3356
      %v3359 = vcosq.f32.pop %v3357
      %v3360 = vsinq.f32.pop %v3357
      %vm3361 = vweird.f32 %v1409
      %v3362 = vand.u32 %v3358, 3
      %vm3363 = vcmp.lt.s32.totalorder %v3362, 2
      %vm3364 = vcmp.eq.s32.totalorder %v3362, 0
      %v3365 = vxor.u32 %v3360, 2147483648
      %v3366 = vsel %vm3364, %v3359, %v3365
      %vm3367 = vcmp.eq.s32.totalorder %v3362, 2
      %v3368 = vxor.u32 %v3359, 2147483648
      %v3369 = vsel %vm3367, %v3368, %v3360
      %v3370 = vsel %vm3363, %v3366, %v3369
      %v3371 = vsel %vm3361, nan, %v3370
      %v3372 = vand.u32 2147483647, %v1410
      %vm3373 = vcmp.le.f32.partialorder %v3372, 0.7853982
      %vm3374 = vcmp.lt.s32.totalorder %v1410, 0
      %v3375 = vand.u32 %v1410, 2139095040
      %v3376 = vshrl.u32 %v3375, 23
      %v3377 = vsub.s32 %v3376, 127
      %v3378 = vand.u32 2147483647, %v1410
      %v3379 = vand.u32 %v3378, 8388607
      %v3380 = vor.u32 %v3379, 8388608
      %v3381 = vsub.s32 0, %v3380
      %v3382 = vadd.s32 %v3377, 1
      %vm3383 = vcmp.gt.s32.totalorder %v3382, 0
      %v3384 = vsel %vm3383, %v3382, 0
      %v3385 = vshrl.u32 %v3384, 5
      %v3386 = vand.u32 %v3384, 31
      %v3387 = vsub.s32 32, %v3386
      %v3388 = vshrl.u32 683565275, %v3387
      %v3389 = vshll.u32 683565275, %v3386
      %v3390 = vshrl.u32 2475754826, %v3387
      %v3391 = vor.u32 %v3389, %v3390
      %v3392 = vshll.u32 2475754826, %v3386
      %v3393 = vshrl.u32 2131351028, %v3387
      %v3394 = vor.u32 %v3392, %v3393
      %v3395 = vshll.u32 2131351028, %v3386
      %v3396 = vshrl.u32 2102212464, %v3387
      %v3397 = vor.u32 %v3395, %v3396
      %v3398 = vshll.u32 2102212464, %v3386
      %v3399 = vshrl.u32 920167782, %v3387
      %v3400 = vor.u32 %v3398, %v3399
      %v3401 = vshll.u32 920167782, %v3386
      %v3402 = vshrl.u32 1326507024, %v3387
      %v3403 = vor.u32 %v3401, %v3402
      %vm3404 = vcmp.lt.s32.totalorder %v3385, 1
      %vm3405 = vcmp.lt.s32.totalorder %v3385, 2
      %vm3406 = vcmp.lt.s32.totalorder %v3385, 3
      %vm3407 = vcmp.lt.s32.totalorder %v3385, 4
      %v3408 = vsel %vm3404, %v3388, %v3391
      %v3409 = vsel %vm3407, %v3397, 2102212464
      %v3410 = vsel %vm3406, %v3394, %v3409
      %v3411 = vsel %vm3405, %v3408, %v3410
      %v3412 = vsel %vm3404, %v3391, %v3394
      %v3413 = vsel %vm3407, %v3400, 920167782
      %v3414 = vsel %vm3406, %v3397, %v3413
      %v3415 = vsel %vm3405, %v3412, %v3414
      %v3416 = vsel %vm3404, %v3394, %v3397
      %v3417 = vsel %vm3407, %v3403, 1326507024
      %v3418 = vsel %vm3406, %v3400, %v3417
      %v3419 = vsel %vm3405, %v3416, %v3418
      %v3420 = vshll.u32 %v3380, 8
      %v3421 = vmul.u32.u64.compose %v3420, %v3419
      %v3422 = vextract.low.u32 %v3421
      %v3423 = vextract.high.u32 %v3421
      %v3424 = vmul.u32.u64.compose %v3420, %v3415
      %v3425 = vextract.low.u32 %v3424
      %v3426 = vextract.high.u32 %v3424
      %v3427 = vmul.u32 %v3420, %v3411
      %v3428 = vadd.s32 %v3423, %v3425
      %vm3429 = vc.u32 %v3423, %v3425
      %v3430 = vadd.s32 %v3426, 1
      %v3431 = vsel %vm3429, %v3430, %v3426
      %v3432 = vadd.s32 %v3427, %v3431
      %v3433 = vadd.s32 %v3432, 536870912
      %v3434 = vshrl.u32 %v3433, 30
      %v3435 = vshll.u32 %v3434, 30
      %v3436 = vsub.s32 %v3432, %v3435
      %vm3437 = vcmp.lt.s32.totalorder %v3436, 0
      %v3438 = vsub.s32 0, %v3436
      %v3439 = vsel %vm3437, %v3438, %v3436
      %v3440 = vclz %v3439
      %v3441 = vsub.s32 %v3440, 2
      %vm3442 = vcmp.gt.s32.totalorder 0, %v3441
      %v3443 = vsel %vm3442, 0, %v3441
      %v3444 = vsub.s32 32, %v3443
      %v3445 = vshll.u32 %v3436, %v3443
      %v3446 = vshrl.u32 %v3428, %v3444
      %v3447 = vor.u32 %v3445, %v3446
      %v3448 = vsub.s32 4294967266, %v3443
      %v3449 = vadd.s32 %v3448, 127
      %v3450 = vshll.u32 %v3449, 23
      %v3451 = vor.u32 4788187, %v3450
      %v3452 = vand.u32 2147483647, %v3451
      %v3454 = vcvt.s32.f32 %v3447
      %v3455 = vmul.f32 %v3454, %v3452
      %v3456 = vxor.u32 %v3455, 2147483648
      %v3457 = vsel %vm3374, %v3456, %v3455
      %v3458 = vsub.s32 4, %v3434
      %v3459 = vsel %vm3374, %v3458, %v3434
      %v3460 = vsel %vm3373, %v1410, %v3457
      %v3461 = vsel %vm3373, 0, %v3459
      %v3462 = vcosq.f32.pop %v3460
      %v3463 = vsinq.f32.pop %v3460
      %vm3464 = vweird.f32 %v1410
      %v3465 = vand.u32 %v3461, 3
      %vm3466 = vcmp.lt.s32.totalorder %v3465, 2
      %vm3467 = vcmp.eq.s32.totalorder %v3465, 0
      %v3468 = vxor.u32 %v3463, 2147483648
      %v3469 = vsel %vm3467, %v3462, %v3468
      %vm3470 = vcmp.eq.s32.totalorder %v3465, 2
      %v3471 = vxor.u32 %v3462, 2147483648
      %v3472 = vsel %vm3470, %v3471, %v3463
      %v3473 = vsel %vm3466, %v3469, %v3472
      %v3474 = vsel %vm3464, nan, %v3473
      %v3475 = vld [vmem:[%s1] sm:$0xff]
      %v3476 = vld [vmem:[%s1 + $0x8] sm:$0xff]
      %v3477 = vld [vmem:[%s1 + $0x10] sm:$0xff]
      %v3478 = vld [vmem:[%s1 + $0x18] sm:$0xff]
      %vm3479 = vcmask 523264
      %v3481 = vsel %vm3479, %v3475, 0
      %v3484 = vsel %vm3479, %v3476, 0
      %v3487 = vsel %vm3479, %v3477, 0
      %v3490 = vsel %vm3479, %v3478, 0
      %3492 = vmatprep.subr.mxu0 %v358
      %3493 = vmatpush1.msra.mxu0 %v254
      %3494 = vmatprep.subr.mxu0 %v778
      %3495 = vmatpush1.msra.mxu0 %v674
      %3496 = vmatprep.subr.mxu0 %v1198
      %3497 = vmatpush1.msra.mxu0 %v1094
      %3498 = vmatprep.subr.mxu0 %v1618
      %3499 = vmatpush1.msra.mxu0 %v1514
      %3500 = vmatprep.subr.mxu0 %v2032
      %3501 = vmatpush1.msra.mxu0 %v1929
      %3502 = vmatprep.subr.mxu0 %v2444
      %3503 = vmatpush1.msra.mxu0 %v2341
      %3504 = vmatprep.subr.mxu0 %v2856
      %3505 = vmatpush1.msra.mxu0 %v2753
      %3506 = vmatprep.subr.mxu0 %v3268
      %3507 = vmatpush1.msra.mxu0 %v3165
      %3508 = vmatprep.subr.mxu0 0.0
      %3509 = vmatpush1.msra.mxu0 0.0
      %3510 = vmatprep.subr.mxu0 0.0
      %3511 = vmatpush1.msra.mxu0 0.0
      %3512 = vmatprep.subr.mxu0 0.0
      %3513 = vmatpush1.msra.mxu0 0.0
      %3514 = vmatprep.subr.mxu0 0.0
      %3515 = vmatpush1.msra.mxu0 0.0
      %3516 = vmatprep.subr.mxu0 0.0
      %3517 = vmatpush1.msra.mxu0 0.0
      %3518 = vmatprep.subr.mxu0 0.0
      %3519 = vmatpush1.msra.mxu0 0.0
      %3520 = vmatprep.subr.mxu0 0.0
      %3521 = vmatpush1.msra.mxu0 0.0
      %3522 = vmatprep.subr.mxu0 0.0
      %3523 = vmatpush1.msra.mxu0 0.0
      %3524 = vmatprep.subr.mxu0 0.0
      %3525 = vmatpush1.msra.mxu0 0.0
      %3526 = vmatprep.subr.mxu0 0.0
      %3527 = vmatpush1.msra.mxu0 0.0
      %3528 = vmatprep.subr.mxu0 0.0
      %3529 = vmatpush1.msra.mxu0 0.0
      %3530 = vmatprep.subr.mxu0 0.0
      %3531 = vmatpush1.msra.mxu0 0.0
      %3532 = vmatprep.subr.mxu0 0.0
      %3533 = vmatpush1.msra.mxu0 0.0
      %3534 = vmatprep.subr.mxu0 0.0
      %3535 = vmatpush1.msra.mxu0 0.0
      %3536 = vmatprep.subr.mxu0 0.0
      %3537 = vmatpush1.msra.mxu0 0.0
      %3538 = vmatprep.subr.mxu0 0.0
      %3539 = vmatpush1.msra.mxu0 0.0
      %3540 = vmatprep.subr.mxu0 0.0
      %3541 = vmatpush1.msra.mxu0 0.0
      %3542 = vmatprep.subr.mxu0 0.0
      %3543 = vmatpush1.msra.mxu0 0.0
      %3544 = vmatprep.subr.mxu0 0.0
      %3545 = vmatpush1.msra.mxu0 0.0
      %3546 = vmatprep.subr.mxu0 0.0
      %3547 = vmatpush1.msra.mxu0 0.0
      %3548 = vmatprep.subr.mxu0 0.0
      %3549 = vmatpush1.msra.mxu0 0.0
      %3550 = vmatprep.subr.mxu0 0.0
      %3551 = vmatpush1.msra.mxu0 0.0
      %3552 = vmatprep.subr.mxu0 0.0
      %3553 = vmatpush1.msra.mxu0 0.0
      %3554 = vmatprep.subr.mxu0 0.0
      %3555 = vmatpush1.msra.mxu0 0.0
      %3556 = vmatprep.mubr.f32.mxu0 0.0
      %3557 = vmatmul.mubr.f32.gmra.mrb[0].mxu0 %v3481
      %v3558 = vpop.f32.mrb[0].mxu0
      %v3559 = vadd.f32 0.0, %v3558
      %v3560 = vpop.f32.mrb[0].mxu0
      %v3561 = vadd.f32 0.0, %v3560
      %3562 = vmatprep.mubr.f32.mxu0 0.0
      %3563 = vmatmul.mubr.f32.gmra.mrb[0].mxu0 %v3484
      %v3564 = vpop.f32.mrb[0].mxu0
      %v3565 = vadd.f32 0.0, %v3564
      %v3566 = vpop.f32.mrb[0].mxu0
      %v3567 = vadd.f32 0.0, %v3566
      %3568 = vmatprep.mubr.f32.mxu0 0.0
      %3569 = vmatmul.mubr.f32.gmra.mrb[0].mxu0 %v3487
      %v3570 = vpop.f32.mrb[0].mxu0
      %v3571 = vadd.f32 0.0, %v3570
      %v3572 = vpop.f32.mrb[0].mxu0
      %v3573 = vadd.f32 0.0, %v3572
      %3574 = vmatprep.mubr.f32.mxu0 0.0
      %3575 = vmatmul.mubr.f32.gmra.mrb[0].mxu0 %v3490
      %v3576 = vpop.f32.mrb[0].mxu0
      %v3577 = vadd.f32 0.0, %v3576
      %v3578 = vpop.f32.mrb[0].mxu0
      %v3579 = vadd.f32 0.0, %v3578
      %3580 = vdwg.mxu0
      %3581 = vmatprep.subr.mxu0 %v566
      %3582 = vmatpush1.msra.mxu0 %v462
      %3583 = vmatprep.subr.mxu0 %v986
      %3584 = vmatpush1.msra.mxu0 %v882
      %3585 = vmatprep.subr.mxu0 %v1406
      %3586 = vmatpush1.msra.mxu0 %v1302
      %3587 = vmatprep.subr.mxu0 %v1826
      %3588 = vmatpush1.msra.mxu0 %v1722
      %3589 = vmatprep.subr.mxu0 %v2238
      %3590 = vmatpush1.msra.mxu0 %v2135
      %3591 = vmatprep.subr.mxu0 %v2650
      %3592 = vmatpush1.msra.mxu0 %v2547
      %3593 = vmatprep.subr.mxu0 %v3062
      %3594 = vmatpush1.msra.mxu0 %v2959
      %3595 = vmatprep.subr.mxu0 %v3474
      %3596 = vmatpush1.msra.mxu0 %v3371
      %3597 = vmatprep.subr.mxu0 0.0
      %3598 = vmatpush1.msra.mxu0 0.0
      %3599 = vmatprep.subr.mxu0 0.0
      %3600 = vmatpush1.msra.mxu0 0.0
      %3601 = vmatprep.subr.mxu0 0.0
      %3602 = vmatpush1.msra.mxu0 0.0
      %3603 = vmatprep.subr.mxu0 0.0
      %3604 = vmatpush1.msra.mxu0 0.0
      %3605 = vmatprep.subr.mxu0 0.0
      %3606 = vmatpush1.msra.mxu0 0.0
      %3607 = vmatprep.subr.mxu0 0.0
      %3608 = vmatpush1.msra.mxu0 0.0
      %3609 = vmatprep.subr.mxu0 0.0
      %3610 = vmatpush1.msra.mxu0 0.0
      %3611 = vmatprep.subr.mxu0 0.0
      %3612 = vmatpush1.msra.mxu0 0.0
      %3613 = vmatprep.subr.mxu0 0.0
      %3614 = vmatpush1.msra.mxu0 0.0
      %3615 = vmatprep.subr.mxu0 0.0
      %3616 = vmatpush1.msra.mxu0 0.0
      %3617 = vmatprep.subr.mxu0 0.0
      %3618 = vmatpush1.msra.mxu0 0.0
      %3619 = vmatprep.subr.mxu0 0.0
      %3620 = vmatpush1.msra.mxu0 0.0
      %3621 = vmatprep.subr.mxu0 0.0
      %3622 = vmatpush1.msra.mxu0 0.0
      %3623 = vmatprep.subr.mxu0 0.0
      %3624 = vmatpush1.msra.mxu0 0.0
      %3625 = vmatprep.subr.mxu0 0.0
      %3626 = vmatpush1.msra.mxu0 0.0
      %3627 = vmatprep.subr.mxu0 0.0
      %3628 = vmatpush1.msra.mxu0 0.0
      %3629 = vmatprep.subr.mxu0 0.0
      %3630 = vmatpush1.msra.mxu0 0.0
      %3631 = vmatprep.subr.mxu0 0.0
      %3632 = vmatpush1.msra.mxu0 0.0
      %3633 = vmatprep.subr.mxu0 0.0
      %3634 = vmatpush1.msra.mxu0 0.0
      %3635 = vmatprep.subr.mxu0 0.0
      %3636 = vmatpush1.msra.mxu0 0.0
      %3637 = vmatprep.subr.mxu0 0.0
      %3638 = vmatpush1.msra.mxu0 0.0
      %3639 = vmatprep.subr.mxu0 0.0
      %3640 = vmatpush1.msra.mxu0 0.0
      %3641 = vmatprep.subr.mxu0 0.0
      %3642 = vmatpush1.msra.mxu0 0.0
      %3643 = vmatprep.subr.mxu0 0.0
      %3644 = vmatpush1.msra.mxu0 0.0
      %3645 = vmatprep.mubr.f32.mxu0 0.0
      %3646 = vmatmul.mubr.f32.gmra.mrb[0].mxu0 %v3481
      %v3647 = vpop.f32.mrb[0].mxu0
      %v3648 = vadd.f32 0.0, %v3647
      %v3649 = vpop.f32.mrb[0].mxu0
      %v3650 = vadd.f32 0.0, %v3649
      %3651 = vmatprep.mubr.f32.mxu0 0.0
      %3652 = vmatmul.mubr.f32.gmra.mrb[0].mxu0 %v3484
      %v3653 = vpop.f32.mrb[0].mxu0
      %v3654 = vadd.f32 0.0, %v3653
      %v3655 = vpop.f32.mrb[0].mxu0
      %v3656 = vadd.f32 0.0, %v3655
      %3657 = vmatprep.mubr.f32.mxu0 0.0
      %3658 = vmatmul.mubr.f32.gmra.mrb[0].mxu0 %v3487
      %v3659 = vpop.f32.mrb[0].mxu0
      %v3660 = vadd.f32 0.0, %v3659
      %v3661 = vpop.f32.mrb[0].mxu0
      %v3662 = vadd.f32 0.0, %v3661
      %3663 = vmatprep.mubr.f32.mxu0 0.0
      %3664 = vmatmul.mubr.f32.gmra.mrb[0].mxu0 %v3490
      %v3665 = vpop.f32.mrb[0].mxu0
      %v3666 = vadd.f32 0.0, %v3665
      %v3667 = vpop.f32.mrb[0].mxu0
      %v3668 = vadd.f32 0.0, %v3667
      %3669 = vdwg.mxu0
      %v3670 = vmul.f32 %v3559, %v3577
      %v3671 = vmul.f32 %v3561, %v3579
      %v3672 = vmul.f32 %v3648, %v3666
      %v3673 = vmul.f32 %v3650, %v3668
      %v3674 = vrot.slane %v3670, 4
      %v3675 = vadd.f32 %v3670, %v3674
      %v3676 = vrot.slane %v3675, 2
      %v3677 = vadd.f32 %v3675, %v3676
      %v3678 = vrot.slane %v3677, 1
      %v3679 = vadd.f32 %v3677, %v3678
      %v3680 = vrot.slane %v3671, 4
      %v3681 = vadd.f32 %v3671, %v3680
      %v3682 = vrot.slane %v3681, 2
      %v3683 = vadd.f32 %v3681, %v3682
      %v3684 = vrot.slane %v3683, 1
      %v3685 = vadd.f32 %v3683, %v3684
      %v3686 = vrot.slane %v3672, 4
      %v3687 = vadd.f32 %v3672, %v3686
      %v3688 = vrot.slane %v3687, 2
      %v3689 = vadd.f32 %v3687, %v3688
      %v3690 = vrot.slane %v3689, 1
      %v3691 = vadd.f32 %v3689, %v3690
      %v3692 = vrot.slane %v3673, 4
      %v3693 = vadd.f32 %v3673, %v3692
      %v3694 = vrot.slane %v3693, 2
      %v3695 = vadd.f32 %v3693, %v3694
      %v3696 = vrot.slane %v3695, 1
      %v3697 = vadd.f32 %v3695, %v3696
      %v3698 = vmul.f32 %v3565, %v3577
      %v3699 = vmul.f32 %v3567, %v3579
      %v3700 = vmul.f32 %v3654, %v3666
      %v3701 = vmul.f32 %v3656, %v3668
      %v3702 = vrot.slane %v3698, 4
      %v3703 = vadd.f32 %v3698, %v3702
      %v3704 = vrot.slane %v3703, 2
      %v3705 = vadd.f32 %v3703, %v3704
      %v3706 = vrot.slane %v3705, 1
      %v3707 = vadd.f32 %v3705, %v3706
      %v3708 = vrot.slane %v3699, 4
      %v3709 = vadd.f32 %v3699, %v3708
      %v3710 = vrot.slane %v3709, 2
      %v3711 = vadd.f32 %v3709, %v3710
      %v3712 = vrot.slane %v3711, 1
      %v3713 = vadd.f32 %v3711, %v3712
      %v3714 = vrot.slane %v3700, 4
      %v3715 = vadd.f32 %v3700, %v3714
      %v3716 = vrot.slane %v3715, 2
      %v3717 = vadd.f32 %v3715, %v3716
      %v3718 = vrot.slane %v3717, 1
      %v3719 = vadd.f32 %v3717, %v3718
      %v3720 = vrot.slane %v3701, 4
      %v3721 = vadd.f32 %v3701, %v3720
      %v3722 = vrot.slane %v3721, 2
      %v3723 = vadd.f32 %v3721, %v3722
      %v3724 = vrot.slane %v3723, 1
      %v3725 = vadd.f32 %v3723, %v3724
      %v3726 = vmul.f32 %v3571, %v3577
      %v3727 = vmul.f32 %v3573, %v3579
      %v3728 = vmul.f32 %v3660, %v3666
      %v3729 = vmul.f32 %v3662, %v3668
      %v3730 = vrot.slane %v3726, 4
      %v3731 = vadd.f32 %v3726, %v3730
      %v3732 = vrot.slane %v3731, 2
      %v3733 = vadd.f32 %v3731, %v3732
      %v3734 = vrot.slane %v3733, 1
      %v3735 = vadd.f32 %v3733, %v3734
      %v3736 = vrot.slane %v3727, 4
      %v3737 = vadd.f32 %v3727, %v3736
      %v3738 = vrot.slane %v3737, 2
      %v3739 = vadd.f32 %v3737, %v3738
      %v3740 = vrot.slane %v3739, 1
      %v3741 = vadd.f32 %v3739, %v3740
      %v3742 = vrot.slane %v3728, 4
      %v3743 = vadd.f32 %v3728, %v3742
      %v3744 = vrot.slane %v3743, 2
      %v3745 = vadd.f32 %v3743, %v3744
      %v3746 = vrot.slane %v3745, 1
      %v3747 = vadd.f32 %v3745, %v3746
      %v3748 = vrot.slane %v3729, 4
      %v3749 = vadd.f32 %v3729, %v3748
      %v3750 = vrot.slane %v3749, 2
      %v3751 = vadd.f32 %v3749, %v3750
      %v3752 = vrot.slane %v3751, 1
      %v3753 = vadd.f32 %v3751, %v3752
      %vm3754 = vcmask 1040384
      %v3755 = vsel %vm3754, %v3679, %v3707
      %v3756 = vsel %vm3754, %v3685, %v3713
      %v3757 = vsel %vm3754, %v3691, %v3719
      %v3758 = vsel %vm3754, %v3697, %v3725
      %vm3759 = vcmask 1041408
      %v3760 = vsel %vm3759, %v3755, %v3735
      %v3761 = vsel %vm3759, %v3756, %v3741
      %v3762 = vsel %vm3759, %v3757, %v3747
      %v3763 = vsel %vm3759, %v3758, %v3753
      %v3768 = vcombine.low %v3760, %v3761
      %v3769 = vcombine.low %v3762, %v3763
      %3772 = vst [vmem:[%s145] sm:$0x77] %v3768
      %3773 = vst [vmem:[%s145 + $0x8] sm:$0x77] %v3769
      %s3774 = smul.u32 4, %s13
      %p3775 = scmp.lt.s32.totalorder %s3774, 15
      %s3776 = scalar_select %p3775, %s3774, 15
      %s3777 = smul.addr %s3776, 4
      %s3778 = scalar_lea.vmem %s2, %s3777
      // Predicated region
      $region29: #{clusterized_reflectance_forward.1} parent=27 // pred_check
        %p3779 = pneg %p78
      $region30: #{clusterized_reflectance_forward.1} parent=27 // pred_check_branch
        %3781 = sbr.rel (%p3779) target = $region32
      $region31: #{clusterized_reflectance_forward.1} parent=27 // pred_region
        %s3782 = smul.u32 4, %s13
      $region32: #{clusterized_reflectance_forward.1} parent=27 // pred_fallthru
        _
    $region28: #{clusterized_reflectance_forward.1} parent=5 // pred_fallthru
      _
    %p3783 = scmp.le.s32.totalorder 2, %s8
    // Predicated region
    $region33: #{clusterized_reflectance_forward.1} parent=5 // pred_check
      %p3784 = pneg %p3783
    $region34: #{clusterized_reflectance_forward.1} parent=5 // pred_check_branch
      %3786 = sbr.rel (%p3784) target = $region36
    $region35: #{clusterized_reflectance_forward.1} parent=5 // pred_region
      %s3787 = ssub.s32 %s8, 2
      // Predicated region
      $region37: #{clusterized_reflectance_forward.1} parent=35 // pred_check
        %p3788 = pneg %p84
      $region38: #{clusterized_reflectance_forward.1} parent=35 // pred_check_branch
        %3790 = sbr.rel (%p3788) target = $region40
      $region39: #{clusterized_reflectance_forward.1} parent=35 // pred_region
        %s3791 = smul.u32 4, %s14
        %p3792 = scmp.lt.s32.totalorder %s3791, 15
        %s3793 = scalar_select %p3792, %s3791, 15
        %s3794 = smul.addr %s3793, 4
        %s3795 = scalar_lea.vmem %s2, %s3794
      $region40: #{clusterized_reflectance_forward.1} parent=35 // pred_fallthru
        _
    $region36: #{clusterized_reflectance_forward.1} parent=5 // pred_fallthru
      _
  $region6: #{clusterized_reflectance_forward.1} parent=0 // loop_footer
    %s12 = sadd.s32 1, %s8
  $region7: #{clusterized_reflectance_forward.1} parent=0 // loop_footer_branch
    %7 = sbr.rel target = $region3
  $region8: #{clusterized_reflectance_forward.1} parent=0 // loop_exit
    _

</llo_original>
